<compile_context>
chip_gen: v7x
topology: tpu7x:2x2x1
jax: 0.10.0
libtpu: 0.0.40
codegen_flags: <defaults>
</compile_context>

<pallas_src>
import functools

import numpy as np
import jax
import jax.numpy as jnp
from jax import lax
from jax.experimental import pallas as pl
from jax.experimental.pallas import tpu as pltpu

BN_EPS = 1e-5


# ---------------- static (trace-time) interpolation / mask helpers ---------

def _interp_indices(out_size, in_size):
    """Static taps for 1-D linear interpolation with align_corners=True."""
    if out_size == 1 or in_size == 1:
        src = np.zeros((out_size,), np.float64)
    else:
        src = np.arange(out_size, dtype=np.float64) * ((in_size - 1) / (out_size - 1))
    i0 = np.clip(np.floor(src).astype(np.int64), 0, in_size - 1)
    i1 = np.minimum(i0 + 1, in_size - 1)
    frac = src - i0
    return [int(v) for v in i0], [int(v) for v in i1], [float(v) for v in frac]


def _interp_matrix_np(out_size, in_size):
    """Dense (out, in) matrix M such that M @ v == 1-D interp (align_corners)."""
    i0, i1, f = _interp_indices(out_size, in_size)
    m = np.zeros((out_size, in_size), np.float32)
    for s in range(out_size):
        m[s, i0[s]] += 1.0 - f[s]
        m[s, i1[s]] += f[s]
    return m


def _conv3x3_masks_np(hs, ws):
    """(9, hs*ws, 1) 0/1 validity masks for the 9 taps of a padded 3x3 conv."""
    yy, xx = np.meshgrid(np.arange(hs), np.arange(ws), indexing="ij")
    masks = []
    for dy in range(3):
        for dx in range(3):
            oy, ox = dy - 1, dx - 1
            ok = ((yy + oy >= 0) & (yy + oy < hs) &
                  (xx + ox >= 0) & (xx + ox < ws))
            masks.append(ok.astype(np.float32).reshape(hs * ws, 1))
    return np.stack(masks, axis=0)


# ----------------------------- Pallas kernels -------------------------------

def _bottleneck_upsample_add_kernel(hs, ws, cmid, w_i0, w_i1, w_frac,
                                    skip_ref, x_ref, rh_ref, w1_ref,
                                    sc1_ref, sh1_ref,
                                    y_ref, ysum_ref, ysq_ref, up_scr):
    """Per image: BN1+ReLU+1x1 conv on skip, separable bilinear upsample, add."""
    # bottleneck: folded BN (scale/shift) + ReLU + 1x1 conv == channel matmul
    s = skip_ref[0].astype(jnp.float32)                              # (hs*ws, cs)
    s = jnp.maximum(s * sc1_ref[...] + sh1_ref[...], 0.0)
    bott = jnp.dot(s, w1_ref[...], preferred_element_type=jnp.float32)
    bott = bott.reshape(hs, ws, cmid)                                # (hs, ws, cmid)

    # separable bilinear upsample (align_corners=True):
    #   H axis: one MXU matmul with the (hs, hx) interpolation matrix
    #   W axis: per-output-column 2-tap weighted adds on the VPU (static taps)
    x2 = x_ref[0].astype(jnp.float32)                                # (hx, wx*cmid)
    uh = jnp.dot(rh_ref[...], x2, preferred_element_type=jnp.float32)  # (hs, wx*cmid)
    for t in range(ws):
        a0, a1, f = w_i0[t], w_i1[t], w_frac[t]
        left = uh[:, a0 * cmid:(a0 + 1) * cmid]
        if f == 0.0 or a0 == a1:
            col = left
        else:
            right = uh[:, a1 * cmid:(a1 + 1) * cmid]
            col = (1.0 - f) * left + f * right
        up_scr[:, t, :] = col

    y = up_scr[...] + bott                                           # (hs, ws, cmid)
    y2 = y.reshape(hs * ws, cmid)
    y_ref[0] = y2.astype(y_ref.dtype)

    # per-image channel sums for BN2 (avoids an extra HBM pass over y)
    ysum_ref[0] = jnp.sum(y2, axis=0, keepdims=True)
    ysq_ref[0] = jnp.sum(y2 * y2, axis=0, keepdims=True)


def _blend_conv_kernel(ws, y_ref, sc2_ref, sh2_ref, w2_ref, masks_ref, out_ref):
    """Per image: BN2 + ReLU + 3x3 conv (padding=1) as a single im2col matmul."""
    z = jnp.maximum(y_ref[0].astype(jnp.float32) * sc2_ref[...] + sh2_ref[...],
                    0.0)                                             # (hs*ws, cmid)
    # im2col: 9 row-rolls + precomputed boundary masks, then one K=9*Cmid matmul
    pieces = []
    k = 0
    for dy in range(3):
        for dx in range(3):
            shift = (dy - 1) * ws + (dx - 1)
            rolled = jnp.roll(z, -shift, axis=0) if shift != 0 else z
            pieces.append(rolled * masks_ref[k])
            k += 1
    patches = jnp.concatenate(pieces, axis=1)                        # (hs*ws, 9*cmid)
    out = jnp.dot(patches, w2_ref[...], preferred_element_type=jnp.float32)
    out_ref[0] = out.astype(out_ref.dtype)


# --------------------------------- wrapper ----------------------------------

def upsample_forward(x_nchw, skip_nchw, params, *, io_dtype=jnp.float32):
    n, cmid, hx, wx = x_nchw.shape
    _, cs, hs, ws = skip_nchw.shape
    cout = params['w2'].shape[0]

    # layout: NCHW -> row-major (pixels, channels) views (free XLA reshapes)
    skip2 = jnp.transpose(skip_nchw, (0, 2, 3, 1)).reshape(n, hs * ws, cs)
    x2 = jnp.transpose(x_nchw, (0, 2, 3, 1)).reshape(n, hx, wx * cmid)

    # glue: fold training-mode BN1 (batch stats, biased var) into scale/shift
    mean1 = jnp.mean(skip2, axis=(0, 1))
    var1 = jnp.mean(jnp.square(skip2 - mean1), axis=(0, 1))
    sc1 = (params['gamma1'] / jnp.sqrt(var1 + BN_EPS)).astype(jnp.float32)
    sh1 = (params['beta1'] - mean1 * sc1).astype(jnp.float32)
    sc1 = sc1.reshape(1, cs)
    sh1 = sh1.reshape(1, cs)

    # static interpolation data (align_corners=True)
    rh = jnp.asarray(_interp_matrix_np(hs, hx))            # (hs, hx) f32
    w_i0, w_i1, w_frac = _interp_indices(ws, wx)

    w1 = jnp.transpose(params['w1'][:, :, 0, 0], (1, 0)).astype(jnp.float32)  # (cs, cmid)

    kernel1 = functools.partial(_bottleneck_upsample_add_kernel,
                                hs, ws, cmid, w_i0, w_i1, w_frac)

    y, ysum, ysq = pl.pallas_call(
        kernel1,
        out_shape=(jax.ShapeDtypeStruct((n, hs * ws, cmid), io_dtype),
                   jax.ShapeDtypeStruct((n, 1, cmid), jnp.float32),
                   jax.ShapeDtypeStruct((n, 1, cmid), jnp.float32)),
        grid_spec=pltpu.PrefetchScalarGridSpec(
            num_scalar_prefetch=0,
            grid=(n,),
            in_specs=[
                pl.BlockSpec((1, hs * ws, cs), lambda b: (b, 0, 0)),
                pl.BlockSpec((1, hx, wx * cmid), lambda b: (b, 0, 0)),
                pl.BlockSpec((hs, hx), lambda b: (0, 0)),
                pl.BlockSpec((cs, cmid), lambda b: (0, 0)),
                pl.BlockSpec((1, cs), lambda b: (0, 0)),
                pl.BlockSpec((1, cs), lambda b: (0, 0)),
            ],
            out_specs=[
                pl.BlockSpec((1, hs * ws, cmid), lambda b: (b, 0, 0)),
                pl.BlockSpec((1, 1, cmid), lambda b: (b, 0, 0)),
                pl.BlockSpec((1, 1, cmid), lambda b: (b, 0, 0)),
            ],
            scratch_shapes=[pltpu.VMEM((hs, ws, cmid), jnp.float32)],
        ),
        compiler_params=pltpu.CompilerParams(
            dimension_semantics=("parallel",),
            vmem_limit_bytes=64 * 1024 * 1024),
    )(skip2.astype(io_dtype), x2.astype(io_dtype), rh, w1, sc1, sh1)

    # glue: BN2 stats from kernel-1 partial sums (no extra pass over y)
    count = float(n * hs * ws)
    mean2 = jnp.sum(ysum, axis=(0, 1)) / count
    var2 = jnp.maximum(jnp.sum(ysq, axis=(0, 1)) / count - mean2 * mean2, 0.0)
    sc2 = (params['gamma2'] / jnp.sqrt(var2 + BN_EPS)).astype(jnp.float32)
    sh2 = (params['beta2'] - mean2 * sc2).astype(jnp.float32)
    sc2 = sc2.reshape(1, cmid)
    sh2 = sh2.reshape(1, cmid)

    # 3x3 conv as im2col: weights packed to (9*Cmid, Cout); halo masks static
    w2 = jnp.transpose(params['w2'], (2, 3, 1, 0)).reshape(9 * cmid, cout)
    w2 = w2.astype(jnp.float32)
    masks = jnp.asarray(_conv3x3_masks_np(hs, ws))          # (9, hs*ws, 1)

    kernel2 = functools.partial(_blend_conv_kernel, ws)

    out2 = pl.pallas_call(
        kernel2,
        out_shape=jax.ShapeDtypeStruct((n, hs * ws, cout), jnp.float32),
        grid_spec=pltpu.PrefetchScalarGridSpec(
            num_scalar_prefetch=0,
            grid=(n,),
            in_specs=[
                pl.BlockSpec((1, hs * ws, cmid), lambda b: (b, 0, 0)),
                pl.BlockSpec((1, cmid), lambda b: (0, 0)),
                pl.BlockSpec((1, cmid), lambda b: (0, 0)),
                pl.BlockSpec((9 * cmid, cout), lambda b: (0, 0)),
                pl.BlockSpec((9, hs * ws, 1), lambda b: (0, 0, 0)),
            ],
            out_specs=pl.BlockSpec((1, hs * ws, cout), lambda b: (b, 0, 0)),
        ),
        compiler_params=pltpu.CompilerParams(
            dimension_semantics=("parallel",),
            vmem_limit_bytes=64 * 1024 * 1024),
    )(y, sc2, sh2, w2, masks)

    # TODO(synk): add a spatial (row-block) grid axis with halo handling for
    # production resolutions so per-step VMEM stays within the v7x budget.
    return jnp.transpose(out2.reshape(n, hs, ws, cout), (0, 3, 1, 2))  # NCHW


# ------------------------- pure-JAX reference check --------------------------

def reference_forward(x_nchw, skip_nchw, params):
    def bn_relu(t, gamma, beta):
        mean = jnp.mean(t, axis=(0, 2, 3), keepdims=True)
        var = jnp.mean(jnp.square(t - mean), axis=(0, 2, 3), keepdims=True)
        t = (t - mean) / jnp.sqrt(var + BN_EPS)
        t = t * gamma[None, :, None, None] + beta[None, :, None, None]
        return jnp.maximum(t, 0.0)

    s = bn_relu(skip_nchw, params['gamma1'], params['beta1'])
    s = lax.conv_general_dilated(s, params['w1'], (1, 1), 'VALID',
                                 dimension_numbers=('NCHW', 'OIHW', 'NCHW'),
                                 precision=lax.Precision.HIGHEST)
    hx, wx = x_nchw.shape[2:]
    hs, ws = skip_nchw.shape[2:]
    rh = jnp.asarray(_interp_matrix_np(hs, hx))
    rw = jnp.asarray(_interp_matrix_np(ws, wx))
    up = jnp.einsum('sh,nchw->ncsw', rh, x_nchw, precision='highest')
    up = jnp.einsum('tw,ncsw->ncst', rw, up, precision='highest')
    y = up + s
    z = bn_relu(y, params['gamma2'], params['beta2'])
    out = lax.conv_general_dilated(z, params['w2'], (1, 1), ((1, 1), (1, 1)),
                                   dimension_numbers=('NCHW', 'OIHW', 'NCHW'),
                                   precision=lax.Precision.HIGHEST)
    return out


if __name__ == "__main__":
    key = jax.random.PRNGKey(0)
    # _Upsample(num_maps_in=16, skip_maps_in=8, num_maps_out=16)
    n, cmid, cs, cout = 2, 16, 8, 16
    hx, wx = 8, 8      # low-res feature map x
    hs, ws = 16, 16    # skip connection spatial size
    ks = jax.random.split(key, 8)

    x = jax.random.normal(ks[0], (n, cmid, hx, wx), jnp.float32)
    skip = jax.random.normal(ks[1], (n, cs, hs, ws), jnp.float32)

    # deterministic synthetic parameters (shapes match the PyTorch module)
    params = dict(
        gamma1=1.0 + 0.1 * jax.random.normal(ks[2], (cs,), jnp.float32),
        beta1=0.1 * jax.random.normal(ks[3], (cs,), jnp.float32),
        w1=0.3 * jax.random.normal(ks[4], (cmid, cs, 1, 1), jnp.float32),    # OIHW
        gamma2=1.0 + 0.1 * jax.random.normal(ks[5], (cmid,), jnp.float32),
        beta2=0.1 * jax.random.normal(ks[6], (cmid,), jnp.float32),
        w2=0.2 * jax.random.normal(ks[7], (cout, cmid, 3, 3), jnp.float32),  # OIHW
    )

    ref = jax.block_until_ready(reference_forward(x, skip, params))

    # f32 activation I/O: strict check
    out = jax.block_until_ready(upsample_forward(x, skip, params))
    assert out.shape == (n, cout, hs, ws), out.shape
    if not jnp.allclose(out, ref, atol=1e-2, rtol=1e-2):
        raise AssertionError(
            f"f32 mismatch: max abs diff = {float(jnp.max(jnp.abs(out - ref)))}")

    # bf16 activation I/O (halves HBM traffic; compute stays f32): loose check
    out_bf16 = jax.block_until_ready(
        upsample_forward(x, skip, params, io_dtype=jnp.bfloat16))
    if not jnp.allclose(out_bf16, ref, atol=1e-1, rtol=1e-1):
        raise AssertionError(
            f"bf16 mismatch: max abs diff = {float(jnp.max(jnp.abs(out_bf16 - ref)))}")

    print("KERNEL_OK")
</pallas_src>

<mosaic_0001>
module attributes {stable_mosaic.version = 11 : i64} {
  func.func @_bottleneck_upsample_add_kernel(%arg0: i32, %arg1: memref<1x256x8xf32, #tpu.memory_space<vmem>>, %arg2: memref<1x8x128xf32, #tpu.memory_space<vmem>>, %arg3: memref<16x8xf32, #tpu.memory_space<vmem>>, %arg4: memref<8x16xf32, #tpu.memory_space<vmem>>, %arg5: memref<1x8xf32, #tpu.memory_space<vmem>>, %arg6: memref<1x8xf32, #tpu.memory_space<vmem>>, %arg7: memref<1x256x16xf32, #tpu.memory_space<vmem>>, %arg8: memref<1x1x16xf32, #tpu.memory_space<vmem>>, %arg9: memref<1x1x16xf32, #tpu.memory_space<vmem>>, %arg10: memref<16x16x16xf32, #tpu.memory_space<vmem>>) attributes {dimension_semantics = [#tpu.dimension_semantics<parallel>], iteration_bounds = array<i64: 2>, scalar_prefetch = 0 : i64, scratch_operands = 1 : i64, tpu.core_type = #tpu.core_type<tc>, window_params = [{transform_indices = @transform_0, window_bounds = array<i64: 1, 256, 8>}, {transform_indices = @transform_1, window_bounds = array<i64: 1, 8, 128>}, {pipeline_mode = #tpu.pipeline_mode<synchronous>, transform_indices = @transform_2, window_bounds = array<i64: 16, 8>}, {pipeline_mode = #tpu.pipeline_mode<synchronous>, transform_indices = @transform_3, window_bounds = array<i64: 8, 16>}, {pipeline_mode = #tpu.pipeline_mode<synchronous>, transform_indices = @transform_4, window_bounds = array<i64: 1, 8>}, {pipeline_mode = #tpu.pipeline_mode<synchronous>, transform_indices = @transform_5, window_bounds = array<i64: 1, 8>}, {transform_indices = @transform_6, window_bounds = array<i64: 1, 256, 16>}, {transform_indices = @transform_7, window_bounds = array<i64: 1, 1, 16>}, {transform_indices = @transform_8, window_bounds = array<i64: 1, 1, 16>}]} {
    %c0 = arith.constant 0 : index
    %c0_0 = arith.constant 0 : index
    %c0_1 = arith.constant 0 : index
    %0 = vector.load %arg1[%c0, %c0_0, %c0_1] : memref<1x256x8xf32, #tpu.memory_space<vmem>>, vector<1x256x8xf32>
    %1 = vector.shape_cast %0 : vector<1x256x8xf32> to vector<256x8xf32>
    %c0_2 = arith.constant 0 : index
    %c0_3 = arith.constant 0 : index
    %2 = vector.load %arg5[%c0_2, %c0_3] : memref<1x8xf32, #tpu.memory_space<vmem>>, vector<1x8xf32>
    %3 = vector.broadcast %2 : vector<1x8xf32> to vector<256x8xf32>
    %4 = arith.mulf %1, %3 : vector<256x8xf32>
    %c0_4 = arith.constant 0 : index
    %c0_5 = arith.constant 0 : index
    %5 = vector.load %arg6[%c0_4, %c0_5] : memref<1x8xf32, #tpu.memory_space<vmem>>, vector<1x8xf32>
    %6 = vector.broadcast %5 : vector<1x8xf32> to vector<256x8xf32>
    %7 = arith.addf %4, %6 : vector<256x8xf32>
    %cst = arith.constant 0.000000e+00 : f32
    %8 = vector.broadcast %cst : f32 to vector<256x8xf32>
    %9 = arith.maximumf %7, %8 : vector<256x8xf32>
    %c0_6 = arith.constant 0 : index
    %c0_7 = arith.constant 0 : index
    %10 = vector.load %arg4[%c0_6, %c0_7] : memref<8x16xf32, #tpu.memory_space<vmem>>, vector<8x16xf32>
    %cst_8 = arith.constant dense<0.000000e+00> : vector<256x16xf32>
    %11 = tpu.matmul %9, %10, %cst_8 {dimension_numbers = #tpu.dot_dimension_numbers<[1], [0], [0], [1], [0, 0, 1, 1], [], []>} : vector<256x8xf32>, vector<8x16xf32>, vector<256x16xf32> -> vector<256x16xf32>
    %12 = vector.shape_cast %11 : vector<256x16xf32> to vector<16x16x16xf32>
    %c0_9 = arith.constant 0 : index
    %c0_10 = arith.constant 0 : index
    %c0_11 = arith.constant 0 : index
    %13 = vector.load %arg2[%c0_9, %c0_10, %c0_11] : memref<1x8x128xf32, #tpu.memory_space<vmem>>, vector<1x8x128xf32>
    %14 = vector.shape_cast %13 : vector<1x8x128xf32> to vector<8x128xf32>
    %c0_12 = arith.constant 0 : index
    %c0_13 = arith.constant 0 : index
    %15 = vector.load %arg3[%c0_12, %c0_13] : memref<16x8xf32, #tpu.memory_space<vmem>>, vector<16x8xf32>
    %cst_14 = arith.constant dense<0.000000e+00> : vector<16x128xf32>
    %16 = tpu.matmul %15, %14, %cst_14 {dimension_numbers = #tpu.dot_dimension_numbers<[1], [0], [0], [1], [0, 0, 1, 1], [], []>} : vector<16x8xf32>, vector<8x128xf32>, vector<16x128xf32> -> vector<16x128xf32>
    %17 = vector.extract_strided_slice %16 {offsets = [0, 0], sizes = [16, 16], strides = [1, 1]} : vector<16x128xf32> to vector<16x16xf32>
    %c0_15 = arith.constant 0 : index
    %c0_16 = arith.constant 0 : index
    %c0_17 = arith.constant 0 : index
    %18 = vector.load %arg10[%c0_15, %c0_16, %c0_17] : memref<16x16x16xf32, #tpu.memory_space<vmem>>, vector<16x1x16xf32>
    %19 = vector.shape_cast %18 : vector<16x1x16xf32> to vector<16x16xf32>
    %20 = vector.shape_cast %17 : vector<16x16xf32> to vector<16x1x16xf32>
    tpu.vector_store %arg10[%c0_15, %c0_16, %c0_17], %20 {strides = array<i32>} : memref<16x16x16xf32, #tpu.memory_space<vmem>>, vector<16x1x16xf32>,
    %21 = vector.extract_strided_slice %16 {offsets = [0, 0], sizes = [16, 16], strides = [1, 1]} : vector<16x128xf32> to vector<16x16xf32>
    %22 = vector.extract_strided_slice %16 {offsets = [0, 16], sizes = [16, 16], strides = [1, 1]} : vector<16x128xf32> to vector<16x16xf32>
    %cst_18 = arith.constant 0.533333361 : f32
    %23 = vector.broadcast %cst_18 : f32 to vector<16x16xf32>
    %24 = arith.mulf %23, %21 : vector<16x16xf32>
    %cst_19 = arith.constant 0.466666669 : f32
    %25 = vector.broadcast %cst_19 : f32 to vector<16x16xf32>
    %26 = arith.mulf %25, %22 : vector<16x16xf32>
    %27 = arith.addf %24, %26 : vector<16x16xf32>
    %c0_20 = arith.constant 0 : index
    %c1 = arith.constant 1 : index
    %c0_21 = arith.constant 0 : index
    %28 = vector.load %arg10[%c0_20, %c1, %c0_21] : memref<16x16x16xf32, #tpu.memory_space<vmem>>, vector<16x1x16xf32>
    %29 = vector.shape_cast %28 : vector<16x1x16xf32> to vector<16x16xf32>
    %30 = vector.shape_cast %27 : vector<16x16xf32> to vector<16x1x16xf32>
    tpu.vector_store %arg10[%c0_20, %c1, %c0_21], %30 {strides = array<i32>} : memref<16x16x16xf32, #tpu.memory_space<vmem>>, vector<16x1x16xf32>,
    %31 = vector.extract_strided_slice %16 {offsets = [0, 0], sizes = [16, 16], strides = [1, 1]} : vector<16x128xf32> to vector<16x16xf32>
    %32 = vector.extract_strided_slice %16 {offsets = [0, 16], sizes = [16, 16], strides = [1, 1]} : vector<16x128xf32> to vector<16x16xf32>
    %cst_22 = arith.constant 0.0666666701 : f32
    %33 = vector.broadcast %cst_22 : f32 to vector<16x16xf32>
    %34 = arith.mulf %33, %31 : vector<16x16xf32>
    %cst_23 = arith.constant 0.933333337 : f32
    %35 = vector.broadcast %cst_23 : f32 to vector<16x16xf32>
    %36 = arith.mulf %35, %32 : vector<16x16xf32>
    %37 = arith.addf %34, %36 : vector<16x16xf32>
    %c0_24 = arith.constant 0 : index
    %c2 = arith.constant 2 : index
    %c0_25 = arith.constant 0 : index
    %38 = vector.load %arg10[%c0_24, %c2, %c0_25] : memref<16x16x16xf32, #tpu.memory_space<vmem>>, vector<16x1x16xf32>
    %39 = vector.shape_cast %38 : vector<16x1x16xf32> to vector<16x16xf32>
    %40 = vector.shape_cast %37 : vector<16x16xf32> to vector<16x1x16xf32>
    tpu.vector_store %arg10[%c0_24, %c2, %c0_25], %40 {strides = array<i32>} : memref<16x16x16xf32, #tpu.memory_space<vmem>>, vector<16x1x16xf32>,
    %41 = vector.extract_strided_slice %16 {offsets = [0, 16], sizes = [16, 16], strides = [1, 1]} : vector<16x128xf32> to vector<16x16xf32>
    %42 = vector.extract_strided_slice %16 {offsets = [0, 32], sizes = [16, 16], strides = [1, 1]} : vector<16x128xf32> to vector<16x16xf32>
    %cst_26 = arith.constant 6.000000e-01 : f32
    %43 = vector.broadcast %cst_26 : f32 to vector<16x16xf32>
    %44 = arith.mulf %43, %41 : vector<16x16xf32>
    %cst_27 = arith.constant 4.000000e-01 : f32
    %45 = vector.broadcast %cst_27 : f32 to vector<16x16xf32>
    %46 = arith.mulf %45, %42 : vector<16x16xf32>
    %47 = arith.addf %44, %46 : vector<16x16xf32>
    %c0_28 = arith.constant 0 : index
    %c3 = arith.constant 3 : index
    %c0_29 = arith.constant 0 : index
    %48 = vector.load %arg10[%c0_28, %c3, %c0_29] : memref<16x16x16xf32, #tpu.memory_space<vmem>>, vector<16x1x16xf32>
    %49 = vector.shape_cast %48 : vector<16x1x16xf32> to vector<16x16xf32>
    %50 = vector.shape_cast %47 : vector<16x16xf32> to vector<16x1x16xf32>
    tpu.vector_store %arg10[%c0_28, %c3, %c0_29], %50 {strides = array<i32>} : memref<16x16x16xf32, #tpu.memory_space<vmem>>, vector<16x1x16xf32>,
    %51 = vector.extract_strided_slice %16 {offsets = [0, 16], sizes = [16, 16], strides = [1, 1]} : vector<16x128xf32> to vector<16x16xf32>
    %52 = vector.extract_strided_slice %16 {offsets = [0, 32], sizes = [16, 16], strides = [1, 1]} : vector<16x128xf32> to vector<16x16xf32>
    %cst_30 = arith.constant 0.13333334 : f32
    %53 = vector.broadcast %cst_30 : f32 to vector<16x16xf32>
    %54 = arith.mulf %53, %51 : vector<16x16xf32>
    %cst_31 = arith.constant 0.866666674 : f32
    %55 = vector.broadcast %cst_31 : f32 to vector<16x16xf32>
    %56 = arith.mulf %55, %52 : vector<16x16xf32>
    %57 = arith.addf %54, %56 : vector<16x16xf32>
    %c0_32 = arith.constant 0 : index
    %c4 = arith.constant 4 : index
    %c0_33 = arith.constant 0 : index
    %58 = vector.load %arg10[%c0_32, %c4, %c0_33] : memref<16x16x16xf32, #tpu.memory_space<vmem>>, vector<16x1x16xf32>
    %59 = vector.shape_cast %58 : vector<16x1x16xf32> to vector<16x16xf32>
    %60 = vector.shape_cast %57 : vector<16x16xf32> to vector<16x1x16xf32>
    tpu.vector_store %arg10[%c0_32, %c4, %c0_33], %60 {strides = array<i32>} : memref<16x16x16xf32, #tpu.memory_space<vmem>>, vector<16x1x16xf32>,
    %61 = vector.extract_strided_slice %16 {offsets = [0, 32], sizes = [16, 16], strides = [1, 1]} : vector<16x128xf32> to vector<16x16xf32>
    %62 = vector.extract_strided_slice %16 {offsets = [0, 48], sizes = [16, 16], strides = [1, 1]} : vector<16x128xf32> to vector<16x16xf32>
    %cst_34 = arith.constant 0.666666686 : f32
    %63 = vector.broadcast %cst_34 : f32 to vector<16x16xf32>
    %64 = arith.mulf %63, %61 : vector<16x16xf32>
    %cst_35 = arith.constant 0.333333343 : f32
    %65 = vector.broadcast %cst_35 : f32 to vector<16x16xf32>
    %66 = arith.mulf %65, %62 : vector<16x16xf32>
    %67 = arith.addf %64, %66 : vector<16x16xf32>
    %c0_36 = arith.constant 0 : index
    %c5 = arith.constant 5 : index
    %c0_37 = arith.constant 0 : index
    %68 = vector.load %arg10[%c0_36, %c5, %c0_37] : memref<16x16x16xf32, #tpu.memory_space<vmem>>, vector<16x1x16xf32>
    %69 = vector.shape_cast %68 : vector<16x1x16xf32> to vector<16x16xf32>
    %70 = vector.shape_cast %67 : vector<16x16xf32> to vector<16x1x16xf32>
    tpu.vector_store %arg10[%c0_36, %c5, %c0_37], %70 {strides = array<i32>} : memref<16x16x16xf32, #tpu.memory_space<vmem>>, vector<16x1x16xf32>,
    %71 = vector.extract_strided_slice %16 {offsets = [0, 32], sizes = [16, 16], strides = [1, 1]} : vector<16x128xf32> to vector<16x16xf32>
    %72 = vector.extract_strided_slice %16 {offsets = [0, 48], sizes = [16, 16], strides = [1, 1]} : vector<16x128xf32> to vector<16x16xf32>
    %cst_38 = arith.constant 2.000000e-01 : f32
    %73 = vector.broadcast %cst_38 : f32 to vector<16x16xf32>
    %74 = arith.mulf %73, %71 : vector<16x16xf32>
    %cst_39 = arith.constant 8.000000e-01 : f32
    %75 = vector.broadcast %cst_39 : f32 to vector<16x16xf32>
    %76 = arith.mulf %75, %72 : vector<16x16xf32>
    %77 = arith.addf %74, %76 : vector<16x16xf32>
    %c0_40 = arith.constant 0 : index
    %c6 = arith.constant 6 : index
    %c0_41 = arith.constant 0 : index
    %78 = vector.load %arg10[%c0_40, %c6, %c0_41] : memref<16x16x16xf32, #tpu.memory_space<vmem>>, vector<16x1x16xf32>
    %79 = vector.shape_cast %78 : vector<16x1x16xf32> to vector<16x16xf32>
    %80 = vector.shape_cast %77 : vector<16x16xf32> to vector<16x1x16xf32>
    tpu.vector_store %arg10[%c0_40, %c6, %c0_41], %80 {strides = array<i32>} : memref<16x16x16xf32, #tpu.memory_space<vmem>>, vector<16x1x16xf32>,
    %81 = vector.extract_strided_slice %16 {offsets = [0, 48], sizes = [16, 16], strides = [1, 1]} : vector<16x128xf32> to vector<16x16xf32>
    %82 = vector.extract_strided_slice %16 {offsets = [0, 64], sizes = [16, 16], strides = [1, 1]} : vector<16x128xf32> to vector<16x16xf32>
    %cst_42 = arith.constant 0.733333349 : f32
    %83 = vector.broadcast %cst_42 : f32 to vector<16x16xf32>
    %84 = arith.mulf %83, %81 : vector<16x16xf32>
    %cst_43 = arith.constant 0.266666681 : f32
    %85 = vector.broadcast %cst_43 : f32 to vector<16x16xf32>
    %86 = arith.mulf %85, %82 : vector<16x16xf32>
    %87 = arith.addf %84, %86 : vector<16x16xf32>
    %c0_44 = arith.constant 0 : index
    %c7 = arith.constant 7 : index
    %c0_45 = arith.constant 0 : index
    %88 = vector.load %arg10[%c0_44, %c7, %c0_45] : memref<16x16x16xf32, #tpu.memory_space<vmem>>, vector<16x1x16xf32>
    %89 = vector.shape_cast %88 : vector<16x1x16xf32> to vector<16x16xf32>
    %90 = vector.shape_cast %87 : vector<16x16xf32> to vector<16x1x16xf32>
    tpu.vector_store %arg10[%c0_44, %c7, %c0_45], %90 {strides = array<i32>} : memref<16x16x16xf32, #tpu.memory_space<vmem>>, vector<16x1x16xf32>,
    %91 = vector.extract_strided_slice %16 {offsets = [0, 48], sizes = [16, 16], strides = [1, 1]} : vector<16x128xf32> to vector<16x16xf32>
    %92 = vector.extract_strided_slice %16 {offsets = [0, 64], sizes = [16, 16], strides = [1, 1]} : vector<16x128xf32> to vector<16x16xf32>
    %cst_46 = arith.constant 0.266666681 : f32
    %93 = vector.broadcast %cst_46 : f32 to vector<16x16xf32>
    %94 = arith.mulf %93, %91 : vector<16x16xf32>
    %cst_47 = arith.constant 0.733333349 : f32
    %95 = vector.broadcast %cst_47 : f32 to vector<16x16xf32>
    %96 = arith.mulf %95, %92 : vector<16x16xf32>
    %97 = arith.addf %94, %96 : vector<16x16xf32>
    %c0_48 = arith.constant 0 : index
    %c8 = arith.constant 8 : index
    %c0_49 = arith.constant 0 : index
    %98 = vector.load %arg10[%c0_48, %c8, %c0_49] : memref<16x16x16xf32, #tpu.memory_space<vmem>>, vector<16x1x16xf32>
    %99 = vector.shape_cast %98 : vector<16x1x16xf32> to vector<16x16xf32>
    %100 = vector.shape_cast %97 : vector<16x16xf32> to vector<16x1x16xf32>
    tpu.vector_store %arg10[%c0_48, %c8, %c0_49], %100 {strides = array<i32>} : memref<16x16x16xf32, #tpu.memory_space<vmem>>, vector<16x1x16xf32>,
    %101 = vector.extract_strided_slice %16 {offsets = [0, 64], sizes = [16, 16], strides = [1, 1]} : vector<16x128xf32> to vector<16x16xf32>
    %102 = vector.extract_strided_slice %16 {offsets = [0, 80], sizes = [16, 16], strides = [1, 1]} : vector<16x128xf32> to vector<16x16xf32>
    %cst_50 = arith.constant 8.000000e-01 : f32
    %103 = vector.broadcast %cst_50 : f32 to vector<16x16xf32>
    %104 = arith.mulf %103, %101 : vector<16x16xf32>
    %cst_51 = arith.constant 2.000000e-01 : f32
    %105 = vector.broadcast %cst_51 : f32 to vector<16x16xf32>
    %106 = arith.mulf %105, %102 : vector<16x16xf32>
    %107 = arith.addf %104, %106 : vector<16x16xf32>
    %c0_52 = arith.constant 0 : index
    %c9 = arith.constant 9 : index
    %c0_53 = arith.constant 0 : index
    %108 = vector.load %arg10[%c0_52, %c9, %c0_53] : memref<16x16x16xf32, #tpu.memory_space<vmem>>, vector<16x1x16xf32>
    %109 = vector.shape_cast %108 : vector<16x1x16xf32> to vector<16x16xf32>
    %110 = vector.shape_cast %107 : vector<16x16xf32> to vector<16x1x16xf32>
    tpu.vector_store %arg10[%c0_52, %c9, %c0_53], %110 {strides = array<i32>} : memref<16x16x16xf32, #tpu.memory_space<vmem>>, vector<16x1x16xf32>,
    %111 = vector.extract_strided_slice %16 {offsets = [0, 64], sizes = [16, 16], strides = [1, 1]} : vector<16x128xf32> to vector<16x16xf32>
    %112 = vector.extract_strided_slice %16 {offsets = [0, 80], sizes = [16, 16], strides = [1, 1]} : vector<16x128xf32> to vector<16x16xf32>
    %cst_54 = arith.constant 0.333333343 : f32
    %113 = vector.broadcast %cst_54 : f32 to vector<16x16xf32>
    %114 = arith.mulf %113, %111 : vector<16x16xf32>
    %cst_55 = arith.constant 0.666666686 : f32
    %115 = vector.broadcast %cst_55 : f32 to vector<16x16xf32>
    %116 = arith.mulf %115, %112 : vector<16x16xf32>
    %117 = arith.addf %114, %116 : vector<16x16xf32>
    %c0_56 = arith.constant 0 : index
    %c10 = arith.constant 10 : index
    %c0_57 = arith.constant 0 : index
    %118 = vector.load %arg10[%c0_56, %c10, %c0_57] : memref<16x16x16xf32, #tpu.memory_space<vmem>>, vector<16x1x16xf32>
    %119 = vector.shape_cast %118 : vector<16x1x16xf32> to vector<16x16xf32>
    %120 = vector.shape_cast %117 : vector<16x16xf32> to vector<16x1x16xf32>
    tpu.vector_store %arg10[%c0_56, %c10, %c0_57], %120 {strides = array<i32>} : memref<16x16x16xf32, #tpu.memory_space<vmem>>, vector<16x1x16xf32>,
    %121 = vector.extract_strided_slice %16 {offsets = [0, 80], sizes = [16, 16], strides = [1, 1]} : vector<16x128xf32> to vector<16x16xf32>
    %122 = vector.extract_strided_slice %16 {offsets = [0, 96], sizes = [16, 16], strides = [1, 1]} : vector<16x128xf32> to vector<16x16xf32>
    %cst_58 = arith.constant 0.866666674 : f32
    %123 = vector.broadcast %cst_58 : f32 to vector<16x16xf32>
    %124 = arith.mulf %123, %121 : vector<16x16xf32>
    %cst_59 = arith.constant 0.13333334 : f32
    %125 = vector.broadcast %cst_59 : f32 to vector<16x16xf32>
    %126 = arith.mulf %125, %122 : vector<16x16xf32>
    %127 = arith.addf %124, %126 : vector<16x16xf32>
    %c0_60 = arith.constant 0 : index
    %c11 = arith.constant 11 : index
    %c0_61 = arith.constant 0 : index
    %128 = vector.load %arg10[%c0_60, %c11, %c0_61] : memref<16x16x16xf32, #tpu.memory_space<vmem>>, vector<16x1x16xf32>
    %129 = vector.shape_cast %128 : vector<16x1x16xf32> to vector<16x16xf32>
    %130 = vector.shape_cast %127 : vector<16x16xf32> to vector<16x1x16xf32>
    tpu.vector_store %arg10[%c0_60, %c11, %c0_61], %130 {strides = array<i32>} : memref<16x16x16xf32, #tpu.memory_space<vmem>>, vector<16x1x16xf32>,
    %131 = vector.extract_strided_slice %16 {offsets = [0, 80], sizes = [16, 16], strides = [1, 1]} : vector<16x128xf32> to vector<16x16xf32>
    %132 = vector.extract_strided_slice %16 {offsets = [0, 96], sizes = [16, 16], strides = [1, 1]} : vector<16x128xf32> to vector<16x16xf32>
    %cst_62 = arith.constant 4.000000e-01 : f32
    %133 = vector.broadcast %cst_62 : f32 to vector<16x16xf32>
    %134 = arith.mulf %133, %131 : vector<16x16xf32>
    %cst_63 = arith.constant 6.000000e-01 : f32
    %135 = vector.broadcast %cst_63 : f32 to vector<16x16xf32>
    %136 = arith.mulf %135, %132 : vector<16x16xf32>
    %137 = arith.addf %134, %136 : vector<16x16xf32>
    %c0_64 = arith.constant 0 : index
    %c12 = arith.constant 12 : index
    %c0_65 = arith.constant 0 : index
    %138 = vector.load %arg10[%c0_64, %c12, %c0_65] : memref<16x16x16xf32, #tpu.memory_space<vmem>>, vector<16x1x16xf32>
    %139 = vector.shape_cast %138 : vector<16x1x16xf32> to vector<16x16xf32>
    %140 = vector.shape_cast %137 : vector<16x16xf32> to vector<16x1x16xf32>
    tpu.vector_store %arg10[%c0_64, %c12, %c0_65], %140 {strides = array<i32>} : memref<16x16x16xf32, #tpu.memory_space<vmem>>, vector<16x1x16xf32>,
    %141 = vector.extract_strided_slice %16 {offsets = [0, 96], sizes = [16, 16], strides = [1, 1]} : vector<16x128xf32> to vector<16x16xf32>
    %142 = vector.extract_strided_slice %16 {offsets = [0, 112], sizes = [16, 16], strides = [1, 1]} : vector<16x128xf32> to vector<16x16xf32>
    %cst_66 = arith.constant 0.933333337 : f32
    %143 = vector.broadcast %cst_66 : f32 to vector<16x16xf32>
    %144 = arith.mulf %143, %141 : vector<16x16xf32>
    %cst_67 = arith.constant 0.0666666701 : f32
    %145 = vector.broadcast %cst_67 : f32 to vector<16x16xf32>
    %146 = arith.mulf %145, %142 : vector<16x16xf32>
    %147 = arith.addf %144, %146 : vector<16x16xf32>
    %c0_68 = arith.constant 0 : index
    %c13 = arith.constant 13 : index
    %c0_69 = arith.constant 0 : index
    %148 = vector.load %arg10[%c0_68, %c13, %c0_69] : memref<16x16x16xf32, #tpu.memory_space<vmem>>, vector<16x1x16xf32>
    %149 = vector.shape_cast %148 : vector<16x1x16xf32> to vector<16x16xf32>
    %150 = vector.shape_cast %147 : vector<16x16xf32> to vector<16x1x16xf32>
    tpu.vector_store %arg10[%c0_68, %c13, %c0_69], %150 {strides = array<i32>} : memref<16x16x16xf32, #tpu.memory_space<vmem>>, vector<16x1x16xf32>,
    %151 = vector.extract_strided_slice %16 {offsets = [0, 96], sizes = [16, 16], strides = [1, 1]} : vector<16x128xf32> to vector<16x16xf32>
    %152 = vector.extract_strided_slice %16 {offsets = [0, 112], sizes = [16, 16], strides = [1, 1]} : vector<16x128xf32> to vector<16x16xf32>
    %cst_70 = arith.constant 0.466666669 : f32
    %153 = vector.broadcast %cst_70 : f32 to vector<16x16xf32>
    %154 = arith.mulf %153, %151 : vector<16x16xf32>
    %cst_71 = arith.constant 0.533333361 : f32
    %155 = vector.broadcast %cst_71 : f32 to vector<16x16xf32>
    %156 = arith.mulf %155, %152 : vector<16x16xf32>
    %157 = arith.addf %154, %156 : vector<16x16xf32>
    %c0_72 = arith.constant 0 : index
    %c14 = arith.constant 14 : index
    %c0_73 = arith.constant 0 : index
    %158 = vector.load %arg10[%c0_72, %c14, %c0_73] : memref<16x16x16xf32, #tpu.memory_space<vmem>>, vector<16x1x16xf32>
    %159 = vector.shape_cast %158 : vector<16x1x16xf32> to vector<16x16xf32>
    %160 = vector.shape_cast %157 : vector<16x16xf32> to vector<16x1x16xf32>
    tpu.vector_store %arg10[%c0_72, %c14, %c0_73], %160 {strides = array<i32>} : memref<16x16x16xf32, #tpu.memory_space<vmem>>, vector<16x1x16xf32>,
    %161 = vector.extract_strided_slice %16 {offsets = [0, 112], sizes = [16, 16], strides = [1, 1]} : vector<16x128xf32> to vector<16x16xf32>
    %c0_74 = arith.constant 0 : index
    %c15 = arith.constant 15 : index
    %c0_75 = arith.constant 0 : index
    %162 = vector.load %arg10[%c0_74, %c15, %c0_75] : memref<16x16x16xf32, #tpu.memory_space<vmem>>, vector<16x1x16xf32>
    %163 = vector.shape_cast %162 : vector<16x1x16xf32> to vector<16x16xf32>
    %164 = vector.shape_cast %161 : vector<16x16xf32> to vector<16x1x16xf32>
    tpu.vector_store %arg10[%c0_74, %c15, %c0_75], %164 {strides = array<i32>} : memref<16x16x16xf32, #tpu.memory_space<vmem>>, vector<16x1x16xf32>,
    %c0_76 = arith.constant 0 : index
    %c0_77 = arith.constant 0 : index
    %c0_78 = arith.constant 0 : index
    %165 = vector.load %arg10[%c0_76, %c0_77, %c0_78] : memref<16x16x16xf32, #tpu.memory_space<vmem>>, vector<16x16x16xf32>
    %166 = arith.addf %165, %12 : vector<16x16x16xf32>
    %167 = vector.shape_cast %166 : vector<16x16x16xf32> to vector<256x16xf32>
    %c0_79 = arith.constant 0 : index
    %c0_80 = arith.constant 0 : index
    %c0_81 = arith.constant 0 : index
    %168 = vector.load %arg7[%c0_79, %c0_80, %c0_81] : memref<1x256x16xf32, #tpu.memory_space<vmem>>, vector<1x256x16xf32>
    %169 = vector.shape_cast %168 : vector<1x256x16xf32> to vector<256x16xf32>
    %170 = vector.shape_cast %167 : vector<256x16xf32> to vector<1x256x16xf32>
    tpu.vector_store %arg7[%c0_79, %c0_80, %c0_81], %170 {strides = array<i32>} : memref<1x256x16xf32, #tpu.memory_space<vmem>>, vector<1x256x16xf32>,
    %cst_82 = arith.constant dense<0.000000e+00> : vector<16xf32>
    %171 = vector.multi_reduction <add>, %167, %cst_82 [0] : vector<256x16xf32> to vector<16xf32>
    %172 = vector.shape_cast %171 : vector<16xf32> to vector<1x16xf32>
    %c0_83 = arith.constant 0 : index
    %c0_84 = arith.constant 0 : index
    %c0_85 = arith.constant 0 : index
    %173 = vector.load %arg8[%c0_83, %c0_84, %c0_85] : memref<1x1x16xf32, #tpu.memory_space<vmem>>, vector<1x1x16xf32>
    %174 = vector.shape_cast %173 : vector<1x1x16xf32> to vector<1x16xf32>
    %175 = vector.shape_cast %172 : vector<1x16xf32> to vector<1x1x16xf32>
    tpu.vector_store %arg8[%c0_83, %c0_84, %c0_85], %175 {strides = array<i32>} : memref<1x1x16xf32, #tpu.memory_space<vmem>>, vector<1x1x16xf32>,
    %176 = arith.mulf %167, %167 : vector<256x16xf32>
    %cst_86 = arith.constant dense<0.000000e+00> : vector<16xf32>
    %177 = vector.multi_reduction <add>, %176, %cst_86 [0] : vector<256x16xf32> to vector<16xf32>
    %178 = vector.shape_cast %177 : vector<16xf32> to vector<1x16xf32>
    %c0_87 = arith.constant 0 : index
    %c0_88 = arith.constant 0 : index
    %c0_89 = arith.constant 0 : index
    %179 = vector.load %arg9[%c0_87, %c0_88, %c0_89] : memref<1x1x16xf32, #tpu.memory_space<vmem>>, vector<1x1x16xf32>
    %180 = vector.shape_cast %179 : vector<1x1x16xf32> to vector<1x16xf32>
    %181 = vector.shape_cast %178 : vector<1x16xf32> to vector<1x1x16xf32>
    tpu.vector_store %arg9[%c0_87, %c0_88, %c0_89], %181 {strides = array<i32>} : memref<1x1x16xf32, #tpu.memory_space<vmem>>, vector<1x1x16xf32>,
    return
  }
  func.func @transform_0(%arg0: i32) -> (i32, i32, i32) {
    %c0_i32 = arith.constant 0 : i32
    %c0_i32_0 = arith.constant 0 : i32
    %c0_i32_1 = arith.constant 0 : i32
    return %arg0, %c0_i32, %c0_i32_0 : i32, i32, i32
  }
  func.func @transform_1(%arg0: i32) -> (i32, i32, i32) {
    %c0_i32 = arith.constant 0 : i32
    %c0_i32_0 = arith.constant 0 : i32
    %c0_i32_1 = arith.constant 0 : i32
    return %arg0, %c0_i32, %c0_i32_0 : i32, i32, i32
  }
  func.func @transform_2(%arg0: i32) -> (i32, i32) {
    %c0_i32 = arith.constant 0 : i32
    %c0_i32_0 = arith.constant 0 : i32
    %c0_i32_1 = arith.constant 0 : i32
    return %c0_i32, %c0_i32_0 : i32, i32
  }
  func.func @transform_3(%arg0: i32) -> (i32, i32) {
    %c0_i32 = arith.constant 0 : i32
    %c0_i32_0 = arith.constant 0 : i32
    %c0_i32_1 = arith.constant 0 : i32
    return %c0_i32, %c0_i32_0 : i32, i32
  }
  func.func @transform_4(%arg0: i32) -> (i32, i32) {
    %c0_i32 = arith.constant 0 : i32
    %c0_i32_0 = arith.constant 0 : i32
    %c0_i32_1 = arith.constant 0 : i32
    return %c0_i32, %c0_i32_0 : i32, i32
  }
  func.func @transform_5(%arg0: i32) -> (i32, i32) {
    %c0_i32 = arith.constant 0 : i32
    %c0_i32_0 = arith.constant 0 : i32
    %c0_i32_1 = arith.constant 0 : i32
    return %c0_i32, %c0_i32_0 : i32, i32
  }
  func.func @transform_6(%arg0: i32) -> (i32, i32, i32) {
    %c0_i32 = arith.constant 0 : i32
    %c0_i32_0 = arith.constant 0 : i32
    %c0_i32_1 = arith.constant 0 : i32
    return %arg0, %c0_i32, %c0_i32_0 : i32, i32, i32
  }
  func.func @transform_7(%arg0: i32) -> (i32, i32, i32) {
    %c0_i32 = arith.constant 0 : i32
    %c0_i32_0 = arith.constant 0 : i32
    %c0_i32_1 = arith.constant 0 : i32
    return %arg0, %c0_i32, %c0_i32_0 : i32, i32, i32
  }
  func.func @transform_8(%arg0: i32) -> (i32, i32, i32) {
    %c0_i32 = arith.constant 0 : i32
    %c0_i32_0 = arith.constant 0 : i32
    %c0_i32_1 = arith.constant 0 : i32
    return %arg0, %c0_i32, %c0_i32_0 : i32, i32, i32
  }
}

</mosaic_0001>

<llo_original>
// kernel: tpu_custom_call.1
$region0: #{tpu_custom_call.1}
  #allocation0 [shape = 'u32[]', space=smem, size = 0x4, offset = 0x4, fixed_abs, tag = 'smem constant byte address 0x4 - core index']
  #allocation1 [shape = 'u32[144,128]{1,0:T(1,128)}', space=vmem, size = 0x12000, scoped, tag = 'internal scratch']
  #allocation2 [shape = 'f32[16,16,16]{2,1,0:T(8,128)}', space=vmem, size = 0x20000, scoped, tag = 'scratch operand']
  %s0 = inlined_call_operand.hbm [shape: f32[2,256,8], index: 0, kind: input, shape index: {}]
  %s1 = inlined_call_operand.hbm [shape: f32[2,8,128], index: 1, kind: input, shape index: {}]
  %s2 = inlined_call_operand.hbm [shape: f32[16,8], index: 2, kind: input, shape index: {}]
  %s3 = inlined_call_operand.hbm [shape: f32[8,16], index: 3, kind: input, shape index: {}]
  %s4 = inlined_call_operand.hbm [shape: f32[1,8], index: 4, kind: input, shape index: {}]
  %s5 = inlined_call_operand.hbm [shape: f32[1,8], index: 5, kind: input, shape index: {}]
  %s6 = inlined_call_operand.hbm [shape: f32[2,256,16], index: 6, kind: output, shape index: {0}]
  %s7 = inlined_call_operand.hbm [shape: f32[2,1,16], index: 7, kind: output, shape index: {1}]
  %s8 = inlined_call_operand.hbm [shape: f32[2,1,16], index: 8, kind: output, shape index: {2}]
  %9 = xla_tuple %s6, %s7, %s8
  %s10 = sld [smem:[#allocation0]]
  $region97: #{tpu_custom_call.1} parent=0
    _
  %s12 = ssub.s32 1, %s10
  %s13 = scalar_select 0, %s12, %s10
  $region1: #{tpu_custom_call.1} parent=0
    #allocation3 [shape = 'u8[262144]{0}', space=vmem, size = 0x40000, scoped, tag = 'input window, operand 0']
    #allocation4 [shape = 's32[2]{0}', space=sflag, size = 0x8, scoped, tag = 'scoped memory for tpu_custom_call.1']
    #allocation5 [shape = 's32[2]{0}', space=sflag, size = 0x8, scoped, tag = 'scoped memory for tpu_custom_call.1']
    #allocation6 [shape = 'u8[8192]{0}', space=vmem, size = 0x2000, scoped, tag = 'input window, operand 1']
    #allocation7 [shape = 's32[2]{0}', space=sflag, size = 0x8, scoped, tag = 'scoped memory for tpu_custom_call.1']
    #allocation8 [shape = 'u8[8192]{0}', space=vmem, size = 0x2000, scoped, tag = 'input window, operand 2, single buffered']
    #allocation9 [shape = 'u8[4096]{0}', space=vmem, size = 0x1000, scoped, tag = 'input window, operand 3, single buffered']
    #allocation10 [shape = 's32[1]{0}', space=sflag, size = 0x4, scoped, tag = 'scoped memory for tpu_custom_call.1']
    #allocation11 [shape = 'u8[512]{0}', space=vmem, size = 0x400, scoped, tag = 'input window, operand 4, single buffered']
    #allocation12 [shape = 'u8[512]{0}', space=vmem, size = 0x400, scoped, tag = 'input window, operand 5, single buffered']
    #allocation13 [shape = 's32[1]{0}', space=sflag, size = 0x4, scoped, tag = 'scoped memory for tpu_custom_call.1']
    #allocation14 [shape = 'u8[262144]{0}', space=vmem, size = 0x40000, scoped, tag = 'output window, operand 0']
    #allocation15 [shape = 'u8[1024]{0}', space=vmem, size = 0x400, scoped, tag = 'output window, operand 1']
    #allocation16 [shape = 's32[2]{0}', space=sflag, size = 0x8, scoped, tag = 'scoped memory for tpu_custom_call.1']
    #allocation17 [shape = 'u8[1024]{0}', space=vmem, size = 0x400, scoped, tag = 'output window, operand 2']
    %14 = vsyncpa [#allocation4], 0
    %s15 = scalar_lea.sflag [#allocation4], 1
    %16 = vsyncpa %s15, 0
    %17 = vsyncpa [#allocation7], 0
    %s18 = scalar_lea.sflag [#allocation7], 1
    %19 = vsyncpa %s18, 0
    %20 = vsyncpa [#allocation10], 0
    %21 = vsyncpa [#allocation13], 0
    %22 = vsyncpa [#allocation5], 0
    %s23 = scalar_lea.sflag [#allocation5], 1
    %24 = vsyncpa %s23, 0
    %25 = vsyncpa [#allocation16], 0
    %s26 = scalar_lea.sflag [#allocation16], 1
    %27 = vsyncpa %s26, 0
    loop: start=0, step=1, limit=4
    $region2: #{tpu_custom_call.1} parent=1 // loop_pre_header
      _
    $region3: #{tpu_custom_call.1} parent=1 // loop_header
      %s29 = sphi 0, %s33
      %p30 = scmp.ge.s32.totalorder %s29, 4
      %s39 = sphi 0, %s41
      %s42 = sphi 0, %s39
      %s43 = sphi 0, %s42
      %s59 = sphi 0, %s43
      %s65 = sphi 0, %s67
      %s68 = sphi 0, %s65
      %s69 = sphi 0, %s68
      %s85 = sphi 0, %s69
      %s89 = sphi 0, %s89
      %s91 = sphi 0, %s89
      %s92 = sphi 0, %s91
      %s106 = sphi 0, %s92
      %s110 = sphi 0, %s110
      %s112 = sphi 0, %s110
      %s113 = sphi 0, %s112
      %s127 = sphi 0, %s113
      %s131 = sphi 0, %s131
      %s133 = sphi 0, %s131
      %s134 = sphi 0, %s133
      %s148 = sphi 0, %s134
      %s152 = sphi 0, %s152
      %s154 = sphi 0, %s152
      %s155 = sphi 0, %s154
      %s169 = sphi 0, %s155
      %s175 = sphi 0, %s177
      %s178 = sphi 0, %s175
      %s179 = sphi 0, %s178
      %s195 = sphi 0, %s179
      %s201 = sphi 0, %s203
      %s204 = sphi 0, %s201
      %s205 = sphi 0, %s204
      %s221 = sphi 0, %s205
      %s227 = sphi 0, %s229
      %s230 = sphi 0, %s227
      %s231 = sphi 0, %s230
      %s247 = sphi 0, %s231
    $region4: #{tpu_custom_call.1} parent=1 // loop_header_branch
      %32 = sbr.rel (%p30) target = $region8
    $region5: #{tpu_custom_call.1} parent=1 // loop_body
      %s34 = ssub.s32 %s29, 1
      %s35 = ssub.s32 %s29, 2
      %s36 = sadd.s32 %s29, 1
      %s37 = ssub.s32 %s29, %s36
      %p38 = scmp.eq.s32.totalorder %s37, 0
      %s40 = sadd.s32 %s39, 1
      %s41 = scalar_select %p38, %s39, %s40
      %p44 = pneg %p38
      %p45 = scmp.eq.s32.totalorder %s29, 1
      %p46 = por %p44, %p45
      %p47 = scmp.ne.s32.totalorder %s39, %s42
      %p48 = scmp.eq.s32.totalorder %s29, 0
      %p49 = por %p47, %p48
      %p50 = scmp.ne.s32.totalorder %s39, %s42
      %p51 = scmp.eq.s32.totalorder %s34, 1
      %p52 = por %p50, %p51
      %p53 = scmp.ne.s32.totalorder %s42, %s43
      %p54 = scmp.eq.s32.totalorder %s34, 0
      %p55 = por %p53, %p54
      %p56 = scmp.ne.s32.totalorder %s42, %s43
      %p57 = scmp.eq.s32.totalorder %s35, 1
      %p58 = por %p56, %p57
      %p60 = scmp.ne.s32.totalorder %s43, %s59
      %p61 = scmp.eq.s32.totalorder %s35, 0
      %p62 = por %p60, %p61
      %s63 = ssub.s32 %s29, %s36
      %p64 = scmp.eq.s32.totalorder %s63, 0
      %s66 = sadd.s32 %s65, 1
      %s67 = scalar_select %p64, %s65, %s66
      %p70 = pneg %p64
      %p71 = scmp.eq.s32.totalorder %s29, 1
      %p72 = por %p70, %p71
      %p73 = scmp.ne.s32.totalorder %s65, %s68
      %p74 = scmp.eq.s32.totalorder %s29, 0
      %p75 = por %p73, %p74
      %p76 = scmp.ne.s32.totalorder %s65, %s68
      %p77 = scmp.eq.s32.totalorder %s34, 1
      %p78 = por %p76, %p77
      %p79 = scmp.ne.s32.totalorder %s68, %s69
      %p80 = scmp.eq.s32.totalorder %s34, 0
      %p81 = por %p79, %p80
      %p82 = scmp.ne.s32.totalorder %s68, %s69
      %p83 = scmp.eq.s32.totalorder %s35, 1
      %p84 = por %p82, %p83
      %p86 = scmp.ne.s32.totalorder %s69, %s85
      %p87 = scmp.eq.s32.totalorder %s35, 0
      %p88 = por %p86, %p87
      %s90 = sadd.s32 %s89, 1
      %p93 = scmp.eq.s32.totalorder %s29, 1
      %p94 = scmp.ne.s32.totalorder %s89, %s91
      %p95 = scmp.eq.s32.totalorder %s29, 0
      %p96 = por %p94, %p95
      %p97 = scmp.ne.s32.totalorder %s89, %s91
      %p98 = scmp.eq.s32.totalorder %s34, 1
      %p99 = por %p97, %p98
      %p100 = scmp.ne.s32.totalorder %s91, %s92
      %p101 = scmp.eq.s32.totalorder %s34, 0
      %p102 = por %p100, %p101
      %p103 = scmp.ne.s32.totalorder %s91, %s92
      %p104 = scmp.eq.s32.totalorder %s35, 1
      %p105 = por %p103, %p104
      %p107 = scmp.ne.s32.totalorder %s92, %s106
      %p108 = scmp.eq.s32.totalorder %s35, 0
      %p109 = por %p107, %p108
      %s111 = sadd.s32 %s110, 1
      %p114 = scmp.eq.s32.totalorder %s29, 1
      %p115 = scmp.ne.s32.totalorder %s110, %s112
      %p116 = scmp.eq.s32.totalorder %s29, 0
      %p117 = por %p115, %p116
      %p118 = scmp.ne.s32.totalorder %s110, %s112
      %p119 = scmp.eq.s32.totalorder %s34, 1
      %p120 = por %p118, %p119
      %p121 = scmp.ne.s32.totalorder %s112, %s113
      %p122 = scmp.eq.s32.totalorder %s34, 0
      %p123 = por %p121, %p122
      %p124 = scmp.ne.s32.totalorder %s112, %s113
      %p125 = scmp.eq.s32.totalorder %s35, 1
      %p126 = por %p124, %p125
      %p128 = scmp.ne.s32.totalorder %s113, %s127
      %p129 = scmp.eq.s32.totalorder %s35, 0
      %p130 = por %p128, %p129
      %s132 = sadd.s32 %s131, 1
      %p135 = scmp.eq.s32.totalorder %s29, 1
      %p136 = scmp.ne.s32.totalorder %s131, %s133
      %p137 = scmp.eq.s32.totalorder %s29, 0
      %p138 = por %p136, %p137
      %p139 = scmp.ne.s32.totalorder %s131, %s133
      %p140 = scmp.eq.s32.totalorder %s34, 1
      %p141 = por %p139, %p140
      %p142 = scmp.ne.s32.totalorder %s133, %s134
      %p143 = scmp.eq.s32.totalorder %s34, 0
      %p144 = por %p142, %p143
      %p145 = scmp.ne.s32.totalorder %s133, %s134
      %p146 = scmp.eq.s32.totalorder %s35, 1
      %p147 = por %p145, %p146
      %p149 = scmp.ne.s32.totalorder %s134, %s148
      %p150 = scmp.eq.s32.totalorder %s35, 0
      %p151 = por %p149, %p150
      %s153 = sadd.s32 %s152, 1
      %p156 = scmp.eq.s32.totalorder %s29, 1
      %p157 = scmp.ne.s32.totalorder %s152, %s154
      %p158 = scmp.eq.s32.totalorder %s29, 0
      %p159 = por %p157, %p158
      %p160 = scmp.ne.s32.totalorder %s152, %s154
      %p161 = scmp.eq.s32.totalorder %s34, 1
      %p162 = por %p160, %p161
      %p163 = scmp.ne.s32.totalorder %s154, %s155
      %p164 = scmp.eq.s32.totalorder %s34, 0
      %p165 = por %p163, %p164
      %p166 = scmp.ne.s32.totalorder %s154, %s155
      %p167 = scmp.eq.s32.totalorder %s35, 1
      %p168 = por %p166, %p167
      %p170 = scmp.ne.s32.totalorder %s155, %s169
      %p171 = scmp.eq.s32.totalorder %s35, 0
      %p172 = por %p170, %p171
      %s173 = ssub.s32 %s29, %s36
      %p174 = scmp.eq.s32.totalorder %s173, 0
      %s176 = sadd.s32 %s175, 1
      %s177 = scalar_select %p174, %s175, %s176
      %p180 = pneg %p174
      %p181 = scmp.eq.s32.totalorder %s29, 1
      %p182 = por %p180, %p181
      %p183 = scmp.ne.s32.totalorder %s175, %s178
      %p184 = scmp.eq.s32.totalorder %s29, 0
      %p185 = por %p183, %p184
      %p186 = scmp.ne.s32.totalorder %s175, %s178
      %p187 = scmp.eq.s32.totalorder %s34, 1
      %p188 = por %p186, %p187
      %p189 = scmp.ne.s32.totalorder %s178, %s179
      %p190 = scmp.eq.s32.totalorder %s34, 0
      %p191 = por %p189, %p190
      %p192 = scmp.ne.s32.totalorder %s178, %s179
      %p193 = scmp.eq.s32.totalorder %s35, 1
      %p194 = por %p192, %p193
      %p196 = scmp.ne.s32.totalorder %s179, %s195
      %p197 = scmp.eq.s32.totalorder %s35, 0
      %p198 = por %p196, %p197
      %s199 = ssub.s32 %s29, %s36
      %p200 = scmp.eq.s32.totalorder %s199, 0
      %s202 = sadd.s32 %s201, 1
      %s203 = scalar_select %p200, %s201, %s202
      %p206 = pneg %p200
      %p207 = scmp.eq.s32.totalorder %s29, 1
      %p208 = por %p206, %p207
      %p209 = scmp.ne.s32.totalorder %s201, %s204
      %p210 = scmp.eq.s32.totalorder %s29, 0
      %p211 = por %p209, %p210
      %p212 = scmp.ne.s32.totalorder %s201, %s204
      %p213 = scmp.eq.s32.totalorder %s34, 1
      %p214 = por %p212, %p213
      %p215 = scmp.ne.s32.totalorder %s204, %s205
      %p216 = scmp.eq.s32.totalorder %s34, 0
      %p217 = por %p215, %p216
      %p218 = scmp.ne.s32.totalorder %s204, %s205
      %p219 = scmp.eq.s32.totalorder %s35, 1
      %p220 = por %p218, %p219
      %p222 = scmp.ne.s32.totalorder %s205, %s221
      %p223 = scmp.eq.s32.totalorder %s35, 0
      %p224 = por %p222, %p223
      %s225 = ssub.s32 %s29, %s36
      %p226 = scmp.eq.s32.totalorder %s225, 0
      %s228 = sadd.s32 %s227, 1
      %s229 = scalar_select %p226, %s227, %s228
      %p232 = pneg %p226
      %p233 = scmp.eq.s32.totalorder %s29, 1
      %p234 = por %p232, %p233
      %p235 = scmp.ne.s32.totalorder %s227, %s230
      %p236 = scmp.eq.s32.totalorder %s29, 0
      %p237 = por %p235, %p236
      %p238 = scmp.ne.s32.totalorder %s227, %s230
      %p239 = scmp.eq.s32.totalorder %s34, 1
      %p240 = por %p238, %p239
      %p241 = scmp.ne.s32.totalorder %s230, %s231
      %p242 = scmp.eq.s32.totalorder %s34, 0
      %p243 = por %p241, %p242
      %p244 = scmp.ne.s32.totalorder %s230, %s231
      %p245 = scmp.eq.s32.totalorder %s35, 1
      %p246 = por %p244, %p245
      %p248 = scmp.ne.s32.totalorder %s231, %s247
      %p249 = scmp.eq.s32.totalorder %s35, 0
      %p250 = por %p248, %p249
      %p251 = scmp.le.s32.totalorder 1, %s29
      %p252 = scmp.lt.s32.totalorder %s29, 3
      %p253 = pnand %p251, %p252
      %p254 = pneg %p253
      // Predicated region
      $region9: #{tpu_custom_call.1} parent=5 // pred_check
        _
      $region10: #{tpu_custom_call.1} parent=5 // pred_check_branch
        %256 = sbr.rel (%p253) target = $region12
      $region11: #{tpu_custom_call.1} parent=5 // pred_region
        %s257 = ssub.s32 %s29, 1
        // Predicated region
        $region13: #{tpu_custom_call.1} parent=11 // pred_check
          %p258 = pneg %p102
        $region14: #{tpu_custom_call.1} parent=11 // pred_check_branch
          %260 = sbr.rel (%p258) target = $region16
        $region15: #{tpu_custom_call.1} parent=11 // pred_region
          %s262 = ssub.s32 256, 256
          %263 = vsyncadd [#allocation7], %s262
          %s264 = sshll.u32 [#allocation8], 4
          %s265 = int_to_ptr.vmem [resolvable:$true] %s264
          %270 = dma.hbm_to_vmem [thread:$0]  %s2, 256, %s265, [#allocation7], 128, 128, 8
        $region16: #{tpu_custom_call.1} parent=11 // pred_fallthru
          _
        // Predicated region
        $region17: #{tpu_custom_call.1} parent=11 // pred_check
          %p271 = pneg %p123
        $region18: #{tpu_custom_call.1} parent=11 // pred_check_branch
          %273 = sbr.rel (%p271) target = $region20
        $region19: #{tpu_custom_call.1} parent=11 // pred_region
          %s275 = ssub.s32 128, 128
          %276 = vsyncadd [#allocation10], %s275
          %s278 = sshll.u32 [#allocation9], 4
          %s279 = int_to_ptr.vmem [resolvable:$true] %s278
          %281 = dma.hbm_to_vmem [thread:$0]  %s3, 128, %s279, [#allocation10]
        $region20: #{tpu_custom_call.1} parent=11 // pred_fallthru
          _
        // Predicated region
        $region21: #{tpu_custom_call.1} parent=11 // pred_check
          %p282 = pneg %p144
        $region22: #{tpu_custom_call.1} parent=11 // pred_check_branch
          %284 = sbr.rel (%p282) target = $region24
        $region23: #{tpu_custom_call.1} parent=11 // pred_region
          %s286 = ssub.s32 16, 16
          %287 = vsyncadd [#allocation10], %s286
          %s289 = sshll.u32 [#allocation11], 4
          %s290 = int_to_ptr.vmem [resolvable:$true] %s289
          %292 = dma.hbm_to_vmem [thread:$0]  %s4, 16, %s290, [#allocation10]
        $region24: #{tpu_custom_call.1} parent=11 // pred_fallthru
          _
        // Predicated region
        $region25: #{tpu_custom_call.1} parent=11 // pred_check
          %p293 = pneg %p165
        $region26: #{tpu_custom_call.1} parent=11 // pred_check_branch
          %295 = sbr.rel (%p293) target = $region28
        $region27: #{tpu_custom_call.1} parent=11 // pred_region
          %s297 = ssub.s32 16, 16
          %298 = vsyncadd [#allocation13], %s297
          %s300 = sshll.u32 [#allocation12], 4
          %s301 = int_to_ptr.vmem [resolvable:$true] %s300
          %303 = dma.hbm_to_vmem [thread:$0]  %s5, 16, %s301, [#allocation13]
        $region28: #{tpu_custom_call.1} parent=11 // pred_fallthru
          _
      $region12: #{tpu_custom_call.1} parent=5 // pred_fallthru
        _
      %p304 = scmp.lt.s32.totalorder %s29, 2
      // Predicated region
      $region29: #{tpu_custom_call.1} parent=5 // pred_check
        %p305 = pneg %p304
      $region30: #{tpu_custom_call.1} parent=5 // pred_check_branch
        %307 = sbr.rel (%p305) target = $region32
      $region31: #{tpu_custom_call.1} parent=5 // pred_region
        // Predicated region
        $region33: #{tpu_custom_call.1} parent=31 // pred_check
          %p308 = pneg %p49
        $region34: #{tpu_custom_call.1} parent=31 // pred_check_branch
          %310 = sbr.rel (%p308) target = $region36
        $region35: #{tpu_custom_call.1} parent=31 // pred_region
          %s311 = sand.u32 %s39, 1
          %s312 = scalar_lea.sflag [#allocation4], %s311
          %s313 = sand.u32 %s39, 1
          %s314 = smul.addr %s313, 256
          %s315 = scalar_lea.vmem [#allocation3], %s314
          %s317 = ssub.s32 4096, 4096
          %318 = vsyncadd %s312, %s317
          %s319 = smul.addr %s29, 32
          %s320 = smul.addr %s319, 128
          %s321 = scalar_lea.hbm %s0, %s320
          %s322 = sshll.u32 %s315, 4
          %s323 = int_to_ptr.vmem [resolvable:$true] %s322
          %328 = dma.hbm_to_vmem [thread:$0]  %s321, 4096, %s323, %s312, 128, 128, 8
        $region36: #{tpu_custom_call.1} parent=31 // pred_fallthru
          _
        // Predicated region
        $region37: #{tpu_custom_call.1} parent=31 // pred_check
          %p329 = pneg %p75
        $region38: #{tpu_custom_call.1} parent=31 // pred_check_branch
          %331 = sbr.rel (%p329) target = $region40
        $region39: #{tpu_custom_call.1} parent=31 // pred_region
          %s332 = sand.u32 %s29, 1
          %s333 = scalar_lea.sflag [#allocation7], %s332
          %s334 = sand.u32 %s65, 1
          %s335 = smul.addr %s334, 8
          %s336 = scalar_lea.vmem [#allocation6], %s335
          %s338 = ssub.s32 128, 128
          %339 = vsyncadd %s333, %s338
          %s340 = smul.addr %s29, 128
          %s341 = scalar_lea.hbm %s1, %s340
          %s343 = sshll.u32 %s336, 4
          %s344 = int_to_ptr.vmem [resolvable:$true] %s343
          %346 = dma.hbm_to_vmem [thread:$0]  %s341, 128, %s344, %s333
        $region40: #{tpu_custom_call.1} parent=31 // pred_fallthru
          _
      $region32: #{tpu_custom_call.1} parent=5 // pred_fallthru
        _
      %p347 = scmp.le.s32.totalorder 1, %s29
      %p348 = scmp.lt.s32.totalorder %s29, 3
      %p349 = pnand %p347, %p348
      %p350 = pneg %p349
      // Predicated region
      $region41: #{tpu_custom_call.1} parent=5 // pred_check
        _
      $region42: #{tpu_custom_call.1} parent=5 // pred_check_branch
        %352 = sbr.rel (%p349) target = $region44
      $region43: #{tpu_custom_call.1} parent=5 // pred_region
        %s353 = ssub.s32 %s29, 1
        %s354 = sand.u32 %s42, 1
        %s355 = scalar_lea.sflag [#allocation4], %s354
        %s356 = sand.u32 %s42, 1
        %s357 = smul.addr %s356, 256
        %s358 = scalar_lea.vmem [#allocation3], %s357
        // Predicated region
        $region45: #{tpu_custom_call.1} parent=43 // pred_check
          %p359 = pneg %p55
        $region46: #{tpu_custom_call.1} parent=43 // pred_check_branch
          %361 = sbr.rel (%p359) target = $region48
        $region47: #{tpu_custom_call.1} parent=43 // pred_region
          %362 = dma.done %s355, 4096
        $region48: #{tpu_custom_call.1} parent=43 // pred_fallthru
          _
        %s363 = sand.u32 %s34, 1
        %s364 = scalar_lea.sflag [#allocation7], %s363
        %s365 = sand.u32 %s68, 1
        %s366 = smul.addr %s365, 8
        %s367 = scalar_lea.vmem [#allocation6], %s366
        // Predicated region
        $region49: #{tpu_custom_call.1} parent=43 // pred_check
          %p368 = pneg %p81
        $region50: #{tpu_custom_call.1} parent=43 // pred_check_branch
          %370 = sbr.rel (%p368) target = $region52
        $region51: #{tpu_custom_call.1} parent=43 // pred_region
          %371 = dma.done %s364, 128
        $region52: #{tpu_custom_call.1} parent=43 // pred_fallthru
          _
        // Predicated region
        $region53: #{tpu_custom_call.1} parent=43 // pred_check
          %p372 = pneg %p102
        $region54: #{tpu_custom_call.1} parent=43 // pred_check_branch
          %374 = sbr.rel (%p372) target = $region56
        $region55: #{tpu_custom_call.1} parent=43 // pred_region
          %375 = dma.done [#allocation7], 256
        $region56: #{tpu_custom_call.1} parent=43 // pred_fallthru
          _
        // Predicated region
        $region57: #{tpu_custom_call.1} parent=43 // pred_check
          %p376 = pneg %p123
        $region58: #{tpu_custom_call.1} parent=43 // pred_check_branch
          %378 = sbr.rel (%p376) target = $region60
        $region59: #{tpu_custom_call.1} parent=43 // pred_region
          %379 = dma.done [#allocation10], 128
        $region60: #{tpu_custom_call.1} parent=43 // pred_fallthru
          _
        // Predicated region
        $region61: #{tpu_custom_call.1} parent=43 // pred_check
          %p380 = pneg %p144
        $region62: #{tpu_custom_call.1} parent=43 // pred_check_branch
          %382 = sbr.rel (%p380) target = $region64
        $region63: #{tpu_custom_call.1} parent=43 // pred_region
          %383 = dma.done [#allocation10], 16
        $region64: #{tpu_custom_call.1} parent=43 // pred_fallthru
          _
        // Predicated region
        $region65: #{tpu_custom_call.1} parent=43 // pred_check
          %p384 = pneg %p165
        $region66: #{tpu_custom_call.1} parent=43 // pred_check_branch
          %386 = sbr.rel (%p384) target = $region68
        $region67: #{tpu_custom_call.1} parent=43 // pred_region
          %387 = dma.done [#allocation13], 16
        $region68: #{tpu_custom_call.1} parent=43 // pred_fallthru
          _
        %s388 = sand.u32 %s42, 1
        %s389 = scalar_lea.sflag [#allocation4], %s388
        %s390 = sand.u32 %s42, 1
        %s391 = smul.addr %s390, 256
        %s392 = scalar_lea.vmem [#allocation3], %s391
        %p393 = pneg %p55
        %p394 = pneg %p52
        %s395 = sand.u32 %s34, 1
        %s396 = scalar_lea.sflag [#allocation7], %s395
        %s397 = sand.u32 %s68, 1
        %s398 = smul.addr %s397, 8
        %s399 = scalar_lea.vmem [#allocation6], %s398
        %p400 = pneg %p81
        %p401 = pneg %p78
        %p402 = pneg %p102
        %p403 = pneg %p99
        %p404 = pneg %p123
        %p405 = pneg %p120
        %p406 = pneg %p144
        %p407 = pneg %p141
        %p408 = pneg %p165
        %p409 = pneg %p162
        %p410 = pneg %p191
        %p411 = pneg %p188
        %s412 = sand.u32 %s178, 1
        %s413 = scalar_lea.sflag [#allocation5], %s412
        %s414 = sand.u32 %s178, 1
        %s415 = smul.addr %s414, 256
        %s416 = scalar_lea.vmem [#allocation14], %s415
        %p417 = pneg %p217
        %p418 = pneg %p214
        %s419 = sand.u32 %s34, 1
        %s420 = scalar_lea.sflag [#allocation16], %s419
        %s421 = sand.u32 %s204, 1
        %s422 = scalar_lea.vmem [#allocation15], %s421
        %p423 = pneg %p243
        %p424 = pneg %p240
        %s425 = sand.u32 %s34, 1
        %s426 = scalar_lea.sflag [#allocation16], %s425
        %s427 = sand.u32 %s230, 1
        %s428 = scalar_lea.vmem [#allocation17], %s427
        %v429 = vld [vmem:[%s358] sm:$0xff]
        %v430 = vld [vmem:[%s358 + $0x8] sm:$0xff]
        %v431 = vld [vmem:[%s358 + $0x10] sm:$0xff]
        %v432 = vld [vmem:[%s358 + $0x18] sm:$0xff]
        %v433 = vld [vmem:[%s358 + $0x20] sm:$0xff]
        %v434 = vld [vmem:[%s358 + $0x28] sm:$0xff]
        %v435 = vld [vmem:[%s358 + $0x30] sm:$0xff]
        %v436 = vld [vmem:[%s358 + $0x38] sm:$0xff]
        %v437 = vld [vmem:[%s358 + $0x40] sm:$0xff]
        %v438 = vld [vmem:[%s358 + $0x48] sm:$0xff]
        %v439 = vld [vmem:[%s358 + $0x50] sm:$0xff]
        %v440 = vld [vmem:[%s358 + $0x58] sm:$0xff]
        %v441 = vld [vmem:[%s358 + $0x60] sm:$0xff]
        %v442 = vld [vmem:[%s358 + $0x68] sm:$0xff]
        %v443 = vld [vmem:[%s358 + $0x70] sm:$0xff]
        %v444 = vld [vmem:[%s358 + $0x78] sm:$0xff]
        %v445 = vld [vmem:[%s358 + $0x80] sm:$0xff]
        %v446 = vld [vmem:[%s358 + $0x88] sm:$0xff]
        %v447 = vld [vmem:[%s358 + $0x90] sm:$0xff]
        %v448 = vld [vmem:[%s358 + $0x98] sm:$0xff]
        %v449 = vld [vmem:[%s358 + $0xa0] sm:$0xff]
        %v450 = vld [vmem:[%s358 + $0xa8] sm:$0xff]
        %v451 = vld [vmem:[%s358 + $0xb0] sm:$0xff]
        %v452 = vld [vmem:[%s358 + $0xb8] sm:$0xff]
        %v453 = vld [vmem:[%s358 + $0xc0] sm:$0xff]
        %v454 = vld [vmem:[%s358 + $0xc8] sm:$0xff]
        %v455 = vld [vmem:[%s358 + $0xd0] sm:$0xff]
        %v456 = vld [vmem:[%s358 + $0xd8] sm:$0xff]
        %v457 = vld [vmem:[%s358 + $0xe0] sm:$0xff]
        %v458 = vld [vmem:[%s358 + $0xe8] sm:$0xff]
        %v459 = vld [vmem:[%s358 + $0xf0] sm:$0xff]
        %v460 = vld [vmem:[%s358 + $0xf8] sm:$0xff]
        %v461 = vld [vmem:[#allocation11] sm:$0x1]
        %v463 = vlaneseq
        %v464 = vshrl.u32 %v463, 7
        %v465 = vsub.s32 0, %v464
        %v466 = vrot.slane %v461, %v465
        %v468 = vmul.f32 %v429, %v466
        %v469 = vmul.f32 %v430, %v466
        %v470 = vmul.f32 %v431, %v466
        %v471 = vmul.f32 %v432, %v466
        %v472 = vmul.f32 %v433, %v466
        %v473 = vmul.f32 %v434, %v466
        %v474 = vmul.f32 %v435, %v466
        %v475 = vmul.f32 %v436, %v466
        %v476 = vmul.f32 %v437, %v466
        %v477 = vmul.f32 %v438, %v466
        %v478 = vmul.f32 %v439, %v466
        %v479 = vmul.f32 %v440, %v466
        %v480 = vmul.f32 %v441, %v466
        %v481 = vmul.f32 %v442, %v466
        %v482 = vmul.f32 %v443, %v466
        %v483 = vmul.f32 %v444, %v466
        %v484 = vmul.f32 %v445, %v466
        %v485 = vmul.f32 %v446, %v466
        %v486 = vmul.f32 %v447, %v466
        %v487 = vmul.f32 %v448, %v466
        %v488 = vmul.f32 %v449, %v466
        %v489 = vmul.f32 %v450, %v466
        %v490 = vmul.f32 %v451, %v466
        %v491 = vmul.f32 %v452, %v466
        %v492 = vmul.f32 %v453, %v466
        %v493 = vmul.f32 %v454, %v466
        %v494 = vmul.f32 %v455, %v466
        %v495 = vmul.f32 %v456, %v466
        %v496 = vmul.f32 %v457, %v466
        %v497 = vmul.f32 %v458, %v466
        %v498 = vmul.f32 %v459, %v466
        %v499 = vmul.f32 %v460, %v466
        %v500 = vld [vmem:[#allocation12] sm:$0x1]
        %v502 = vlaneseq
        %v503 = vshrl.u32 %v502, 7
        %v504 = vsub.s32 0, %v503
        %v505 = vrot.slane %v500, %v504
        %v507 = vadd.f32 %v468, %v505
        %v508 = vadd.f32 %v469, %v505
        %v509 = vadd.f32 %v470, %v505
        %v510 = vadd.f32 %v471, %v505
        %v511 = vadd.f32 %v472, %v505
        %v512 = vadd.f32 %v473, %v505
        %v513 = vadd.f32 %v474, %v505
        %v514 = vadd.f32 %v475, %v505
        %v515 = vadd.f32 %v476, %v505
        %v516 = vadd.f32 %v477, %v505
        %v517 = vadd.f32 %v478, %v505
        %v518 = vadd.f32 %v479, %v505
        %v519 = vadd.f32 %v480, %v505
        %v520 = vadd.f32 %v481, %v505
        %v521 = vadd.f32 %v482, %v505
        %v522 = vadd.f32 %v483, %v505
        %v523 = vadd.f32 %v484, %v505
        %v524 = vadd.f32 %v485, %v505
        %v525 = vadd.f32 %v486, %v505
        %v526 = vadd.f32 %v487, %v505
        %v527 = vadd.f32 %v488, %v505
        %v528 = vadd.f32 %v489, %v505
        %v529 = vadd.f32 %v490, %v505
        %v530 = vadd.f32 %v491, %v505
        %v531 = vadd.f32 %v492, %v505
        %v532 = vadd.f32 %v493, %v505
        %v533 = vadd.f32 %v494, %v505
        %v534 = vadd.f32 %v495, %v505
        %v535 = vadd.f32 %v496, %v505
        %v536 = vadd.f32 %v497, %v505
        %v537 = vadd.f32 %v498, %v505
        %v538 = vadd.f32 %v499, %v505
        %v539 = vmax.f32 %v507, 0.0
        %v540 = vmax.f32 %v508, 0.0
        %v541 = vmax.f32 %v509, 0.0
        %v542 = vmax.f32 %v510, 0.0
        %v543 = vmax.f32 %v511, 0.0
        %v544 = vmax.f32 %v512, 0.0
        %v545 = vmax.f32 %v513, 0.0
        %v546 = vmax.f32 %v514, 0.0
        %v547 = vmax.f32 %v515, 0.0
        %v548 = vmax.f32 %v516, 0.0
        %v549 = vmax.f32 %v517, 0.0
        %v550 = vmax.f32 %v518, 0.0
        %v551 = vmax.f32 %v519, 0.0
        %v552 = vmax.f32 %v520, 0.0
        %v553 = vmax.f32 %v521, 0.0
        %v554 = vmax.f32 %v522, 0.0
        %v555 = vmax.f32 %v523, 0.0
        %v556 = vmax.f32 %v524, 0.0
        %v557 = vmax.f32 %v525, 0.0
        %v558 = vmax.f32 %v526, 0.0
        %v559 = vmax.f32 %v527, 0.0
        %v560 = vmax.f32 %v528, 0.0
        %v561 = vmax.f32 %v529, 0.0
        %v562 = vmax.f32 %v530, 0.0
        %v563 = vmax.f32 %v531, 0.0
        %v564 = vmax.f32 %v532, 0.0
        %v565 = vmax.f32 %v533, 0.0
        %v566 = vmax.f32 %v534, 0.0
        %v567 = vmax.f32 %v535, 0.0
        %v568 = vmax.f32 %v536, 0.0
        %v569 = vmax.f32 %v537, 0.0
        %v570 = vmax.f32 %v538, 0.0
        %v571 = vld [vmem:[#allocation9] sm:$0xff]
        %vm572 = vcmask 64512
        %v574 = vsel %vm572, %v539, 0
        %v577 = vsel %vm572, %v540, 0
        %v580 = vsel %vm572, %v541, 0
        %v583 = vsel %vm572, %v542, 0
        %v586 = vsel %vm572, %v543, 0
        %v589 = vsel %vm572, %v544, 0
        %v592 = vsel %vm572, %v545, 0
        %v595 = vsel %vm572, %v546, 0
        %v598 = vsel %vm572, %v547, 0
        %v601 = vsel %vm572, %v548, 0
        %v604 = vsel %vm572, %v549, 0
        %v607 = vsel %vm572, %v550, 0
        %v610 = vsel %vm572, %v551, 0
        %v613 = vsel %vm572, %v552, 0
        %v616 = vsel %vm572, %v553, 0
        %v619 = vsel %vm572, %v554, 0
        %v622 = vsel %vm572, %v555, 0
        %v625 = vsel %vm572, %v556, 0
        %v628 = vsel %vm572, %v557, 0
        %v631 = vsel %vm572, %v558, 0
        %v634 = vsel %vm572, %v559, 0
        %v637 = vsel %vm572, %v560, 0
        %v640 = vsel %vm572, %v561, 0
        %v643 = vsel %vm572, %v562, 0
        %v646 = vsel %vm572, %v563, 0
        %v649 = vsel %vm572, %v564, 0
        %v652 = vsel %vm572, %v565, 0
        %v655 = vsel %vm572, %v566, 0
        %v658 = vsel %vm572, %v567, 0
        %v661 = vsel %vm572, %v568, 0
        %v664 = vsel %vm572, %v569, 0
        %v667 = vsel %vm572, %v570, 0
        %669 = vmatprep.subr.mxu0 0.0
        %670 = vmatpush1.msra.mxu0 %v571
        %671 = vmatprep.subr.mxu0 0.0
        %672 = vmatpush1.msra.mxu0 0.0
        %673 = vmatprep.subr.mxu0 0.0
        %674 = vmatpush1.msra.mxu0 0.0
        %675 = vmatprep.subr.mxu0 0.0
        %676 = vmatpush1.msra.mxu0 0.0
        %677 = vmatprep.subr.mxu0 0.0
        %678 = vmatpush1.msra.mxu0 0.0
        %679 = vmatprep.subr.mxu0 0.0
        %680 = vmatpush1.msra.mxu0 0.0
        %681 = vmatprep.subr.mxu0 0.0
        %682 = vmatpush1.msra.mxu0 0.0
        %683 = vmatprep.subr.mxu0 0.0
        %684 = vmatpush1.msra.mxu0 0.0
        %685 = vmatprep.subr.mxu0 0.0
        %686 = vmatpush1.msra.mxu0 0.0
        %687 = vmatprep.subr.mxu0 0.0
        %688 = vmatpush1.msra.mxu0 0.0
        %689 = vmatprep.subr.mxu0 0.0
        %690 = vmatpush1.msra.mxu0 0.0
        %691 = vmatprep.subr.mxu0 0.0
        %692 = vmatpush1.msra.mxu0 0.0
        %693 = vmatprep.subr.mxu0 0.0
        %694 = vmatpush1.msra.mxu0 0.0
        %695 = vmatprep.subr.mxu0 0.0
        %696 = vmatpush1.msra.mxu0 0.0
        %697 = vmatprep.subr.mxu0 0.0
        %698 = vmatpush1.msra.mxu0 0.0
        %699 = vmatprep.subr.mxu0 0.0
        %700 = vmatpush1.msra.mxu0 0.0
        %701 = vmatprep.subr.mxu0 0.0
        %702 = vmatpush1.msra.mxu0 0.0
        %703 = vmatprep.subr.mxu0 0.0
        %704 = vmatpush1.msra.mxu0 0.0
        %705 = vmatprep.subr.mxu0 0.0
        %706 = vmatpush1.msra.mxu0 0.0
        %707 = vmatprep.subr.mxu0 0.0
        %708 = vmatpush1.msra.mxu0 0.0
        %709 = vmatprep.subr.mxu0 0.0
        %710 = vmatpush1.msra.mxu0 0.0
        %711 = vmatprep.subr.mxu0 0.0
        %712 = vmatpush1.msra.mxu0 0.0
        %713 = vmatprep.subr.mxu0 0.0
        %714 = vmatpush1.msra.mxu0 0.0
        %715 = vmatprep.subr.mxu0 0.0
        %716 = vmatpush1.msra.mxu0 0.0
        %717 = vmatprep.subr.mxu0 0.0
        %718 = vmatpush1.msra.mxu0 0.0
        %719 = vmatprep.subr.mxu0 0.0
        %720 = vmatpush1.msra.mxu0 0.0
        %721 = vmatprep.subr.mxu0 0.0
        %722 = vmatpush1.msra.mxu0 0.0
        %723 = vmatprep.subr.mxu0 0.0
        %724 = vmatpush1.msra.mxu0 0.0
        %725 = vmatprep.subr.mxu0 0.0
        %726 = vmatpush1.msra.mxu0 0.0
        %727 = vmatprep.subr.mxu0 0.0
        %728 = vmatpush1.msra.mxu0 0.0
        %729 = vmatprep.subr.mxu0 0.0
        %730 = vmatpush1.msra.mxu0 0.0
        %731 = vmatprep.subr.mxu0 0.0
        %732 = vmatpush1.msra.mxu0 0.0
        %733 = vmatprep.mubr.f32.mxu0 0.0
        %734 = vmatmul.mubr.f32.gmra.mrb[0].mxu0 %v574
        %v735 = vpop.f32.mrb[0].mxu0
        %v736 = vadd.f32 0.0, %v735
        %v737 = vpop.f32.mrb[0].mxu0
        %738 = vmatprep.mubr.f32.mxu0 0.0
        %739 = vmatmul.mubr.f32.gmra.mrb[0].mxu0 %v577
        %v740 = vpop.f32.mrb[0].mxu0
        %v741 = vadd.f32 0.0, %v740
        %v742 = vpop.f32.mrb[0].mxu0
        %743 = vmatprep.mubr.f32.mxu0 0.0
        %744 = vmatmul.mubr.f32.gmra.mrb[0].mxu0 %v580
        %v745 = vpop.f32.mrb[0].mxu0
        %v746 = vadd.f32 0.0, %v745
        %v747 = vpop.f32.mrb[0].mxu0
        %748 = vmatprep.mubr.f32.mxu0 0.0
        %749 = vmatmul.mubr.f32.gmra.mrb[0].mxu0 %v583
        %v750 = vpop.f32.mrb[0].mxu0
        %v751 = vadd.f32 0.0, %v750
        %v752 = vpop.f32.mrb[0].mxu0
        %753 = vmatprep.mubr.f32.mxu0 0.0
        %754 = vmatmul.mubr.f32.gmra.mrb[0].mxu0 %v586
        %v755 = vpop.f32.mrb[0].mxu0
        %v756 = vadd.f32 0.0, %v755
        %v757 = vpop.f32.mrb[0].mxu0
        %758 = vmatprep.mubr.f32.mxu0 0.0
        %759 = vmatmul.mubr.f32.gmra.mrb[0].mxu0 %v589
        %v760 = vpop.f32.mrb[0].mxu0
        %v761 = vadd.f32 0.0, %v760
        %v762 = vpop.f32.mrb[0].mxu0
        %763 = vmatprep.mubr.f32.mxu0 0.0
        %764 = vmatmul.mubr.f32.gmra.mrb[0].mxu0 %v592
        %v765 = vpop.f32.mrb[0].mxu0
        %v766 = vadd.f32 0.0, %v765
        %v767 = vpop.f32.mrb[0].mxu0
        %768 = vmatprep.mubr.f32.mxu0 0.0
        %769 = vmatmul.mubr.f32.gmra.mrb[0].mxu0 %v595
        %v770 = vpop.f32.mrb[0].mxu0
        %v771 = vadd.f32 0.0, %v770
        %v772 = vpop.f32.mrb[0].mxu0
        %773 = vmatprep.mubr.f32.mxu0 0.0
        %774 = vmatmul.mubr.f32.gmra.mrb[0].mxu0 %v598
        %v775 = vpop.f32.mrb[0].mxu0
        %v776 = vadd.f32 0.0, %v775
        %v777 = vpop.f32.mrb[0].mxu0
        %778 = vmatprep.mubr.f32.mxu0 0.0
        %779 = vmatmul.mubr.f32.gmra.mrb[0].mxu0 %v601
        %v780 = vpop.f32.mrb[0].mxu0
        %v781 = vadd.f32 0.0, %v780
        %v782 = vpop.f32.mrb[0].mxu0
        %783 = vmatprep.mubr.f32.mxu0 0.0
        %784 = vmatmul.mubr.f32.gmra.mrb[0].mxu0 %v604
        %v785 = vpop.f32.mrb[0].mxu0
        %v786 = vadd.f32 0.0, %v785
        %v787 = vpop.f32.mrb[0].mxu0
        %788 = vmatprep.mubr.f32.mxu0 0.0
        %789 = vmatmul.mubr.f32.gmra.mrb[0].mxu0 %v607
        %v790 = vpop.f32.mrb[0].mxu0
        %v791 = vadd.f32 0.0, %v790
        %v792 = vpop.f32.mrb[0].mxu0
        %793 = vmatprep.mubr.f32.mxu0 0.0
        %794 = vmatmul.mubr.f32.gmra.mrb[0].mxu0 %v610
        %v795 = vpop.f32.mrb[0].mxu0
        %v796 = vadd.f32 0.0, %v795
        %v797 = vpop.f32.mrb[0].mxu0
        %798 = vmatprep.mubr.f32.mxu0 0.0
        %799 = vmatmul.mubr.f32.gmra.mrb[0].mxu0 %v613
        %v800 = vpop.f32.mrb[0].mxu0
        %v801 = vadd.f32 0.0, %v800
        %v802 = vpop.f32.mrb[0].mxu0
        %803 = vmatprep.mubr.f32.mxu0 0.0
        %804 = vmatmul.mubr.f32.gmra.mrb[0].mxu0 %v616
        %v805 = vpop.f32.mrb[0].mxu0
        %v806 = vadd.f32 0.0, %v805
        %v807 = vpop.f32.mrb[0].mxu0
        %808 = vmatprep.mubr.f32.mxu0 0.0
        %809 = vmatmul.mubr.f32.gmra.mrb[0].mxu0 %v619
        %v810 = vpop.f32.mrb[0].mxu0
        %v811 = vadd.f32 0.0, %v810
        %v812 = vpop.f32.mrb[0].mxu0
        %813 = vmatprep.mubr.f32.mxu0 0.0
        %814 = vmatmul.mubr.f32.gmra.mrb[0].mxu0 %v622
        %v815 = vpop.f32.mrb[0].mxu0
        %v816 = vadd.f32 0.0, %v815
        %v817 = vpop.f32.mrb[0].mxu0
        %818 = vmatprep.mubr.f32.mxu0 0.0
        %819 = vmatmul.mubr.f32.gmra.mrb[0].mxu0 %v625
        %v820 = vpop.f32.mrb[0].mxu0
        %v821 = vadd.f32 0.0, %v820
        %v822 = vpop.f32.mrb[0].mxu0
        %823 = vmatprep.mubr.f32.mxu0 0.0
        %824 = vmatmul.mubr.f32.gmra.mrb[0].mxu0 %v628
        %v825 = vpop.f32.mrb[0].mxu0
        %v826 = vadd.f32 0.0, %v825
        %v827 = vpop.f32.mrb[0].mxu0
        %828 = vmatprep.mubr.f32.mxu0 0.0
        %829 = vmatmul.mubr.f32.gmra.mrb[0].mxu0 %v631
        %v830 = vpop.f32.mrb[0].mxu0
        %v831 = vadd.f32 0.0, %v830
        %v832 = vpop.f32.mrb[0].mxu0
        %833 = vmatprep.mubr.f32.mxu0 0.0
        %834 = vmatmul.mubr.f32.gmra.mrb[0].mxu0 %v634
        %v835 = vpop.f32.mrb[0].mxu0
        %v836 = vadd.f32 0.0, %v835
        %v837 = vpop.f32.mrb[0].mxu0
        %838 = vmatprep.mubr.f32.mxu0 0.0
        %839 = vmatmul.mubr.f32.gmra.mrb[0].mxu0 %v637
        %v840 = vpop.f32.mrb[0].mxu0
        %v841 = vadd.f32 0.0, %v840
        %v842 = vpop.f32.mrb[0].mxu0
        %843 = vmatprep.mubr.f32.mxu0 0.0
        %844 = vmatmul.mubr.f32.gmra.mrb[0].mxu0 %v640
        %v845 = vpop.f32.mrb[0].mxu0
        %v846 = vadd.f32 0.0, %v845
        %v847 = vpop.f32.mrb[0].mxu0
        %848 = vmatprep.mubr.f32.mxu0 0.0
        %849 = vmatmul.mubr.f32.gmra.mrb[0].mxu0 %v643
        %v850 = vpop.f32.mrb[0].mxu0
        %v851 = vadd.f32 0.0, %v850
        %v852 = vpop.f32.mrb[0].mxu0
        %853 = vmatprep.mubr.f32.mxu0 0.0
        %854 = vmatmul.mubr.f32.gmra.mrb[0].mxu0 %v646
        %v855 = vpop.f32.mrb[0].mxu0
        %v856 = vadd.f32 0.0, %v855
        %v857 = vpop.f32.mrb[0].mxu0
        %858 = vmatprep.mubr.f32.mxu0 0.0
        %859 = vmatmul.mubr.f32.gmra.mrb[0].mxu0 %v649
        %v860 = vpop.f32.mrb[0].mxu0
        %v861 = vadd.f32 0.0, %v860
        %v862 = vpop.f32.mrb[0].mxu0
        %863 = vmatprep.mubr.f32.mxu0 0.0
        %864 = vmatmul.mubr.f32.gmra.mrb[0].mxu0 %v652
        %v865 = vpop.f32.mrb[0].mxu0
        %v866 = vadd.f32 0.0, %v865
        %v867 = vpop.f32.mrb[0].mxu0
        %868 = vmatprep.mubr.f32.mxu0 0.0
        %869 = vmatmul.mubr.f32.gmra.mrb[0].mxu0 %v655
        %v870 = vpop.f32.mrb[0].mxu0
        %v871 = vadd.f32 0.0, %v870
        %v872 = vpop.f32.mrb[0].mxu0
        %873 = vmatprep.mubr.f32.mxu0 0.0
        %874 = vmatmul.mubr.f32.gmra.mrb[0].mxu0 %v658
        %v875 = vpop.f32.mrb[0].mxu0
        %v876 = vadd.f32 0.0, %v875
        %v877 = vpop.f32.mrb[0].mxu0
        %878 = vmatprep.mubr.f32.mxu0 0.0
        %879 = vmatmul.mubr.f32.gmra.mrb[0].mxu0 %v661
        %v880 = vpop.f32.mrb[0].mxu0
        %v881 = vadd.f32 0.0, %v880
        %v882 = vpop.f32.mrb[0].mxu0
        %883 = vmatprep.mubr.f32.mxu0 0.0
        %884 = vmatmul.mubr.f32.gmra.mrb[0].mxu0 %v664
        %v885 = vpop.f32.mrb[0].mxu0
        %v886 = vadd.f32 0.0, %v885
        %v887 = vpop.f32.mrb[0].mxu0
        %888 = vmatprep.mubr.f32.mxu0 0.0
        %889 = vmatmul.mubr.f32.gmra.mrb[0].mxu0 %v667
        %v890 = vpop.f32.mrb[0].mxu0
        %v891 = vadd.f32 0.0, %v890
        %v892 = vpop.f32.mrb[0].mxu0
        %893 = vdwg.mxu0
        %v894 = vld [vmem:[%s367] sm:$0xff]
        %v895 = vld [vmem:[#allocation8] sm:$0xff]
        %v896 = vld [vmem:[#allocation8 + $0x8] sm:$0xff]
        %v898 = vsel %vm572, %v895, 0
        %v901 = vsel %vm572, %v896, 0
        %903 = vmatprep.subr.mxu0 0.0
        %904 = vmatpush1.msra.mxu0 %v894
        %905 = vmatprep.subr.mxu0 0.0
        %906 = vmatpush1.msra.mxu0 0.0
        %907 = vmatprep.subr.mxu0 0.0
        %908 = vmatpush1.msra.mxu0 0.0
        %909 = vmatprep.subr.mxu0 0.0
        %910 = vmatpush1.msra.mxu0 0.0
        %911 = vmatprep.subr.mxu0 0.0
        %912 = vmatpush1.msra.mxu0 0.0
        %913 = vmatprep.subr.mxu0 0.0
        %914 = vmatpush1.msra.mxu0 0.0
        %915 = vmatprep.subr.mxu0 0.0
        %916 = vmatpush1.msra.mxu0 0.0
        %917 = vmatprep.subr.mxu0 0.0
        %918 = vmatpush1.msra.mxu0 0.0
        %919 = vmatprep.subr.mxu0 0.0
        %920 = vmatpush1.msra.mxu0 0.0
        %921 = vmatprep.subr.mxu0 0.0
        %922 = vmatpush1.msra.mxu0 0.0
        %923 = vmatprep.subr.mxu0 0.0
        %924 = vmatpush1.msra.mxu0 0.0
        %925 = vmatprep.subr.mxu0 0.0
        %926 = vmatpush1.msra.mxu0 0.0
        %927 = vmatprep.subr.mxu0 0.0
        %928 = vmatpush1.msra.mxu0 0.0
        %929 = vmatprep.subr.mxu0 0.0
        %930 = vmatpush1.msra.mxu0 0.0
        %931 = vmatprep.subr.mxu0 0.0
        %932 = vmatpush1.msra.mxu0 0.0
        %933 = vmatprep.subr.mxu0 0.0
        %934 = vmatpush1.msra.mxu0 0.0
        %935 = vmatprep.subr.mxu0 0.0
        %936 = vmatpush1.msra.mxu0 0.0
        %937 = vmatprep.subr.mxu0 0.0
        %938 = vmatpush1.msra.mxu0 0.0
        %939 = vmatprep.subr.mxu0 0.0
        %940 = vmatpush1.msra.mxu0 0.0
        %941 = vmatprep.subr.mxu0 0.0
        %942 = vmatpush1.msra.mxu0 0.0
        %943 = vmatprep.subr.mxu0 0.0
        %944 = vmatpush1.msra.mxu0 0.0
        %945 = vmatprep.subr.mxu0 0.0
        %946 = vmatpush1.msra.mxu0 0.0
        %947 = vmatprep.subr.mxu0 0.0
        %948 = vmatpush1.msra.mxu0 0.0
        %949 = vmatprep.subr.mxu0 0.0
        %950 = vmatpush1.msra.mxu0 0.0
        %951 = vmatprep.subr.mxu0 0.0
        %952 = vmatpush1.msra.mxu0 0.0
        %953 = vmatprep.subr.mxu0 0.0
        %954 = vmatpush1.msra.mxu0 0.0
        %955 = vmatprep.subr.mxu0 0.0
        %956 = vmatpush1.msra.mxu0 0.0
        %957 = vmatprep.subr.mxu0 0.0
        %958 = vmatpush1.msra.mxu0 0.0
        %959 = vmatprep.subr.mxu0 0.0
        %960 = vmatpush1.msra.mxu0 0.0
        %961 = vmatprep.subr.mxu0 0.0
        %962 = vmatpush1.msra.mxu0 0.0
        %963 = vmatprep.subr.mxu0 0.0
        %964 = vmatpush1.msra.mxu0 0.0
        %965 = vmatprep.subr.mxu0 0.0
        %966 = vmatpush1.msra.mxu0 0.0
        %967 = vmatprep.mubr.f32.mxu0 0.0
        %968 = vmatmul.mubr.f32.gmra.mrb[0].mxu0 %v898
        %v969 = vpop.f32.mrb[0].mxu0
        %v970 = vadd.f32 0.0, %v969
        %v971 = vpop.f32.mrb[0].mxu0
        %972 = vmatprep.mubr.f32.mxu0 0.0
        %973 = vmatmul.mubr.f32.gmra.mrb[0].mxu0 %v901
        %v974 = vpop.f32.mrb[0].mxu0
        %v975 = vadd.f32 0.0, %v974
        %v976 = vpop.f32.mrb[0].mxu0
        %977 = vdwg.mxu0
        %v980 = vcombine.high %v970, %v970
        %v982 = vunpack.c.l.s4 1966171168
        %v983 = vunpack.c.0.s8 %v982
        %v984 = vlaneseq
        %v985 = vshrl.u32 %v984, 7
        %v986 = vsub.s32 %v983, %v985
        %v987 = vrot.slane %v970, %v986
        %v989 = vunpack.c.l.s4 1966171168
        %v990 = vunpack.c.0.s8 %v989
        %v991 = vlaneseq
        %v992 = vshrl.u32 %v991, 7
        %v993 = vsub.s32 %v990, %v992
        %v994 = vrot.slane %v980, %v993
        %v995 = vcombine.high %v987, %v987
        %v996 = vcombine.high %v994, %v994
        %v998 = vunpack.c.l.s4 1966171168
        %v999 = vunpack.c.0.s8 %v998
        %v1000 = vlaneseq
        %v1001 = vshrl.u32 %v1000, 7
        %v1002 = vsub.s32 %v999, %v1001
        %v1003 = vrot.slane %v987, %v1002
        %v1005 = vunpack.c.l.s4 1966171168
        %v1006 = vunpack.c.0.s8 %v1005
        %v1007 = vlaneseq
        %v1008 = vshrl.u32 %v1007, 7
        %v1009 = vsub.s32 %v1006, %v1008
        %v1010 = vrot.slane %v994, %v1009
        %v1012 = vunpack.c.l.s4 1966171168
        %v1013 = vunpack.c.0.s8 %v1012
        %v1014 = vlaneseq
        %v1015 = vshrl.u32 %v1014, 7
        %v1016 = vsub.s32 %v1013, %v1015
        %v1017 = vrot.slane %v995, %v1016
        %v1019 = vunpack.c.l.s4 1966171168
        %v1020 = vunpack.c.0.s8 %v1019
        %v1021 = vlaneseq
        %v1022 = vshrl.u32 %v1021, 7
        %v1023 = vsub.s32 %v1020, %v1022
        %v1024 = vrot.slane %v996, %v1023
        %v1025 = vcombine.high %v1003, %v1003
        %v1026 = vcombine.high %v1010, %v1010
        %v1027 = vcombine.high %v1017, %v1017
        %v1028 = vcombine.high %v1024, %v1024
        %v1029 = vcombine.high %v975, %v975
        %v1031 = vunpack.c.l.s4 1966171168
        %v1032 = vunpack.c.0.s8 %v1031
        %v1033 = vlaneseq
        %v1034 = vshrl.u32 %v1033, 7
        %v1035 = vsub.s32 %v1032, %v1034
        %v1036 = vrot.slane %v975, %v1035
        %v1038 = vunpack.c.l.s4 1966171168
        %v1039 = vunpack.c.0.s8 %v1038
        %v1040 = vlaneseq
        %v1041 = vshrl.u32 %v1040, 7
        %v1042 = vsub.s32 %v1039, %v1041
        %v1043 = vrot.slane %v1029, %v1042
        %v1044 = vcombine.high %v1036, %v1036
        %v1045 = vcombine.high %v1043, %v1043
        %v1047 = vunpack.c.l.s4 1966171168
        %v1048 = vunpack.c.0.s8 %v1047
        %v1049 = vlaneseq
        %v1050 = vshrl.u32 %v1049, 7
        %v1051 = vsub.s32 %v1048, %v1050
        %v1052 = vrot.slane %v1036, %v1051
        %v1054 = vunpack.c.l.s4 1966171168
        %v1055 = vunpack.c.0.s8 %v1054
        %v1056 = vlaneseq
        %v1057 = vshrl.u32 %v1056, 7
        %v1058 = vsub.s32 %v1055, %v1057
        %v1059 = vrot.slane %v1043, %v1058
        %v1061 = vunpack.c.l.s4 1966171168
        %v1062 = vunpack.c.0.s8 %v1061
        %v1063 = vlaneseq
        %v1064 = vshrl.u32 %v1063, 7
        %v1065 = vsub.s32 %v1062, %v1064
        %v1066 = vrot.slane %v1044, %v1065
        %v1068 = vunpack.c.l.s4 1966171168
        %v1069 = vunpack.c.0.s8 %v1068
        %v1070 = vlaneseq
        %v1071 = vshrl.u32 %v1070, 7
        %v1072 = vsub.s32 %v1069, %v1071
        %v1073 = vrot.slane %v1045, %v1072
        %v1074 = vcombine.high %v1052, %v1052
        %v1075 = vcombine.high %v1059, %v1059
        %v1076 = vcombine.high %v1066, %v1066
        %v1077 = vcombine.high %v1073, %v1073
        %vm1094 = vcmask 122880
        %1095 = vst.msk [vmem:[#allocation2] sm:$0x1] %vm1094, %v1003
        %1096 = vst.msk [vmem:[#allocation2 + $0x10] sm:$0x1] %vm1094, %v1017
        %1097 = vst.msk [vmem:[#allocation2 + $0x20] sm:$0x1] %vm1094, %v1025
        %1098 = vst.msk [vmem:[#allocation2 + $0x30] sm:$0x1] %vm1094, %v1027
        %1099 = vst.msk [vmem:[#allocation2 + $0x40] sm:$0x1] %vm1094, %v1010
        %1100 = vst.msk [vmem:[#allocation2 + $0x50] sm:$0x1] %vm1094, %v1024
        %1101 = vst.msk [vmem:[#allocation2 + $0x60] sm:$0x1] %vm1094, %v1026
        %1102 = vst.msk [vmem:[#allocation2 + $0x70] sm:$0x1] %vm1094, %v1028
        %1103 = vst.msk [vmem:[#allocation2 + $0x80] sm:$0x1] %vm1094, %v1052
        %1104 = vst.msk [vmem:[#allocation2 + $0x90] sm:$0x1] %vm1094, %v1066
        %1105 = vst.msk [vmem:[#allocation2 + $0xa0] sm:$0x1] %vm1094, %v1074
        %1106 = vst.msk [vmem:[#allocation2 + $0xb0] sm:$0x1] %vm1094, %v1076
        %1107 = vst.msk [vmem:[#allocation2 + $0xc0] sm:$0x1] %vm1094, %v1059
        %1108 = vst.msk [vmem:[#allocation2 + $0xd0] sm:$0x1] %vm1094, %v1073
        %1109 = vst.msk [vmem:[#allocation2 + $0xe0] sm:$0x1] %vm1094, %v1075
        %1110 = vst.msk [vmem:[#allocation2 + $0xf0] sm:$0x1] %vm1094, %v1077
        %v1111 = vmul.f32 %v970, 0.53333336
        %v1112 = vmul.f32 %v975, 0.53333336
        %v1113 = vmul.f32 %v970, 0.46666667
        %v1114 = vmul.f32 %v975, 0.46666667
        %1117 = vrot.lane.b32.xlu0 %v1113, 112
        %v1118 = vpop.permute.xlu0 %1117
        %1119 = vrot.lane.b32.xlu0 %v1114, 112
        %v1120 = vpop.permute.xlu0 %1119
        %v1123 = vadd.f32 %v1111, %v1118
        %v1124 = vadd.f32 %v1112, %v1120
        %v1127 = vcombine.high %v1123, %v1123
        %v1129 = vunpack.c.l.s4 1966171168
        %v1130 = vunpack.c.0.s8 %v1129
        %v1131 = vlaneseq
        %v1132 = vshrl.u32 %v1131, 7
        %v1133 = vsub.s32 %v1130, %v1132
        %v1134 = vrot.slane %v1123, %v1133
        %v1136 = vunpack.c.l.s4 1966171168
        %v1137 = vunpack.c.0.s8 %v1136
        %v1138 = vlaneseq
        %v1139 = vshrl.u32 %v1138, 7
        %v1140 = vsub.s32 %v1137, %v1139
        %v1141 = vrot.slane %v1127, %v1140
        %v1142 = vcombine.high %v1134, %v1134
        %v1143 = vcombine.high %v1141, %v1141
        %v1145 = vunpack.c.l.s4 1966171168
        %v1146 = vunpack.c.0.s8 %v1145
        %v1147 = vlaneseq
        %v1148 = vshrl.u32 %v1147, 7
        %v1149 = vsub.s32 %v1146, %v1148
        %v1150 = vrot.slane %v1134, %v1149
        %v1152 = vunpack.c.l.s4 1966171168
        %v1153 = vunpack.c.0.s8 %v1152
        %v1154 = vlaneseq
        %v1155 = vshrl.u32 %v1154, 7
        %v1156 = vsub.s32 %v1153, %v1155
        %v1157 = vrot.slane %v1141, %v1156
        %v1159 = vunpack.c.l.s4 1966171168
        %v1160 = vunpack.c.0.s8 %v1159
        %v1161 = vlaneseq
        %v1162 = vshrl.u32 %v1161, 7
        %v1163 = vsub.s32 %v1160, %v1162
        %v1164 = vrot.slane %v1142, %v1163
        %v1166 = vunpack.c.l.s4 1966171168
        %v1167 = vunpack.c.0.s8 %v1166
        %v1168 = vlaneseq
        %v1169 = vshrl.u32 %v1168, 7
        %v1170 = vsub.s32 %v1167, %v1169
        %v1171 = vrot.slane %v1143, %v1170
        %v1172 = vcombine.high %v1150, %v1150
        %v1173 = vcombine.high %v1157, %v1157
        %v1174 = vcombine.high %v1164, %v1164
        %v1175 = vcombine.high %v1171, %v1171
        %v1176 = vcombine.high %v1124, %v1124
        %v1178 = vunpack.c.l.s4 1966171168
        %v1179 = vunpack.c.0.s8 %v1178
        %v1180 = vlaneseq
        %v1181 = vshrl.u32 %v1180, 7
        %v1182 = vsub.s32 %v1179, %v1181
        %v1183 = vrot.slane %v1124, %v1182
        %v1185 = vunpack.c.l.s4 1966171168
        %v1186 = vunpack.c.0.s8 %v1185
        %v1187 = vlaneseq
        %v1188 = vshrl.u32 %v1187, 7
        %v1189 = vsub.s32 %v1186, %v1188
        %v1190 = vrot.slane %v1176, %v1189
        %v1191 = vcombine.high %v1183, %v1183
        %v1192 = vcombine.high %v1190, %v1190
        %v1194 = vunpack.c.l.s4 1966171168
        %v1195 = vunpack.c.0.s8 %v1194
        %v1196 = vlaneseq
        %v1197 = vshrl.u32 %v1196, 7
        %v1198 = vsub.s32 %v1195, %v1197
        %v1199 = vrot.slane %v1183, %v1198
        %v1201 = vunpack.c.l.s4 1966171168
        %v1202 = vunpack.c.0.s8 %v1201
        %v1203 = vlaneseq
        %v1204 = vshrl.u32 %v1203, 7
        %v1205 = vsub.s32 %v1202, %v1204
        %v1206 = vrot.slane %v1190, %v1205
        %v1208 = vunpack.c.l.s4 1966171168
        %v1209 = vunpack.c.0.s8 %v1208
        %v1210 = vlaneseq
        %v1211 = vshrl.u32 %v1210, 7
        %v1212 = vsub.s32 %v1209, %v1211
        %v1213 = vrot.slane %v1191, %v1212
        %v1215 = vunpack.c.l.s4 1966171168
        %v1216 = vunpack.c.0.s8 %v1215
        %v1217 = vlaneseq
        %v1218 = vshrl.u32 %v1217, 7
        %v1219 = vsub.s32 %v1216, %v1218
        %v1220 = vrot.slane %v1192, %v1219
        %v1221 = vcombine.high %v1199, %v1199
        %v1222 = vcombine.high %v1206, %v1206
        %v1223 = vcombine.high %v1213, %v1213
        %v1224 = vcombine.high %v1220, %v1220
        %1241 = vst.msk [vmem:[#allocation2 + $0x1] sm:$0x1] %vm1094, %v1150
        %1242 = vst.msk [vmem:[#allocation2 + $0x11] sm:$0x1] %vm1094, %v1164
        %1243 = vst.msk [vmem:[#allocation2 + $0x21] sm:$0x1] %vm1094, %v1172
        %1244 = vst.msk [vmem:[#allocation2 + $0x31] sm:$0x1] %vm1094, %v1174
        %1245 = vst.msk [vmem:[#allocation2 + $0x41] sm:$0x1] %vm1094, %v1157
        %1246 = vst.msk [vmem:[#allocation2 + $0x51] sm:$0x1] %vm1094, %v1171
        %1247 = vst.msk [vmem:[#allocation2 + $0x61] sm:$0x1] %vm1094, %v1173
        %1248 = vst.msk [vmem:[#allocation2 + $0x71] sm:$0x1] %vm1094, %v1175
        %1249 = vst.msk [vmem:[#allocation2 + $0x81] sm:$0x1] %vm1094, %v1199
        %1250 = vst.msk [vmem:[#allocation2 + $0x91] sm:$0x1] %vm1094, %v1213
        %1251 = vst.msk [vmem:[#allocation2 + $0xa1] sm:$0x1] %vm1094, %v1221
        %1252 = vst.msk [vmem:[#allocation2 + $0xb1] sm:$0x1] %vm1094, %v1223
        %1253 = vst.msk [vmem:[#allocation2 + $0xc1] sm:$0x1] %vm1094, %v1206
        %1254 = vst.msk [vmem:[#allocation2 + $0xd1] sm:$0x1] %vm1094, %v1220
        %1255 = vst.msk [vmem:[#allocation2 + $0xe1] sm:$0x1] %vm1094, %v1222
        %1256 = vst.msk [vmem:[#allocation2 + $0xf1] sm:$0x1] %vm1094, %v1224
        %v1257 = vmul.f32 %v970, 0.06666667
        %v1258 = vmul.f32 %v975, 0.06666667
        %v1259 = vmul.f32 %v970, 0.93333334
        %v1260 = vmul.f32 %v975, 0.93333334
        %1263 = vrot.lane.b32.xlu0 %v1259, 112
        %v1264 = vpop.permute.xlu0 %1263
        %1265 = vrot.lane.b32.xlu0 %v1260, 112
        %v1266 = vpop.permute.xlu0 %1265
        %v1269 = vadd.f32 %v1257, %v1264
        %v1270 = vadd.f32 %v1258, %v1266
        %v1273 = vcombine.high %v1269, %v1269
        %v1275 = vunpack.c.l.s4 1966171168
        %v1276 = vunpack.c.0.s8 %v1275
        %v1277 = vlaneseq
        %v1278 = vshrl.u32 %v1277, 7
        %v1279 = vsub.s32 %v1276, %v1278
        %v1280 = vrot.slane %v1269, %v1279
        %v1282 = vunpack.c.l.s4 1966171168
        %v1283 = vunpack.c.0.s8 %v1282
        %v1284 = vlaneseq
        %v1285 = vshrl.u32 %v1284, 7
        %v1286 = vsub.s32 %v1283, %v1285
        %v1287 = vrot.slane %v1273, %v1286
        %v1288 = vcombine.high %v1280, %v1280
        %v1289 = vcombine.high %v1287, %v1287
        %v1291 = vunpack.c.l.s4 1966171168
        %v1292 = vunpack.c.0.s8 %v1291
        %v1293 = vlaneseq
        %v1294 = vshrl.u32 %v1293, 7
        %v1295 = vsub.s32 %v1292, %v1294
        %v1296 = vrot.slane %v1280, %v1295
        %v1298 = vunpack.c.l.s4 1966171168
        %v1299 = vunpack.c.0.s8 %v1298
        %v1300 = vlaneseq
        %v1301 = vshrl.u32 %v1300, 7
        %v1302 = vsub.s32 %v1299, %v1301
        %v1303 = vrot.slane %v1287, %v1302
        %v1305 = vunpack.c.l.s4 1966171168
        %v1306 = vunpack.c.0.s8 %v1305
        %v1307 = vlaneseq
        %v1308 = vshrl.u32 %v1307, 7
        %v1309 = vsub.s32 %v1306, %v1308
        %v1310 = vrot.slane %v1288, %v1309
        %v1312 = vunpack.c.l.s4 1966171168
        %v1313 = vunpack.c.0.s8 %v1312
        %v1314 = vlaneseq
        %v1315 = vshrl.u32 %v1314, 7
        %v1316 = vsub.s32 %v1313, %v1315
        %v1317 = vrot.slane %v1289, %v1316
        %v1318 = vcombine.high %v1296, %v1296
        %v1319 = vcombine.high %v1303, %v1303
        %v1320 = vcombine.high %v1310, %v1310
        %v1321 = vcombine.high %v1317, %v1317
        %v1322 = vcombine.high %v1270, %v1270
        %v1324 = vunpack.c.l.s4 1966171168
        %v1325 = vunpack.c.0.s8 %v1324
        %v1326 = vlaneseq
        %v1327 = vshrl.u32 %v1326, 7
        %v1328 = vsub.s32 %v1325, %v1327
        %v1329 = vrot.slane %v1270, %v1328
        %v1331 = vunpack.c.l.s4 1966171168
        %v1332 = vunpack.c.0.s8 %v1331
        %v1333 = vlaneseq
        %v1334 = vshrl.u32 %v1333, 7
        %v1335 = vsub.s32 %v1332, %v1334
        %v1336 = vrot.slane %v1322, %v1335
        %v1337 = vcombine.high %v1329, %v1329
        %v1338 = vcombine.high %v1336, %v1336
        %v1340 = vunpack.c.l.s4 1966171168
        %v1341 = vunpack.c.0.s8 %v1340
        %v1342 = vlaneseq
        %v1343 = vshrl.u32 %v1342, 7
        %v1344 = vsub.s32 %v1341, %v1343
        %v1345 = vrot.slane %v1329, %v1344
        %v1347 = vunpack.c.l.s4 1966171168
        %v1348 = vunpack.c.0.s8 %v1347
        %v1349 = vlaneseq
        %v1350 = vshrl.u32 %v1349, 7
        %v1351 = vsub.s32 %v1348, %v1350
        %v1352 = vrot.slane %v1336, %v1351
        %v1354 = vunpack.c.l.s4 1966171168
        %v1355 = vunpack.c.0.s8 %v1354
        %v1356 = vlaneseq
        %v1357 = vshrl.u32 %v1356, 7
        %v1358 = vsub.s32 %v1355, %v1357
        %v1359 = vrot.slane %v1337, %v1358
        %v1361 = vunpack.c.l.s4 1966171168
        %v1362 = vunpack.c.0.s8 %v1361
        %v1363 = vlaneseq
        %v1364 = vshrl.u32 %v1363, 7
        %v1365 = vsub.s32 %v1362, %v1364
        %v1366 = vrot.slane %v1338, %v1365
        %v1367 = vcombine.high %v1345, %v1345
        %v1368 = vcombine.high %v1352, %v1352
        %v1369 = vcombine.high %v1359, %v1359
        %v1370 = vcombine.high %v1366, %v1366
        %1387 = vst.msk [vmem:[#allocation2 + $0x2] sm:$0x1] %vm1094, %v1296
        %1388 = vst.msk [vmem:[#allocation2 + $0x12] sm:$0x1] %vm1094, %v1310
        %1389 = vst.msk [vmem:[#allocation2 + $0x22] sm:$0x1] %vm1094, %v1318
        %1390 = vst.msk [vmem:[#allocation2 + $0x32] sm:$0x1] %vm1094, %v1320
        %1391 = vst.msk [vmem:[#allocation2 + $0x42] sm:$0x1] %vm1094, %v1303
        %1392 = vst.msk [vmem:[#allocation2 + $0x52] sm:$0x1] %vm1094, %v1317
        %1393 = vst.msk [vmem:[#allocation2 + $0x62] sm:$0x1] %vm1094, %v1319
        %1394 = vst.msk [vmem:[#allocation2 + $0x72] sm:$0x1] %vm1094, %v1321
        %1395 = vst.msk [vmem:[#allocation2 + $0x82] sm:$0x1] %vm1094, %v1345
        %1396 = vst.msk [vmem:[#allocation2 + $0x92] sm:$0x1] %vm1094, %v1359
        %1397 = vst.msk [vmem:[#allocation2 + $0xa2] sm:$0x1] %vm1094, %v1367
        %1398 = vst.msk [vmem:[#allocation2 + $0xb2] sm:$0x1] %vm1094, %v1369
        %1399 = vst.msk [vmem:[#allocation2 + $0xc2] sm:$0x1] %vm1094, %v1352
        %1400 = vst.msk [vmem:[#allocation2 + $0xd2] sm:$0x1] %vm1094, %v1366
        %1401 = vst.msk [vmem:[#allocation2 + $0xe2] sm:$0x1] %vm1094, %v1368
        %1402 = vst.msk [vmem:[#allocation2 + $0xf2] sm:$0x1] %vm1094, %v1370
        %v1403 = vmul.f32 %v970, 0.6
        %v1404 = vmul.f32 %v975, 0.6
        %v1405 = vmul.f32 %v970, 0.4
        %v1406 = vmul.f32 %v975, 0.4
        %1409 = vrot.lane.b32.xlu0 %v1405, 112
        %v1410 = vpop.permute.xlu0 %1409
        %1411 = vrot.lane.b32.xlu0 %v1406, 112
        %v1412 = vpop.permute.xlu0 %1411
        %v1415 = vadd.f32 %v1403, %v1410
        %v1416 = vadd.f32 %v1404, %v1412
        %v1419 = vcombine.high %v1415, %v1415
        %v1421 = vunpack.c.l.s4 1966171168
        %v1422 = vunpack.c.0.s8 %v1421
        %v1423 = vlaneseq
        %v1424 = vshrl.u32 %v1423, 7
        %v1425 = vsub.s32 %v1422, %v1424
        %v1426 = vrot.slane %v1415, %v1425
        %v1428 = vunpack.c.l.s4 1966171168
        %v1429 = vunpack.c.0.s8 %v1428
        %v1430 = vlaneseq
        %v1431 = vshrl.u32 %v1430, 7
        %v1432 = vsub.s32 %v1429, %v1431
        %v1433 = vrot.slane %v1419, %v1432
        %v1434 = vcombine.high %v1426, %v1426
        %v1435 = vcombine.high %v1433, %v1433
        %v1437 = vunpack.c.l.s4 1966171168
        %v1438 = vunpack.c.0.s8 %v1437
        %v1439 = vlaneseq
        %v1440 = vshrl.u32 %v1439, 7
        %v1441 = vsub.s32 %v1438, %v1440
        %v1442 = vrot.slane %v1426, %v1441
        %v1444 = vunpack.c.l.s4 1966171168
        %v1445 = vunpack.c.0.s8 %v1444
        %v1446 = vlaneseq
        %v1447 = vshrl.u32 %v1446, 7
        %v1448 = vsub.s32 %v1445, %v1447
        %v1449 = vrot.slane %v1433, %v1448
        %v1451 = vunpack.c.l.s4 1966171168
        %v1452 = vunpack.c.0.s8 %v1451
        %v1453 = vlaneseq
        %v1454 = vshrl.u32 %v1453, 7
        %v1455 = vsub.s32 %v1452, %v1454
        %v1456 = vrot.slane %v1434, %v1455
        %v1458 = vunpack.c.l.s4 1966171168
        %v1459 = vunpack.c.0.s8 %v1458
        %v1460 = vlaneseq
        %v1461 = vshrl.u32 %v1460, 7
        %v1462 = vsub.s32 %v1459, %v1461
        %v1463 = vrot.slane %v1435, %v1462
        %v1464 = vcombine.high %v1442, %v1442
        %v1465 = vcombine.high %v1449, %v1449
        %v1466 = vcombine.high %v1456, %v1456
        %v1467 = vcombine.high %v1463, %v1463
        %v1468 = vcombine.high %v1416, %v1416
        %v1470 = vunpack.c.l.s4 1966171168
        %v1471 = vunpack.c.0.s8 %v1470
        %v1472 = vlaneseq
        %v1473 = vshrl.u32 %v1472, 7
        %v1474 = vsub.s32 %v1471, %v1473
        %v1475 = vrot.slane %v1416, %v1474
        %v1477 = vunpack.c.l.s4 1966171168
        %v1478 = vunpack.c.0.s8 %v1477
        %v1479 = vlaneseq
        %v1480 = vshrl.u32 %v1479, 7
        %v1481 = vsub.s32 %v1478, %v1480
        %v1482 = vrot.slane %v1468, %v1481
        %v1483 = vcombine.high %v1475, %v1475
        %v1484 = vcombine.high %v1482, %v1482
        %v1486 = vunpack.c.l.s4 1966171168
        %v1487 = vunpack.c.0.s8 %v1486
        %v1488 = vlaneseq
        %v1489 = vshrl.u32 %v1488, 7
        %v1490 = vsub.s32 %v1487, %v1489
        %v1491 = vrot.slane %v1475, %v1490
        %v1493 = vunpack.c.l.s4 1966171168
        %v1494 = vunpack.c.0.s8 %v1493
        %v1495 = vlaneseq
        %v1496 = vshrl.u32 %v1495, 7
        %v1497 = vsub.s32 %v1494, %v1496
        %v1498 = vrot.slane %v1482, %v1497
        %v1500 = vunpack.c.l.s4 1966171168
        %v1501 = vunpack.c.0.s8 %v1500
        %v1502 = vlaneseq
        %v1503 = vshrl.u32 %v1502, 7
        %v1504 = vsub.s32 %v1501, %v1503
        %v1505 = vrot.slane %v1483, %v1504
        %v1507 = vunpack.c.l.s4 1966171168
        %v1508 = vunpack.c.0.s8 %v1507
        %v1509 = vlaneseq
        %v1510 = vshrl.u32 %v1509, 7
        %v1511 = vsub.s32 %v1508, %v1510
        %v1512 = vrot.slane %v1484, %v1511
        %v1513 = vcombine.high %v1491, %v1491
        %v1514 = vcombine.high %v1498, %v1498
        %v1515 = vcombine.high %v1505, %v1505
        %v1516 = vcombine.high %v1512, %v1512
        %v1517 = vlaneseq
        %v1518 = vshrl.u32 %v1517, 7
        %v1519 = vsub.s32 0, %v1518
        %v1520 = vrot.slane %v1442, %v1519
        %v1521 = vlaneseq
        %v1522 = vshrl.u32 %v1521, 7
        %v1523 = vsub.s32 0, %v1522
        %v1524 = vrot.slane %v1456, %v1523
        %v1525 = vlaneseq
        %v1526 = vshrl.u32 %v1525, 7
        %v1527 = vsub.s32 0, %v1526
        %v1528 = vrot.slane %v1464, %v1527
        %v1529 = vlaneseq
        %v1530 = vshrl.u32 %v1529, 7
        %v1531 = vsub.s32 0, %v1530
        %v1532 = vrot.slane %v1466, %v1531
        %v1533 = vlaneseq
        %v1534 = vshrl.u32 %v1533, 7
        %v1535 = vsub.s32 0, %v1534
        %v1536 = vrot.slane %v1449, %v1535
        %v1537 = vlaneseq
        %v1538 = vshrl.u32 %v1537, 7
        %v1539 = vsub.s32 0, %v1538
        %v1540 = vrot.slane %v1463, %v1539
        %v1541 = vlaneseq
        %v1542 = vshrl.u32 %v1541, 7
        %v1543 = vsub.s32 0, %v1542
        %v1544 = vrot.slane %v1465, %v1543
        %v1545 = vlaneseq
        %v1546 = vshrl.u32 %v1545, 7
        %v1547 = vsub.s32 0, %v1546
        %v1548 = vrot.slane %v1467, %v1547
        %v1549 = vlaneseq
        %v1550 = vshrl.u32 %v1549, 7
        %v1551 = vsub.s32 0, %v1550
        %v1552 = vrot.slane %v1491, %v1551
        %v1553 = vlaneseq
        %v1554 = vshrl.u32 %v1553, 7
        %v1555 = vsub.s32 0, %v1554
        %v1556 = vrot.slane %v1505, %v1555
        %v1557 = vlaneseq
        %v1558 = vshrl.u32 %v1557, 7
        %v1559 = vsub.s32 0, %v1558
        %v1560 = vrot.slane %v1513, %v1559
        %v1561 = vlaneseq
        %v1562 = vshrl.u32 %v1561, 7
        %v1563 = vsub.s32 0, %v1562
        %v1564 = vrot.slane %v1515, %v1563
        %v1565 = vlaneseq
        %v1566 = vshrl.u32 %v1565, 7
        %v1567 = vsub.s32 0, %v1566
        %v1568 = vrot.slane %v1498, %v1567
        %v1569 = vlaneseq
        %v1570 = vshrl.u32 %v1569, 7
        %v1571 = vsub.s32 0, %v1570
        %v1572 = vrot.slane %v1512, %v1571
        %v1573 = vlaneseq
        %v1574 = vshrl.u32 %v1573, 7
        %v1575 = vsub.s32 0, %v1574
        %v1576 = vrot.slane %v1514, %v1575
        %v1577 = vlaneseq
        %v1578 = vshrl.u32 %v1577, 7
        %v1579 = vsub.s32 0, %v1578
        %v1580 = vrot.slane %v1516, %v1579
        %1581 = vrot.lane.b32.xlu0 %v1520, 112
        %v1582 = vpop.permute.xlu0 %1581
        %1583 = vrot.lane.b32.xlu0 %v1524, 112
        %v1584 = vpop.permute.xlu0 %1583
        %1585 = vrot.lane.b32.xlu0 %v1528, 112
        %v1586 = vpop.permute.xlu0 %1585
        %1587 = vrot.lane.b32.xlu0 %v1532, 112
        %v1588 = vpop.permute.xlu0 %1587
        %1589 = vrot.lane.b32.xlu0 %v1536, 112
        %v1590 = vpop.permute.xlu0 %1589
        %1591 = vrot.lane.b32.xlu0 %v1540, 112
        %v1592 = vpop.permute.xlu0 %1591
        %1593 = vrot.lane.b32.xlu0 %v1544, 112
        %v1594 = vpop.permute.xlu0 %1593
        %1595 = vrot.lane.b32.xlu0 %v1548, 112
        %v1596 = vpop.permute.xlu0 %1595
        %1597 = vrot.lane.b32.xlu0 %v1552, 112
        %v1598 = vpop.permute.xlu0 %1597
        %1599 = vrot.lane.b32.xlu0 %v1556, 112
        %v1600 = vpop.permute.xlu0 %1599
        %1601 = vrot.lane.b32.xlu0 %v1560, 112
        %v1602 = vpop.permute.xlu0 %1601
        %1603 = vrot.lane.b32.xlu0 %v1564, 112
        %v1604 = vpop.permute.xlu0 %1603
        %1605 = vrot.lane.b32.xlu0 %v1568, 112
        %v1606 = vpop.permute.xlu0 %1605
        %1607 = vrot.lane.b32.xlu0 %v1572, 112
        %v1608 = vpop.permute.xlu0 %1607
        %1609 = vrot.lane.b32.xlu0 %v1576, 112
        %v1610 = vpop.permute.xlu0 %1609
        %1611 = vrot.lane.b32.xlu0 %v1580, 112
        %v1612 = vpop.permute.xlu0 %1611
        %1629 = vst.msk [vmem:[#allocation2 + $0x3] sm:$0x1] %vm1094, %v1582
        %1630 = vst.msk [vmem:[#allocation2 + $0x13] sm:$0x1] %vm1094, %v1584
        %1631 = vst.msk [vmem:[#allocation2 + $0x23] sm:$0x1] %vm1094, %v1586
        %1632 = vst.msk [vmem:[#allocation2 + $0x33] sm:$0x1] %vm1094, %v1588
        %1633 = vst.msk [vmem:[#allocation2 + $0x43] sm:$0x1] %vm1094, %v1590
        %1634 = vst.msk [vmem:[#allocation2 + $0x53] sm:$0x1] %vm1094, %v1592
        %1635 = vst.msk [vmem:[#allocation2 + $0x63] sm:$0x1] %vm1094, %v1594
        %1636 = vst.msk [vmem:[#allocation2 + $0x73] sm:$0x1] %vm1094, %v1596
        %1637 = vst.msk [vmem:[#allocation2 + $0x83] sm:$0x1] %vm1094, %v1598
        %1638 = vst.msk [vmem:[#allocation2 + $0x93] sm:$0x1] %vm1094, %v1600
        %1639 = vst.msk [vmem:[#allocation2 + $0xa3] sm:$0x1] %vm1094, %v1602
        %1640 = vst.msk [vmem:[#allocation2 + $0xb3] sm:$0x1] %vm1094, %v1604
        %1641 = vst.msk [vmem:[#allocation2 + $0xc3] sm:$0x1] %vm1094, %v1606
        %1642 = vst.msk [vmem:[#allocation2 + $0xd3] sm:$0x1] %vm1094, %v1608
        %1643 = vst.msk [vmem:[#allocation2 + $0xe3] sm:$0x1] %vm1094, %v1610
        %1644 = vst.msk [vmem:[#allocation2 + $0xf3] sm:$0x1] %vm1094, %v1612
        %v1645 = vmul.f32 %v970, 0.13333334
        %v1646 = vmul.f32 %v975, 0.13333334
        %v1647 = vmul.f32 %v970, 0.8666667
        %v1648 = vmul.f32 %v975, 0.8666667
        %1651 = vrot.lane.b32.xlu0 %v1647, 112
        %v1652 = vpop.permute.xlu0 %1651
        %1653 = vrot.lane.b32.xlu0 %v1648, 112
        %v1654 = vpop.permute.xlu0 %1653
        %v1657 = vadd.f32 %v1645, %v1652
        %v1658 = vadd.f32 %v1646, %v1654
        %v1661 = vcombine.high %v1657, %v1657
        %v1663 = vunpack.c.l.s4 1966171168
        %v1664 = vunpack.c.0.s8 %v1663
        %v1665 = vlaneseq
        %v1666 = vshrl.u32 %v1665, 7
        %v1667 = vsub.s32 %v1664, %v1666
        %v1668 = vrot.slane %v1657, %v1667
        %v1670 = vunpack.c.l.s4 1966171168
        %v1671 = vunpack.c.0.s8 %v1670
        %v1672 = vlaneseq
        %v1673 = vshrl.u32 %v1672, 7
        %v1674 = vsub.s32 %v1671, %v1673
        %v1675 = vrot.slane %v1661, %v1674
        %v1676 = vcombine.high %v1668, %v1668
        %v1677 = vcombine.high %v1675, %v1675
        %v1679 = vunpack.c.l.s4 1966171168
        %v1680 = vunpack.c.0.s8 %v1679
        %v1681 = vlaneseq
        %v1682 = vshrl.u32 %v1681, 7
        %v1683 = vsub.s32 %v1680, %v1682
        %v1684 = vrot.slane %v1668, %v1683
        %v1686 = vunpack.c.l.s4 1966171168
        %v1687 = vunpack.c.0.s8 %v1686
        %v1688 = vlaneseq
        %v1689 = vshrl.u32 %v1688, 7
        %v1690 = vsub.s32 %v1687, %v1689
        %v1691 = vrot.slane %v1675, %v1690
        %v1693 = vunpack.c.l.s4 1966171168
        %v1694 = vunpack.c.0.s8 %v1693
        %v1695 = vlaneseq
        %v1696 = vshrl.u32 %v1695, 7
        %v1697 = vsub.s32 %v1694, %v1696
        %v1698 = vrot.slane %v1676, %v1697
        %v1700 = vunpack.c.l.s4 1966171168
        %v1701 = vunpack.c.0.s8 %v1700
        %v1702 = vlaneseq
        %v1703 = vshrl.u32 %v1702, 7
        %v1704 = vsub.s32 %v1701, %v1703
        %v1705 = vrot.slane %v1677, %v1704
        %v1706 = vcombine.high %v1684, %v1684
        %v1707 = vcombine.high %v1691, %v1691
        %v1708 = vcombine.high %v1698, %v1698
        %v1709 = vcombine.high %v1705, %v1705
        %v1710 = vcombine.high %v1658, %v1658
        %v1712 = vunpack.c.l.s4 1966171168
        %v1713 = vunpack.c.0.s8 %v1712
        %v1714 = vlaneseq
        %v1715 = vshrl.u32 %v1714, 7
        %v1716 = vsub.s32 %v1713, %v1715
        %v1717 = vrot.slane %v1658, %v1716
        %v1719 = vunpack.c.l.s4 1966171168
        %v1720 = vunpack.c.0.s8 %v1719
        %v1721 = vlaneseq
        %v1722 = vshrl.u32 %v1721, 7
        %v1723 = vsub.s32 %v1720, %v1722
        %v1724 = vrot.slane %v1710, %v1723
        %v1725 = vcombine.high %v1717, %v1717
        %v1726 = vcombine.high %v1724, %v1724
        %v1728 = vunpack.c.l.s4 1966171168
        %v1729 = vunpack.c.0.s8 %v1728
        %v1730 = vlaneseq
        %v1731 = vshrl.u32 %v1730, 7
        %v1732 = vsub.s32 %v1729, %v1731
        %v1733 = vrot.slane %v1717, %v1732
        %v1735 = vunpack.c.l.s4 1966171168
        %v1736 = vunpack.c.0.s8 %v1735
        %v1737 = vlaneseq
        %v1738 = vshrl.u32 %v1737, 7
        %v1739 = vsub.s32 %v1736, %v1738
        %v1740 = vrot.slane %v1724, %v1739
        %v1742 = vunpack.c.l.s4 1966171168
        %v1743 = vunpack.c.0.s8 %v1742
        %v1744 = vlaneseq
        %v1745 = vshrl.u32 %v1744, 7
        %v1746 = vsub.s32 %v1743, %v1745
        %v1747 = vrot.slane %v1725, %v1746
        %v1749 = vunpack.c.l.s4 1966171168
        %v1750 = vunpack.c.0.s8 %v1749
        %v1751 = vlaneseq
        %v1752 = vshrl.u32 %v1751, 7
        %v1753 = vsub.s32 %v1750, %v1752
        %v1754 = vrot.slane %v1726, %v1753
        %v1755 = vcombine.high %v1733, %v1733
        %v1756 = vcombine.high %v1740, %v1740
        %v1757 = vcombine.high %v1747, %v1747
        %v1758 = vcombine.high %v1754, %v1754
        %v1759 = vlaneseq
        %v1760 = vshrl.u32 %v1759, 7
        %v1761 = vsub.s32 0, %v1760
        %v1762 = vrot.slane %v1684, %v1761
        %v1763 = vlaneseq
        %v1764 = vshrl.u32 %v1763, 7
        %v1765 = vsub.s32 0, %v1764
        %v1766 = vrot.slane %v1698, %v1765
        %v1767 = vlaneseq
        %v1768 = vshrl.u32 %v1767, 7
        %v1769 = vsub.s32 0, %v1768
        %v1770 = vrot.slane %v1706, %v1769
        %v1771 = vlaneseq
        %v1772 = vshrl.u32 %v1771, 7
        %v1773 = vsub.s32 0, %v1772
        %v1774 = vrot.slane %v1708, %v1773
        %v1775 = vlaneseq
        %v1776 = vshrl.u32 %v1775, 7
        %v1777 = vsub.s32 0, %v1776
        %v1778 = vrot.slane %v1691, %v1777
        %v1779 = vlaneseq
        %v1780 = vshrl.u32 %v1779, 7
        %v1781 = vsub.s32 0, %v1780
        %v1782 = vrot.slane %v1705, %v1781
        %v1783 = vlaneseq
        %v1784 = vshrl.u32 %v1783, 7
        %v1785 = vsub.s32 0, %v1784
        %v1786 = vrot.slane %v1707, %v1785
        %v1787 = vlaneseq
        %v1788 = vshrl.u32 %v1787, 7
        %v1789 = vsub.s32 0, %v1788
        %v1790 = vrot.slane %v1709, %v1789
        %v1791 = vlaneseq
        %v1792 = vshrl.u32 %v1791, 7
        %v1793 = vsub.s32 0, %v1792
        %v1794 = vrot.slane %v1733, %v1793
        %v1795 = vlaneseq
        %v1796 = vshrl.u32 %v1795, 7
        %v1797 = vsub.s32 0, %v1796
        %v1798 = vrot.slane %v1747, %v1797
        %v1799 = vlaneseq
        %v1800 = vshrl.u32 %v1799, 7
        %v1801 = vsub.s32 0, %v1800
        %v1802 = vrot.slane %v1755, %v1801
        %v1803 = vlaneseq
        %v1804 = vshrl.u32 %v1803, 7
        %v1805 = vsub.s32 0, %v1804
        %v1806 = vrot.slane %v1757, %v1805
        %v1807 = vlaneseq
        %v1808 = vshrl.u32 %v1807, 7
        %v1809 = vsub.s32 0, %v1808
        %v1810 = vrot.slane %v1740, %v1809
        %v1811 = vlaneseq
        %v1812 = vshrl.u32 %v1811, 7
        %v1813 = vsub.s32 0, %v1812
        %v1814 = vrot.slane %v1754, %v1813
        %v1815 = vlaneseq
        %v1816 = vshrl.u32 %v1815, 7
        %v1817 = vsub.s32 0, %v1816
        %v1818 = vrot.slane %v1756, %v1817
        %v1819 = vlaneseq
        %v1820 = vshrl.u32 %v1819, 7
        %v1821 = vsub.s32 0, %v1820
        %v1822 = vrot.slane %v1758, %v1821
        %1823 = vrot.lane.b32.xlu0 %v1762, 112
        %v1824 = vpop.permute.xlu0 %1823
        %1825 = vrot.lane.b32.xlu0 %v1766, 112
        %v1826 = vpop.permute.xlu0 %1825
        %1827 = vrot.lane.b32.xlu0 %v1770, 112
        %v1828 = vpop.permute.xlu0 %1827
        %1829 = vrot.lane.b32.xlu0 %v1774, 112
        %v1830 = vpop.permute.xlu0 %1829
        %1831 = vrot.lane.b32.xlu0 %v1778, 112
        %v1832 = vpop.permute.xlu0 %1831
        %1833 = vrot.lane.b32.xlu0 %v1782, 112
        %v1834 = vpop.permute.xlu0 %1833
        %1835 = vrot.lane.b32.xlu0 %v1786, 112
        %v1836 = vpop.permute.xlu0 %1835
        %1837 = vrot.lane.b32.xlu0 %v1790, 112
        %v1838 = vpop.permute.xlu0 %1837
        %1839 = vrot.lane.b32.xlu0 %v1794, 112
        %v1840 = vpop.permute.xlu0 %1839
        %1841 = vrot.lane.b32.xlu0 %v1798, 112
        %v1842 = vpop.permute.xlu0 %1841
        %1843 = vrot.lane.b32.xlu0 %v1802, 112
        %v1844 = vpop.permute.xlu0 %1843
        %1845 = vrot.lane.b32.xlu0 %v1806, 112
        %v1846 = vpop.permute.xlu0 %1845
        %1847 = vrot.lane.b32.xlu0 %v1810, 112
        %v1848 = vpop.permute.xlu0 %1847
        %1849 = vrot.lane.b32.xlu0 %v1814, 112
        %v1850 = vpop.permute.xlu0 %1849
        %1851 = vrot.lane.b32.xlu0 %v1818, 112
        %v1852 = vpop.permute.xlu0 %1851
        %1853 = vrot.lane.b32.xlu0 %v1822, 112
        %v1854 = vpop.permute.xlu0 %1853
        %1871 = vst.msk [vmem:[#allocation2 + $0x4] sm:$0x1] %vm1094, %v1824
        %1872 = vst.msk [vmem:[#allocation2 + $0x14] sm:$0x1] %vm1094, %v1826
        %1873 = vst.msk [vmem:[#allocation2 + $0x24] sm:$0x1] %vm1094, %v1828
        %1874 = vst.msk [vmem:[#allocation2 + $0x34] sm:$0x1] %vm1094, %v1830
        %1875 = vst.msk [vmem:[#allocation2 + $0x44] sm:$0x1] %vm1094, %v1832
        %1876 = vst.msk [vmem:[#allocation2 + $0x54] sm:$0x1] %vm1094, %v1834
        %1877 = vst.msk [vmem:[#allocation2 + $0x64] sm:$0x1] %vm1094, %v1836
        %1878 = vst.msk [vmem:[#allocation2 + $0x74] sm:$0x1] %vm1094, %v1838
        %1879 = vst.msk [vmem:[#allocation2 + $0x84] sm:$0x1] %vm1094, %v1840
        %1880 = vst.msk [vmem:[#allocation2 + $0x94] sm:$0x1] %vm1094, %v1842
        %1881 = vst.msk [vmem:[#allocation2 + $0xa4] sm:$0x1] %vm1094, %v1844
        %1882 = vst.msk [vmem:[#allocation2 + $0xb4] sm:$0x1] %vm1094, %v1846
        %1883 = vst.msk [vmem:[#allocation2 + $0xc4] sm:$0x1] %vm1094, %v1848
        %1884 = vst.msk [vmem:[#allocation2 + $0xd4] sm:$0x1] %vm1094, %v1850
        %1885 = vst.msk [vmem:[#allocation2 + $0xe4] sm:$0x1] %vm1094, %v1852
        %1886 = vst.msk [vmem:[#allocation2 + $0xf4] sm:$0x1] %vm1094, %v1854
        %v1887 = vmul.f32 %v970, 0.6666667
        %v1888 = vmul.f32 %v975, 0.6666667
        %v1889 = vmul.f32 %v970, 0.33333334
        %v1890 = vmul.f32 %v975, 0.33333334
        %1893 = vrot.lane.b32.xlu0 %v1889, 112
        %v1894 = vpop.permute.xlu0 %1893
        %1895 = vrot.lane.b32.xlu0 %v1890, 112
        %v1896 = vpop.permute.xlu0 %1895
        %v1899 = vadd.f32 %v1887, %v1894
        %v1900 = vadd.f32 %v1888, %v1896
        %v1903 = vcombine.high %v1899, %v1899
        %v1905 = vunpack.c.l.s4 1966171168
        %v1906 = vunpack.c.0.s8 %v1905
        %v1907 = vlaneseq
        %v1908 = vshrl.u32 %v1907, 7
        %v1909 = vsub.s32 %v1906, %v1908
        %v1910 = vrot.slane %v1899, %v1909
        %v1912 = vunpack.c.l.s4 1966171168
        %v1913 = vunpack.c.0.s8 %v1912
        %v1914 = vlaneseq
        %v1915 = vshrl.u32 %v1914, 7
        %v1916 = vsub.s32 %v1913, %v1915
        %v1917 = vrot.slane %v1903, %v1916
        %v1918 = vcombine.high %v1910, %v1910
        %v1919 = vcombine.high %v1917, %v1917
        %v1921 = vunpack.c.l.s4 1966171168
        %v1922 = vunpack.c.0.s8 %v1921
        %v1923 = vlaneseq
        %v1924 = vshrl.u32 %v1923, 7
        %v1925 = vsub.s32 %v1922, %v1924
        %v1926 = vrot.slane %v1910, %v1925
        %v1928 = vunpack.c.l.s4 1966171168
        %v1929 = vunpack.c.0.s8 %v1928
        %v1930 = vlaneseq
        %v1931 = vshrl.u32 %v1930, 7
        %v1932 = vsub.s32 %v1929, %v1931
        %v1933 = vrot.slane %v1917, %v1932
        %v1935 = vunpack.c.l.s4 1966171168
        %v1936 = vunpack.c.0.s8 %v1935
        %v1937 = vlaneseq
        %v1938 = vshrl.u32 %v1937, 7
        %v1939 = vsub.s32 %v1936, %v1938
        %v1940 = vrot.slane %v1918, %v1939
        %v1942 = vunpack.c.l.s4 1966171168
        %v1943 = vunpack.c.0.s8 %v1942
        %v1944 = vlaneseq
        %v1945 = vshrl.u32 %v1944, 7
        %v1946 = vsub.s32 %v1943, %v1945
        %v1947 = vrot.slane %v1919, %v1946
        %v1948 = vcombine.high %v1926, %v1926
        %v1949 = vcombine.high %v1933, %v1933
        %v1950 = vcombine.high %v1940, %v1940
        %v1951 = vcombine.high %v1947, %v1947
        %v1952 = vcombine.high %v1900, %v1900
        %v1954 = vunpack.c.l.s4 1966171168
        %v1955 = vunpack.c.0.s8 %v1954
        %v1956 = vlaneseq
        %v1957 = vshrl.u32 %v1956, 7
        %v1958 = vsub.s32 %v1955, %v1957
        %v1959 = vrot.slane %v1900, %v1958
        %v1961 = vunpack.c.l.s4 1966171168
        %v1962 = vunpack.c.0.s8 %v1961
        %v1963 = vlaneseq
        %v1964 = vshrl.u32 %v1963, 7
        %v1965 = vsub.s32 %v1962, %v1964
        %v1966 = vrot.slane %v1952, %v1965
        %v1967 = vcombine.high %v1959, %v1959
        %v1968 = vcombine.high %v1966, %v1966
        %v1970 = vunpack.c.l.s4 1966171168
        %v1971 = vunpack.c.0.s8 %v1970
        %v1972 = vlaneseq
        %v1973 = vshrl.u32 %v1972, 7
        %v1974 = vsub.s32 %v1971, %v1973
        %v1975 = vrot.slane %v1959, %v1974
        %v1977 = vunpack.c.l.s4 1966171168
        %v1978 = vunpack.c.0.s8 %v1977
        %v1979 = vlaneseq
        %v1980 = vshrl.u32 %v1979, 7
        %v1981 = vsub.s32 %v1978, %v1980
        %v1982 = vrot.slane %v1966, %v1981
        %v1984 = vunpack.c.l.s4 1966171168
        %v1985 = vunpack.c.0.s8 %v1984
        %v1986 = vlaneseq
        %v1987 = vshrl.u32 %v1986, 7
        %v1988 = vsub.s32 %v1985, %v1987
        %v1989 = vrot.slane %v1967, %v1988
        %v1991 = vunpack.c.l.s4 1966171168
        %v1992 = vunpack.c.0.s8 %v1991
        %v1993 = vlaneseq
        %v1994 = vshrl.u32 %v1993, 7
        %v1995 = vsub.s32 %v1992, %v1994
        %v1996 = vrot.slane %v1968, %v1995
        %v1997 = vcombine.high %v1975, %v1975
        %v1998 = vcombine.high %v1982, %v1982
        %v1999 = vcombine.high %v1989, %v1989
        %v2000 = vcombine.high %v1996, %v1996
        %v2001 = vlaneseq
        %v2002 = vshrl.u32 %v2001, 7
        %v2003 = vsub.s32 0, %v2002
        %v2004 = vrot.slane %v1926, %v2003
        %v2005 = vlaneseq
        %v2006 = vshrl.u32 %v2005, 7
        %v2007 = vsub.s32 0, %v2006
        %v2008 = vrot.slane %v1940, %v2007
        %v2009 = vlaneseq
        %v2010 = vshrl.u32 %v2009, 7
        %v2011 = vsub.s32 0, %v2010
        %v2012 = vrot.slane %v1948, %v2011
        %v2013 = vlaneseq
        %v2014 = vshrl.u32 %v2013, 7
        %v2015 = vsub.s32 0, %v2014
        %v2016 = vrot.slane %v1950, %v2015
        %v2017 = vlaneseq
        %v2018 = vshrl.u32 %v2017, 7
        %v2019 = vsub.s32 0, %v2018
        %v2020 = vrot.slane %v1933, %v2019
        %v2021 = vlaneseq
        %v2022 = vshrl.u32 %v2021, 7
        %v2023 = vsub.s32 0, %v2022
        %v2024 = vrot.slane %v1947, %v2023
        %v2025 = vlaneseq
        %v2026 = vshrl.u32 %v2025, 7
        %v2027 = vsub.s32 0, %v2026
        %v2028 = vrot.slane %v1949, %v2027
        %v2029 = vlaneseq
        %v2030 = vshrl.u32 %v2029, 7
        %v2031 = vsub.s32 0, %v2030
        %v2032 = vrot.slane %v1951, %v2031
        %v2033 = vlaneseq
        %v2034 = vshrl.u32 %v2033, 7
        %v2035 = vsub.s32 0, %v2034
        %v2036 = vrot.slane %v1975, %v2035
        %v2037 = vlaneseq
        %v2038 = vshrl.u32 %v2037, 7
        %v2039 = vsub.s32 0, %v2038
        %v2040 = vrot.slane %v1989, %v2039
        %v2041 = vlaneseq
        %v2042 = vshrl.u32 %v2041, 7
        %v2043 = vsub.s32 0, %v2042
        %v2044 = vrot.slane %v1997, %v2043
        %v2045 = vlaneseq
        %v2046 = vshrl.u32 %v2045, 7
        %v2047 = vsub.s32 0, %v2046
        %v2048 = vrot.slane %v1999, %v2047
        %v2049 = vlaneseq
        %v2050 = vshrl.u32 %v2049, 7
        %v2051 = vsub.s32 0, %v2050
        %v2052 = vrot.slane %v1982, %v2051
        %v2053 = vlaneseq
        %v2054 = vshrl.u32 %v2053, 7
        %v2055 = vsub.s32 0, %v2054
        %v2056 = vrot.slane %v1996, %v2055
        %v2057 = vlaneseq
        %v2058 = vshrl.u32 %v2057, 7
        %v2059 = vsub.s32 0, %v2058
        %v2060 = vrot.slane %v1998, %v2059
        %v2061 = vlaneseq
        %v2062 = vshrl.u32 %v2061, 7
        %v2063 = vsub.s32 0, %v2062
        %v2064 = vrot.slane %v2000, %v2063
        %2065 = vrot.lane.b32.xlu0 %v2004, 96
        %v2066 = vpop.permute.xlu0 %2065
        %2067 = vrot.lane.b32.xlu0 %v2008, 96
        %v2068 = vpop.permute.xlu0 %2067
        %2069 = vrot.lane.b32.xlu0 %v2012, 96
        %v2070 = vpop.permute.xlu0 %2069
        %2071 = vrot.lane.b32.xlu0 %v2016, 96
        %v2072 = vpop.permute.xlu0 %2071
        %2073 = vrot.lane.b32.xlu0 %v2020, 96
        %v2074 = vpop.permute.xlu0 %2073
        %2075 = vrot.lane.b32.xlu0 %v2024, 96
        %v2076 = vpop.permute.xlu0 %2075
        %2077 = vrot.lane.b32.xlu0 %v2028, 96
        %v2078 = vpop.permute.xlu0 %2077
        %2079 = vrot.lane.b32.xlu0 %v2032, 96
        %v2080 = vpop.permute.xlu0 %2079
        %2081 = vrot.lane.b32.xlu0 %v2036, 96
        %v2082 = vpop.permute.xlu0 %2081
        %2083 = vrot.lane.b32.xlu0 %v2040, 96
        %v2084 = vpop.permute.xlu0 %2083
        %2085 = vrot.lane.b32.xlu0 %v2044, 96
        %v2086 = vpop.permute.xlu0 %2085
        %2087 = vrot.lane.b32.xlu0 %v2048, 96
        %v2088 = vpop.permute.xlu0 %2087
        %2089 = vrot.lane.b32.xlu0 %v2052, 96
        %v2090 = vpop.permute.xlu0 %2089
        %2091 = vrot.lane.b32.xlu0 %v2056, 96
        %v2092 = vpop.permute.xlu0 %2091
        %2093 = vrot.lane.b32.xlu0 %v2060, 96
        %v2094 = vpop.permute.xlu0 %2093
        %2095 = vrot.lane.b32.xlu0 %v2064, 96
        %v2096 = vpop.permute.xlu0 %2095
        %2113 = vst.msk [vmem:[#allocation2 + $0x5] sm:$0x1] %vm1094, %v2066
        %2114 = vst.msk [vmem:[#allocation2 + $0x15] sm:$0x1] %vm1094, %v2068
        %2115 = vst.msk [vmem:[#allocation2 + $0x25] sm:$0x1] %vm1094, %v2070
        %2116 = vst.msk [vmem:[#allocation2 + $0x35] sm:$0x1] %vm1094, %v2072
        %2117 = vst.msk [vmem:[#allocation2 + $0x45] sm:$0x1] %vm1094, %v2074
        %2118 = vst.msk [vmem:[#allocation2 + $0x55] sm:$0x1] %vm1094, %v2076
        %2119 = vst.msk [vmem:[#allocation2 + $0x65] sm:$0x1] %vm1094, %v2078
        %2120 = vst.msk [vmem:[#allocation2 + $0x75] sm:$0x1] %vm1094, %v2080
        %2121 = vst.msk [vmem:[#allocation2 + $0x85] sm:$0x1] %vm1094, %v2082
        %2122 = vst.msk [vmem:[#allocation2 + $0x95] sm:$0x1] %vm1094, %v2084
        %2123 = vst.msk [vmem:[#allocation2 + $0xa5] sm:$0x1] %vm1094, %v2086
        %2124 = vst.msk [vmem:[#allocation2 + $0xb5] sm:$0x1] %vm1094, %v2088
        %2125 = vst.msk [vmem:[#allocation2 + $0xc5] sm:$0x1] %vm1094, %v2090
        %2126 = vst.msk [vmem:[#allocation2 + $0xd5] sm:$0x1] %vm1094, %v2092
        %2127 = vst.msk [vmem:[#allocation2 + $0xe5] sm:$0x1] %vm1094, %v2094
        %2128 = vst.msk [vmem:[#allocation2 + $0xf5] sm:$0x1] %vm1094, %v2096
        %v2129 = vmul.f32 %v970, 0.2
        %v2130 = vmul.f32 %v975, 0.2
        %v2131 = vmul.f32 %v970, 0.8
        %v2132 = vmul.f32 %v975, 0.8
        %2135 = vrot.lane.b32.xlu0 %v2131, 112
        %v2136 = vpop.permute.xlu0 %2135
        %2137 = vrot.lane.b32.xlu0 %v2132, 112
        %v2138 = vpop.permute.xlu0 %2137
        %v2141 = vadd.f32 %v2129, %v2136
        %v2142 = vadd.f32 %v2130, %v2138
        %v2145 = vcombine.high %v2141, %v2141
        %v2147 = vunpack.c.l.s4 1966171168
        %v2148 = vunpack.c.0.s8 %v2147
        %v2149 = vlaneseq
        %v2150 = vshrl.u32 %v2149, 7
        %v2151 = vsub.s32 %v2148, %v2150
        %v2152 = vrot.slane %v2141, %v2151
        %v2154 = vunpack.c.l.s4 1966171168
        %v2155 = vunpack.c.0.s8 %v2154
        %v2156 = vlaneseq
        %v2157 = vshrl.u32 %v2156, 7
        %v2158 = vsub.s32 %v2155, %v2157
        %v2159 = vrot.slane %v2145, %v2158
        %v2160 = vcombine.high %v2152, %v2152
        %v2161 = vcombine.high %v2159, %v2159
        %v2163 = vunpack.c.l.s4 1966171168
        %v2164 = vunpack.c.0.s8 %v2163
        %v2165 = vlaneseq
        %v2166 = vshrl.u32 %v2165, 7
        %v2167 = vsub.s32 %v2164, %v2166
        %v2168 = vrot.slane %v2152, %v2167
        %v2170 = vunpack.c.l.s4 1966171168
        %v2171 = vunpack.c.0.s8 %v2170
        %v2172 = vlaneseq
        %v2173 = vshrl.u32 %v2172, 7
        %v2174 = vsub.s32 %v2171, %v2173
        %v2175 = vrot.slane %v2159, %v2174
        %v2177 = vunpack.c.l.s4 1966171168
        %v2178 = vunpack.c.0.s8 %v2177
        %v2179 = vlaneseq
        %v2180 = vshrl.u32 %v2179, 7
        %v2181 = vsub.s32 %v2178, %v2180
        %v2182 = vrot.slane %v2160, %v2181
        %v2184 = vunpack.c.l.s4 1966171168
        %v2185 = vunpack.c.0.s8 %v2184
        %v2186 = vlaneseq
        %v2187 = vshrl.u32 %v2186, 7
        %v2188 = vsub.s32 %v2185, %v2187
        %v2189 = vrot.slane %v2161, %v2188
        %v2190 = vcombine.high %v2168, %v2168
        %v2191 = vcombine.high %v2175, %v2175
        %v2192 = vcombine.high %v2182, %v2182
        %v2193 = vcombine.high %v2189, %v2189
        %v2194 = vcombine.high %v2142, %v2142
        %v2196 = vunpack.c.l.s4 1966171168
        %v2197 = vunpack.c.0.s8 %v2196
        %v2198 = vlaneseq
        %v2199 = vshrl.u32 %v2198, 7
        %v2200 = vsub.s32 %v2197, %v2199
        %v2201 = vrot.slane %v2142, %v2200
        %v2203 = vunpack.c.l.s4 1966171168
        %v2204 = vunpack.c.0.s8 %v2203
        %v2205 = vlaneseq
        %v2206 = vshrl.u32 %v2205, 7
        %v2207 = vsub.s32 %v2204, %v2206
        %v2208 = vrot.slane %v2194, %v2207
        %v2209 = vcombine.high %v2201, %v2201
        %v2210 = vcombine.high %v2208, %v2208
        %v2212 = vunpack.c.l.s4 1966171168
        %v2213 = vunpack.c.0.s8 %v2212
        %v2214 = vlaneseq
        %v2215 = vshrl.u32 %v2214, 7
        %v2216 = vsub.s32 %v2213, %v2215
        %v2217 = vrot.slane %v2201, %v2216
        %v2219 = vunpack.c.l.s4 1966171168
        %v2220 = vunpack.c.0.s8 %v2219
        %v2221 = vlaneseq
        %v2222 = vshrl.u32 %v2221, 7
        %v2223 = vsub.s32 %v2220, %v2222
        %v2224 = vrot.slane %v2208, %v2223
        %v2226 = vunpack.c.l.s4 1966171168
        %v2227 = vunpack.c.0.s8 %v2226
        %v2228 = vlaneseq
        %v2229 = vshrl.u32 %v2228, 7
        %v2230 = vsub.s32 %v2227, %v2229
        %v2231 = vrot.slane %v2209, %v2230
        %v2233 = vunpack.c.l.s4 1966171168
        %v2234 = vunpack.c.0.s8 %v2233
        %v2235 = vlaneseq
        %v2236 = vshrl.u32 %v2235, 7
        %v2237 = vsub.s32 %v2234, %v2236
        %v2238 = vrot.slane %v2210, %v2237
        %v2239 = vcombine.high %v2217, %v2217
        %v2240 = vcombine.high %v2224, %v2224
        %v2241 = vcombine.high %v2231, %v2231
        %v2242 = vcombine.high %v2238, %v2238
        %v2243 = vlaneseq
        %v2244 = vshrl.u32 %v2243, 7
        %v2245 = vsub.s32 0, %v2244
        %v2246 = vrot.slane %v2168, %v2245
        %v2247 = vlaneseq
        %v2248 = vshrl.u32 %v2247, 7
        %v2249 = vsub.s32 0, %v2248
        %v2250 = vrot.slane %v2182, %v2249
        %v2251 = vlaneseq
        %v2252 = vshrl.u32 %v2251, 7
        %v2253 = vsub.s32 0, %v2252
        %v2254 = vrot.slane %v2190, %v2253
        %v2255 = vlaneseq
        %v2256 = vshrl.u32 %v2255, 7
        %v2257 = vsub.s32 0, %v2256
        %v2258 = vrot.slane %v2192, %v2257
        %v2259 = vlaneseq
        %v2260 = vshrl.u32 %v2259, 7
        %v2261 = vsub.s32 0, %v2260
        %v2262 = vrot.slane %v2175, %v2261
        %v2263 = vlaneseq
        %v2264 = vshrl.u32 %v2263, 7
        %v2265 = vsub.s32 0, %v2264
        %v2266 = vrot.slane %v2189, %v2265
        %v2267 = vlaneseq
        %v2268 = vshrl.u32 %v2267, 7
        %v2269 = vsub.s32 0, %v2268
        %v2270 = vrot.slane %v2191, %v2269
        %v2271 = vlaneseq
        %v2272 = vshrl.u32 %v2271, 7
        %v2273 = vsub.s32 0, %v2272
        %v2274 = vrot.slane %v2193, %v2273
        %v2275 = vlaneseq
        %v2276 = vshrl.u32 %v2275, 7
        %v2277 = vsub.s32 0, %v2276
        %v2278 = vrot.slane %v2217, %v2277
        %v2279 = vlaneseq
        %v2280 = vshrl.u32 %v2279, 7
        %v2281 = vsub.s32 0, %v2280
        %v2282 = vrot.slane %v2231, %v2281
        %v2283 = vlaneseq
        %v2284 = vshrl.u32 %v2283, 7
        %v2285 = vsub.s32 0, %v2284
        %v2286 = vrot.slane %v2239, %v2285
        %v2287 = vlaneseq
        %v2288 = vshrl.u32 %v2287, 7
        %v2289 = vsub.s32 0, %v2288
        %v2290 = vrot.slane %v2241, %v2289
        %v2291 = vlaneseq
        %v2292 = vshrl.u32 %v2291, 7
        %v2293 = vsub.s32 0, %v2292
        %v2294 = vrot.slane %v2224, %v2293
        %v2295 = vlaneseq
        %v2296 = vshrl.u32 %v2295, 7
        %v2297 = vsub.s32 0, %v2296
        %v2298 = vrot.slane %v2238, %v2297
        %v2299 = vlaneseq
        %v2300 = vshrl.u32 %v2299, 7
        %v2301 = vsub.s32 0, %v2300
        %v2302 = vrot.slane %v2240, %v2301
        %v2303 = vlaneseq
        %v2304 = vshrl.u32 %v2303, 7
        %v2305 = vsub.s32 0, %v2304
        %v2306 = vrot.slane %v2242, %v2305
        %2307 = vrot.lane.b32.xlu0 %v2246, 96
        %v2308 = vpop.permute.xlu0 %2307
        %2309 = vrot.lane.b32.xlu0 %v2250, 96
        %v2310 = vpop.permute.xlu0 %2309
        %2311 = vrot.lane.b32.xlu0 %v2254, 96
        %v2312 = vpop.permute.xlu0 %2311
        %2313 = vrot.lane.b32.xlu0 %v2258, 96
        %v2314 = vpop.permute.xlu0 %2313
        %2315 = vrot.lane.b32.xlu0 %v2262, 96
        %v2316 = vpop.permute.xlu0 %2315
        %2317 = vrot.lane.b32.xlu0 %v2266, 96
        %v2318 = vpop.permute.xlu0 %2317
        %2319 = vrot.lane.b32.xlu0 %v2270, 96
        %v2320 = vpop.permute.xlu0 %2319
        %2321 = vrot.lane.b32.xlu0 %v2274, 96
        %v2322 = vpop.permute.xlu0 %2321
        %2323 = vrot.lane.b32.xlu0 %v2278, 96
        %v2324 = vpop.permute.xlu0 %2323
        %2325 = vrot.lane.b32.xlu0 %v2282, 96
        %v2326 = vpop.permute.xlu0 %2325
        %2327 = vrot.lane.b32.xlu0 %v2286, 96
        %v2328 = vpop.permute.xlu0 %2327
        %2329 = vrot.lane.b32.xlu0 %v2290, 96
        %v2330 = vpop.permute.xlu0 %2329
        %2331 = vrot.lane.b32.xlu0 %v2294, 96
        %v2332 = vpop.permute.xlu0 %2331
        %2333 = vrot.lane.b32.xlu0 %v2298, 96
        %v2334 = vpop.permute.xlu0 %2333
        %2335 = vrot.lane.b32.xlu0 %v2302, 96
        %v2336 = vpop.permute.xlu0 %2335
        %2337 = vrot.lane.b32.xlu0 %v2306, 96
        %v2338 = vpop.permute.xlu0 %2337
        %2355 = vst.msk [vmem:[#allocation2 + $0x6] sm:$0x1] %vm1094, %v2308
        %2356 = vst.msk [vmem:[#allocation2 + $0x16] sm:$0x1] %vm1094, %v2310
        %2357 = vst.msk [vmem:[#allocation2 + $0x26] sm:$0x1] %vm1094, %v2312
        %2358 = vst.msk [vmem:[#allocation2 + $0x36] sm:$0x1] %vm1094, %v2314
        %2359 = vst.msk [vmem:[#allocation2 + $0x46] sm:$0x1] %vm1094, %v2316
        %2360 = vst.msk [vmem:[#allocation2 + $0x56] sm:$0x1] %vm1094, %v2318
        %2361 = vst.msk [vmem:[#allocation2 + $0x66] sm:$0x1] %vm1094, %v2320
        %2362 = vst.msk [vmem:[#allocation2 + $0x76] sm:$0x1] %vm1094, %v2322
        %2363 = vst.msk [vmem:[#allocation2 + $0x86] sm:$0x1] %vm1094, %v2324
        %2364 = vst.msk [vmem:[#allocation2 + $0x96] sm:$0x1] %vm1094, %v2326
        %2365 = vst.msk [vmem:[#allocation2 + $0xa6] sm:$0x1] %vm1094, %v2328
        %2366 = vst.msk [vmem:[#allocation2 + $0xb6] sm:$0x1] %vm1094, %v2330
        %2367 = vst.msk [vmem:[#allocation2 + $0xc6] sm:$0x1] %vm1094, %v2332
        %2368 = vst.msk [vmem:[#allocation2 + $0xd6] sm:$0x1] %vm1094, %v2334
        %2369 = vst.msk [vmem:[#allocation2 + $0xe6] sm:$0x1] %vm1094, %v2336
        %2370 = vst.msk [vmem:[#allocation2 + $0xf6] sm:$0x1] %vm1094, %v2338
        %v2371 = vmul.f32 %v970, 0.73333335
        %v2372 = vmul.f32 %v975, 0.73333335
        %v2373 = vmul.f32 %v970, 0.26666668
        %v2374 = vmul.f32 %v975, 0.26666668
        %2377 = vrot.lane.b32.xlu0 %v2373, 112
        %v2378 = vpop.permute.xlu0 %2377
        %2379 = vrot.lane.b32.xlu0 %v2374, 112
        %v2380 = vpop.permute.xlu0 %2379
        %v2383 = vadd.f32 %v2371, %v2378
        %v2384 = vadd.f32 %v2372, %v2380
        %v2387 = vcombine.high %v2383, %v2383
        %v2389 = vunpack.c.l.s4 1966171168
        %v2390 = vunpack.c.0.s8 %v2389
        %v2391 = vlaneseq
        %v2392 = vshrl.u32 %v2391, 7
        %v2393 = vsub.s32 %v2390, %v2392
        %v2394 = vrot.slane %v2383, %v2393
        %v2396 = vunpack.c.l.s4 1966171168
        %v2397 = vunpack.c.0.s8 %v2396
        %v2398 = vlaneseq
        %v2399 = vshrl.u32 %v2398, 7
        %v2400 = vsub.s32 %v2397, %v2399
        %v2401 = vrot.slane %v2387, %v2400
        %v2402 = vcombine.high %v2394, %v2394
        %v2403 = vcombine.high %v2401, %v2401
        %v2405 = vunpack.c.l.s4 1966171168
        %v2406 = vunpack.c.0.s8 %v2405
        %v2407 = vlaneseq
        %v2408 = vshrl.u32 %v2407, 7
        %v2409 = vsub.s32 %v2406, %v2408
        %v2410 = vrot.slane %v2394, %v2409
        %v2412 = vunpack.c.l.s4 1966171168
        %v2413 = vunpack.c.0.s8 %v2412
        %v2414 = vlaneseq
        %v2415 = vshrl.u32 %v2414, 7
        %v2416 = vsub.s32 %v2413, %v2415
        %v2417 = vrot.slane %v2401, %v2416
        %v2419 = vunpack.c.l.s4 1966171168
        %v2420 = vunpack.c.0.s8 %v2419
        %v2421 = vlaneseq
        %v2422 = vshrl.u32 %v2421, 7
        %v2423 = vsub.s32 %v2420, %v2422
        %v2424 = vrot.slane %v2402, %v2423
        %v2426 = vunpack.c.l.s4 1966171168
        %v2427 = vunpack.c.0.s8 %v2426
        %v2428 = vlaneseq
        %v2429 = vshrl.u32 %v2428, 7
        %v2430 = vsub.s32 %v2427, %v2429
        %v2431 = vrot.slane %v2403, %v2430
        %v2432 = vcombine.high %v2410, %v2410
        %v2433 = vcombine.high %v2417, %v2417
        %v2434 = vcombine.high %v2424, %v2424
        %v2435 = vcombine.high %v2431, %v2431
        %v2436 = vcombine.high %v2384, %v2384
        %v2438 = vunpack.c.l.s4 1966171168
        %v2439 = vunpack.c.0.s8 %v2438
        %v2440 = vlaneseq
        %v2441 = vshrl.u32 %v2440, 7
        %v2442 = vsub.s32 %v2439, %v2441
        %v2443 = vrot.slane %v2384, %v2442
        %v2445 = vunpack.c.l.s4 1966171168
        %v2446 = vunpack.c.0.s8 %v2445
        %v2447 = vlaneseq
        %v2448 = vshrl.u32 %v2447, 7
        %v2449 = vsub.s32 %v2446, %v2448
        %v2450 = vrot.slane %v2436, %v2449
        %v2451 = vcombine.high %v2443, %v2443
        %v2452 = vcombine.high %v2450, %v2450
        %v2454 = vunpack.c.l.s4 1966171168
        %v2455 = vunpack.c.0.s8 %v2454
        %v2456 = vlaneseq
        %v2457 = vshrl.u32 %v2456, 7
        %v2458 = vsub.s32 %v2455, %v2457
        %v2459 = vrot.slane %v2443, %v2458
        %v2461 = vunpack.c.l.s4 1966171168
        %v2462 = vunpack.c.0.s8 %v2461
        %v2463 = vlaneseq
        %v2464 = vshrl.u32 %v2463, 7
        %v2465 = vsub.s32 %v2462, %v2464
        %v2466 = vrot.slane %v2450, %v2465
        %v2468 = vunpack.c.l.s4 1966171168
        %v2469 = vunpack.c.0.s8 %v2468
        %v2470 = vlaneseq
        %v2471 = vshrl.u32 %v2470, 7
        %v2472 = vsub.s32 %v2469, %v2471
        %v2473 = vrot.slane %v2451, %v2472
        %v2475 = vunpack.c.l.s4 1966171168
        %v2476 = vunpack.c.0.s8 %v2475
        %v2477 = vlaneseq
        %v2478 = vshrl.u32 %v2477, 7
        %v2479 = vsub.s32 %v2476, %v2478
        %v2480 = vrot.slane %v2452, %v2479
        %v2481 = vcombine.high %v2459, %v2459
        %v2482 = vcombine.high %v2466, %v2466
        %v2483 = vcombine.high %v2473, %v2473
        %v2484 = vcombine.high %v2480, %v2480
        %v2485 = vlaneseq
        %v2486 = vshrl.u32 %v2485, 7
        %v2487 = vsub.s32 0, %v2486
        %v2488 = vrot.slane %v2410, %v2487
        %v2489 = vlaneseq
        %v2490 = vshrl.u32 %v2489, 7
        %v2491 = vsub.s32 0, %v2490
        %v2492 = vrot.slane %v2424, %v2491
        %v2493 = vlaneseq
        %v2494 = vshrl.u32 %v2493, 7
        %v2495 = vsub.s32 0, %v2494
        %v2496 = vrot.slane %v2432, %v2495
        %v2497 = vlaneseq
        %v2498 = vshrl.u32 %v2497, 7
        %v2499 = vsub.s32 0, %v2498
        %v2500 = vrot.slane %v2434, %v2499
        %v2501 = vlaneseq
        %v2502 = vshrl.u32 %v2501, 7
        %v2503 = vsub.s32 0, %v2502
        %v2504 = vrot.slane %v2417, %v2503
        %v2505 = vlaneseq
        %v2506 = vshrl.u32 %v2505, 7
        %v2507 = vsub.s32 0, %v2506
        %v2508 = vrot.slane %v2431, %v2507
        %v2509 = vlaneseq
        %v2510 = vshrl.u32 %v2509, 7
        %v2511 = vsub.s32 0, %v2510
        %v2512 = vrot.slane %v2433, %v2511
        %v2513 = vlaneseq
        %v2514 = vshrl.u32 %v2513, 7
        %v2515 = vsub.s32 0, %v2514
        %v2516 = vrot.slane %v2435, %v2515
        %v2517 = vlaneseq
        %v2518 = vshrl.u32 %v2517, 7
        %v2519 = vsub.s32 0, %v2518
        %v2520 = vrot.slane %v2459, %v2519
        %v2521 = vlaneseq
        %v2522 = vshrl.u32 %v2521, 7
        %v2523 = vsub.s32 0, %v2522
        %v2524 = vrot.slane %v2473, %v2523
        %v2525 = vlaneseq
        %v2526 = vshrl.u32 %v2525, 7
        %v2527 = vsub.s32 0, %v2526
        %v2528 = vrot.slane %v2481, %v2527
        %v2529 = vlaneseq
        %v2530 = vshrl.u32 %v2529, 7
        %v2531 = vsub.s32 0, %v2530
        %v2532 = vrot.slane %v2483, %v2531
        %v2533 = vlaneseq
        %v2534 = vshrl.u32 %v2533, 7
        %v2535 = vsub.s32 0, %v2534
        %v2536 = vrot.slane %v2466, %v2535
        %v2537 = vlaneseq
        %v2538 = vshrl.u32 %v2537, 7
        %v2539 = vsub.s32 0, %v2538
        %v2540 = vrot.slane %v2480, %v2539
        %v2541 = vlaneseq
        %v2542 = vshrl.u32 %v2541, 7
        %v2543 = vsub.s32 0, %v2542
        %v2544 = vrot.slane %v2482, %v2543
        %v2545 = vlaneseq
        %v2546 = vshrl.u32 %v2545, 7
        %v2547 = vsub.s32 0, %v2546
        %v2548 = vrot.slane %v2484, %v2547
        %2549 = vrot.lane.b32.xlu0 %v2488, 80
        %v2550 = vpop.permute.xlu0 %2549
        %2551 = vrot.lane.b32.xlu0 %v2492, 80
        %v2552 = vpop.permute.xlu0 %2551
        %2553 = vrot.lane.b32.xlu0 %v2496, 80
        %v2554 = vpop.permute.xlu0 %2553
        %2555 = vrot.lane.b32.xlu0 %v2500, 80
        %v2556 = vpop.permute.xlu0 %2555
        %2557 = vrot.lane.b32.xlu0 %v2504, 80
        %v2558 = vpop.permute.xlu0 %2557
        %2559 = vrot.lane.b32.xlu0 %v2508, 80
        %v2560 = vpop.permute.xlu0 %2559
        %2561 = vrot.lane.b32.xlu0 %v2512, 80
        %v2562 = vpop.permute.xlu0 %2561
        %2563 = vrot.lane.b32.xlu0 %v2516, 80
        %v2564 = vpop.permute.xlu0 %2563
        %2565 = vrot.lane.b32.xlu0 %v2520, 80
        %v2566 = vpop.permute.xlu0 %2565
        %2567 = vrot.lane.b32.xlu0 %v2524, 80
        %v2568 = vpop.permute.xlu0 %2567
        %2569 = vrot.lane.b32.xlu0 %v2528, 80
        %v2570 = vpop.permute.xlu0 %2569
        %2571 = vrot.lane.b32.xlu0 %v2532, 80
        %v2572 = vpop.permute.xlu0 %2571
        %2573 = vrot.lane.b32.xlu0 %v2536, 80
        %v2574 = vpop.permute.xlu0 %2573
        %2575 = vrot.lane.b32.xlu0 %v2540, 80
        %v2576 = vpop.permute.xlu0 %2575
        %2577 = vrot.lane.b32.xlu0 %v2544, 80
        %v2578 = vpop.permute.xlu0 %2577
        %2579 = vrot.lane.b32.xlu0 %v2548, 80
        %v2580 = vpop.permute.xlu0 %2579
        %2597 = vst.msk [vmem:[#allocation2 + $0x7] sm:$0x1] %vm1094, %v2550
        %2598 = vst.msk [vmem:[#allocation2 + $0x17] sm:$0x1] %vm1094, %v2552
        %2599 = vst.msk [vmem:[#allocation2 + $0x27] sm:$0x1] %vm1094, %v2554
        %2600 = vst.msk [vmem:[#allocation2 + $0x37] sm:$0x1] %vm1094, %v2556
        %2601 = vst.msk [vmem:[#allocation2 + $0x47] sm:$0x1] %vm1094, %v2558
        %2602 = vst.msk [vmem:[#allocation2 + $0x57] sm:$0x1] %vm1094, %v2560
        %2603 = vst.msk [vmem:[#allocation2 + $0x67] sm:$0x1] %vm1094, %v2562
        %2604 = vst.msk [vmem:[#allocation2 + $0x77] sm:$0x1] %vm1094, %v2564
        %2605 = vst.msk [vmem:[#allocation2 + $0x87] sm:$0x1] %vm1094, %v2566
        %2606 = vst.msk [vmem:[#allocation2 + $0x97] sm:$0x1] %vm1094, %v2568
        %2607 = vst.msk [vmem:[#allocation2 + $0xa7] sm:$0x1] %vm1094, %v2570
        %2608 = vst.msk [vmem:[#allocation2 + $0xb7] sm:$0x1] %vm1094, %v2572
        %2609 = vst.msk [vmem:[#allocation2 + $0xc7] sm:$0x1] %vm1094, %v2574
        %2610 = vst.msk [vmem:[#allocation2 + $0xd7] sm:$0x1] %vm1094, %v2576
        %2611 = vst.msk [vmem:[#allocation2 + $0xe7] sm:$0x1] %vm1094, %v2578
        %2612 = vst.msk [vmem:[#allocation2 + $0xf7] sm:$0x1] %vm1094, %v2580
        %2615 = vrot.lane.b32.xlu0 %v2371, 112
        %v2616 = vpop.permute.xlu0 %2615
        %2617 = vrot.lane.b32.xlu0 %v2372, 112
        %v2618 = vpop.permute.xlu0 %2617
        %v2621 = vadd.f32 %v2373, %v2616
        %v2622 = vadd.f32 %v2374, %v2618
        %v2625 = vcombine.high %v2621, %v2621
        %v2627 = vunpack.c.l.s4 1966171168
        %v2628 = vunpack.c.0.s8 %v2627
        %v2629 = vlaneseq
        %v2630 = vshrl.u32 %v2629, 7
        %v2631 = vsub.s32 %v2628, %v2630
        %v2632 = vrot.slane %v2621, %v2631
        %v2634 = vunpack.c.l.s4 1966171168
        %v2635 = vunpack.c.0.s8 %v2634
        %v2636 = vlaneseq
        %v2637 = vshrl.u32 %v2636, 7
        %v2638 = vsub.s32 %v2635, %v2637
        %v2639 = vrot.slane %v2625, %v2638
        %v2640 = vcombine.high %v2632, %v2632
        %v2641 = vcombine.high %v2639, %v2639
        %v2643 = vunpack.c.l.s4 1966171168
        %v2644 = vunpack.c.0.s8 %v2643
        %v2645 = vlaneseq
        %v2646 = vshrl.u32 %v2645, 7
        %v2647 = vsub.s32 %v2644, %v2646
        %v2648 = vrot.slane %v2632, %v2647
        %v2650 = vunpack.c.l.s4 1966171168
        %v2651 = vunpack.c.0.s8 %v2650
        %v2652 = vlaneseq
        %v2653 = vshrl.u32 %v2652, 7
        %v2654 = vsub.s32 %v2651, %v2653
        %v2655 = vrot.slane %v2639, %v2654
        %v2657 = vunpack.c.l.s4 1966171168
        %v2658 = vunpack.c.0.s8 %v2657
        %v2659 = vlaneseq
        %v2660 = vshrl.u32 %v2659, 7
        %v2661 = vsub.s32 %v2658, %v2660
        %v2662 = vrot.slane %v2640, %v2661
        %v2664 = vunpack.c.l.s4 1966171168
        %v2665 = vunpack.c.0.s8 %v2664
        %v2666 = vlaneseq
        %v2667 = vshrl.u32 %v2666, 7
        %v2668 = vsub.s32 %v2665, %v2667
        %v2669 = vrot.slane %v2641, %v2668
        %v2670 = vcombine.high %v2648, %v2648
        %v2671 = vcombine.high %v2655, %v2655
        %v2672 = vcombine.high %v2662, %v2662
        %v2673 = vcombine.high %v2669, %v2669
        %v2674 = vcombine.high %v2622, %v2622
        %v2676 = vunpack.c.l.s4 1966171168
        %v2677 = vunpack.c.0.s8 %v2676
        %v2678 = vlaneseq
        %v2679 = vshrl.u32 %v2678, 7
        %v2680 = vsub.s32 %v2677, %v2679
        %v2681 = vrot.slane %v2622, %v2680
        %v2683 = vunpack.c.l.s4 1966171168
        %v2684 = vunpack.c.0.s8 %v2683
        %v2685 = vlaneseq
        %v2686 = vshrl.u32 %v2685, 7
        %v2687 = vsub.s32 %v2684, %v2686
        %v2688 = vrot.slane %v2674, %v2687
        %v2689 = vcombine.high %v2681, %v2681
        %v2690 = vcombine.high %v2688, %v2688
        %v2692 = vunpack.c.l.s4 1966171168
        %v2693 = vunpack.c.0.s8 %v2692
        %v2694 = vlaneseq
        %v2695 = vshrl.u32 %v2694, 7
        %v2696 = vsub.s32 %v2693, %v2695
        %v2697 = vrot.slane %v2681, %v2696
        %v2699 = vunpack.c.l.s4 1966171168
        %v2700 = vunpack.c.0.s8 %v2699
        %v2701 = vlaneseq
        %v2702 = vshrl.u32 %v2701, 7
        %v2703 = vsub.s32 %v2700, %v2702
        %v2704 = vrot.slane %v2688, %v2703
        %v2706 = vunpack.c.l.s4 1966171168
        %v2707 = vunpack.c.0.s8 %v2706
        %v2708 = vlaneseq
        %v2709 = vshrl.u32 %v2708, 7
        %v2710 = vsub.s32 %v2707, %v2709
        %v2711 = vrot.slane %v2689, %v2710
        %v2713 = vunpack.c.l.s4 1966171168
        %v2714 = vunpack.c.0.s8 %v2713
        %v2715 = vlaneseq
        %v2716 = vshrl.u32 %v2715, 7
        %v2717 = vsub.s32 %v2714, %v2716
        %v2718 = vrot.slane %v2690, %v2717
        %v2719 = vcombine.high %v2697, %v2697
        %v2720 = vcombine.high %v2704, %v2704
        %v2721 = vcombine.high %v2711, %v2711
        %v2722 = vcombine.high %v2718, %v2718
        %v2723 = vlaneseq
        %v2724 = vshrl.u32 %v2723, 7
        %v2725 = vsub.s32 0, %v2724
        %v2726 = vrot.slane %v2648, %v2725
        %v2727 = vlaneseq
        %v2728 = vshrl.u32 %v2727, 7
        %v2729 = vsub.s32 0, %v2728
        %v2730 = vrot.slane %v2662, %v2729
        %v2731 = vlaneseq
        %v2732 = vshrl.u32 %v2731, 7
        %v2733 = vsub.s32 0, %v2732
        %v2734 = vrot.slane %v2670, %v2733
        %v2735 = vlaneseq
        %v2736 = vshrl.u32 %v2735, 7
        %v2737 = vsub.s32 0, %v2736
        %v2738 = vrot.slane %v2672, %v2737
        %v2739 = vlaneseq
        %v2740 = vshrl.u32 %v2739, 7
        %v2741 = vsub.s32 0, %v2740
        %v2742 = vrot.slane %v2655, %v2741
        %v2743 = vlaneseq
        %v2744 = vshrl.u32 %v2743, 7
        %v2745 = vsub.s32 0, %v2744
        %v2746 = vrot.slane %v2669, %v2745
        %v2747 = vlaneseq
        %v2748 = vshrl.u32 %v2747, 7
        %v2749 = vsub.s32 0, %v2748
        %v2750 = vrot.slane %v2671, %v2749
        %v2751 = vlaneseq
        %v2752 = vshrl.u32 %v2751, 7
        %v2753 = vsub.s32 0, %v2752
        %v2754 = vrot.slane %v2673, %v2753
        %v2755 = vlaneseq
        %v2756 = vshrl.u32 %v2755, 7
        %v2757 = vsub.s32 0, %v2756
        %v2758 = vrot.slane %v2697, %v2757
        %v2759 = vlaneseq
        %v2760 = vshrl.u32 %v2759, 7
        %v2761 = vsub.s32 0, %v2760
        %v2762 = vrot.slane %v2711, %v2761
        %v2763 = vlaneseq
        %v2764 = vshrl.u32 %v2763, 7
        %v2765 = vsub.s32 0, %v2764
        %v2766 = vrot.slane %v2719, %v2765
        %v2767 = vlaneseq
        %v2768 = vshrl.u32 %v2767, 7
        %v2769 = vsub.s32 0, %v2768
        %v2770 = vrot.slane %v2721, %v2769
        %v2771 = vlaneseq
        %v2772 = vshrl.u32 %v2771, 7
        %v2773 = vsub.s32 0, %v2772
        %v2774 = vrot.slane %v2704, %v2773
        %v2775 = vlaneseq
        %v2776 = vshrl.u32 %v2775, 7
        %v2777 = vsub.s32 0, %v2776
        %v2778 = vrot.slane %v2718, %v2777
        %v2779 = vlaneseq
        %v2780 = vshrl.u32 %v2779, 7
        %v2781 = vsub.s32 0, %v2780
        %v2782 = vrot.slane %v2720, %v2781
        %v2783 = vlaneseq
        %v2784 = vshrl.u32 %v2783, 7
        %v2785 = vsub.s32 0, %v2784
        %v2786 = vrot.slane %v2722, %v2785
        %2787 = vrot.lane.b32.xlu0 %v2726, 80
        %v2788 = vpop.permute.xlu0 %2787
        %2789 = vrot.lane.b32.xlu0 %v2730, 80
        %v2790 = vpop.permute.xlu0 %2789
        %2791 = vrot.lane.b32.xlu0 %v2734, 80
        %v2792 = vpop.permute.xlu0 %2791
        %2793 = vrot.lane.b32.xlu0 %v2738, 80
        %v2794 = vpop.permute.xlu0 %2793
        %2795 = vrot.lane.b32.xlu0 %v2742, 80
        %v2796 = vpop.permute.xlu0 %2795
        %2797 = vrot.lane.b32.xlu0 %v2746, 80
        %v2798 = vpop.permute.xlu0 %2797
        %2799 = vrot.lane.b32.xlu0 %v2750, 80
        %v2800 = vpop.permute.xlu0 %2799
        %2801 = vrot.lane.b32.xlu0 %v2754, 80
        %v2802 = vpop.permute.xlu0 %2801
        %2803 = vrot.lane.b32.xlu0 %v2758, 80
        %v2804 = vpop.permute.xlu0 %2803
        %2805 = vrot.lane.b32.xlu0 %v2762, 80
        %v2806 = vpop.permute.xlu0 %2805
        %2807 = vrot.lane.b32.xlu0 %v2766, 80
        %v2808 = vpop.permute.xlu0 %2807
        %2809 = vrot.lane.b32.xlu0 %v2770, 80
        %v2810 = vpop.permute.xlu0 %2809
        %2811 = vrot.lane.b32.xlu0 %v2774, 80
        %v2812 = vpop.permute.xlu0 %2811
        %2813 = vrot.lane.b32.xlu0 %v2778, 80
        %v2814 = vpop.permute.xlu0 %2813
        %2815 = vrot.lane.b32.xlu0 %v2782, 80
        %v2816 = vpop.permute.xlu0 %2815
        %2817 = vrot.lane.b32.xlu0 %v2786, 80
        %v2818 = vpop.permute.xlu0 %2817
        %2835 = vst.msk [vmem:[#allocation2 + $0x8] sm:$0x1] %vm1094, %v2788
        %2836 = vst.msk [vmem:[#allocation2 + $0x18] sm:$0x1] %vm1094, %v2790
        %2837 = vst.msk [vmem:[#allocation2 + $0x28] sm:$0x1] %vm1094, %v2792
        %2838 = vst.msk [vmem:[#allocation2 + $0x38] sm:$0x1] %vm1094, %v2794
        %2839 = vst.msk [vmem:[#allocation2 + $0x48] sm:$0x1] %vm1094, %v2796
        %2840 = vst.msk [vmem:[#allocation2 + $0x58] sm:$0x1] %vm1094, %v2798
        %2841 = vst.msk [vmem:[#allocation2 + $0x68] sm:$0x1] %vm1094, %v2800
        %2842 = vst.msk [vmem:[#allocation2 + $0x78] sm:$0x1] %vm1094, %v2802
        %2843 = vst.msk [vmem:[#allocation2 + $0x88] sm:$0x1] %vm1094, %v2804
        %2844 = vst.msk [vmem:[#allocation2 + $0x98] sm:$0x1] %vm1094, %v2806
        %2845 = vst.msk [vmem:[#allocation2 + $0xa8] sm:$0x1] %vm1094, %v2808
        %2846 = vst.msk [vmem:[#allocation2 + $0xb8] sm:$0x1] %vm1094, %v2810
        %2847 = vst.msk [vmem:[#allocation2 + $0xc8] sm:$0x1] %vm1094, %v2812
        %2848 = vst.msk [vmem:[#allocation2 + $0xd8] sm:$0x1] %vm1094, %v2814
        %2849 = vst.msk [vmem:[#allocation2 + $0xe8] sm:$0x1] %vm1094, %v2816
        %2850 = vst.msk [vmem:[#allocation2 + $0xf8] sm:$0x1] %vm1094, %v2818
        %2853 = vrot.lane.b32.xlu0 %v2129, 112
        %v2854 = vpop.permute.xlu0 %2853
        %2855 = vrot.lane.b32.xlu0 %v2130, 112
        %v2856 = vpop.permute.xlu0 %2855
        %v2859 = vadd.f32 %v2131, %v2854
        %v2860 = vadd.f32 %v2132, %v2856
        %v2863 = vcombine.high %v2859, %v2859
        %v2865 = vunpack.c.l.s4 1966171168
        %v2866 = vunpack.c.0.s8 %v2865
        %v2867 = vlaneseq
        %v2868 = vshrl.u32 %v2867, 7
        %v2869 = vsub.s32 %v2866, %v2868
        %v2870 = vrot.slane %v2859, %v2869
        %v2872 = vunpack.c.l.s4 1966171168
        %v2873 = vunpack.c.0.s8 %v2872
        %v2874 = vlaneseq
        %v2875 = vshrl.u32 %v2874, 7
        %v2876 = vsub.s32 %v2873, %v2875
        %v2877 = vrot.slane %v2863, %v2876
        %v2878 = vcombine.high %v2870, %v2870
        %v2879 = vcombine.high %v2877, %v2877
        %v2881 = vunpack.c.l.s4 1966171168
        %v2882 = vunpack.c.0.s8 %v2881
        %v2883 = vlaneseq
        %v2884 = vshrl.u32 %v2883, 7
        %v2885 = vsub.s32 %v2882, %v2884
        %v2886 = vrot.slane %v2870, %v2885
        %v2888 = vunpack.c.l.s4 1966171168
        %v2889 = vunpack.c.0.s8 %v2888
        %v2890 = vlaneseq
        %v2891 = vshrl.u32 %v2890, 7
        %v2892 = vsub.s32 %v2889, %v2891
        %v2893 = vrot.slane %v2877, %v2892
        %v2895 = vunpack.c.l.s4 1966171168
        %v2896 = vunpack.c.0.s8 %v2895
        %v2897 = vlaneseq
        %v2898 = vshrl.u32 %v2897, 7
        %v2899 = vsub.s32 %v2896, %v2898
        %v2900 = vrot.slane %v2878, %v2899
        %v2902 = vunpack.c.l.s4 1966171168
        %v2903 = vunpack.c.0.s8 %v2902
        %v2904 = vlaneseq
        %v2905 = vshrl.u32 %v2904, 7
        %v2906 = vsub.s32 %v2903, %v2905
        %v2907 = vrot.slane %v2879, %v2906
        %v2908 = vcombine.high %v2886, %v2886
        %v2909 = vcombine.high %v2893, %v2893
        %v2910 = vcombine.high %v2900, %v2900
        %v2911 = vcombine.high %v2907, %v2907
        %v2912 = vcombine.high %v2860, %v2860
        %v2914 = vunpack.c.l.s4 1966171168
        %v2915 = vunpack.c.0.s8 %v2914
        %v2916 = vlaneseq
        %v2917 = vshrl.u32 %v2916, 7
        %v2918 = vsub.s32 %v2915, %v2917
        %v2919 = vrot.slane %v2860, %v2918
        %v2921 = vunpack.c.l.s4 1966171168
        %v2922 = vunpack.c.0.s8 %v2921
        %v2923 = vlaneseq
        %v2924 = vshrl.u32 %v2923, 7
        %v2925 = vsub.s32 %v2922, %v2924
        %v2926 = vrot.slane %v2912, %v2925
        %v2927 = vcombine.high %v2919, %v2919
        %v2928 = vcombine.high %v2926, %v2926
        %v2930 = vunpack.c.l.s4 1966171168
        %v2931 = vunpack.c.0.s8 %v2930
        %v2932 = vlaneseq
        %v2933 = vshrl.u32 %v2932, 7
        %v2934 = vsub.s32 %v2931, %v2933
        %v2935 = vrot.slane %v2919, %v2934
        %v2937 = vunpack.c.l.s4 1966171168
        %v2938 = vunpack.c.0.s8 %v2937
        %v2939 = vlaneseq
        %v2940 = vshrl.u32 %v2939, 7
        %v2941 = vsub.s32 %v2938, %v2940
        %v2942 = vrot.slane %v2926, %v2941
        %v2944 = vunpack.c.l.s4 1966171168
        %v2945 = vunpack.c.0.s8 %v2944
        %v2946 = vlaneseq
        %v2947 = vshrl.u32 %v2946, 7
        %v2948 = vsub.s32 %v2945, %v2947
        %v2949 = vrot.slane %v2927, %v2948
        %v2951 = vunpack.c.l.s4 1966171168
        %v2952 = vunpack.c.0.s8 %v2951
        %v2953 = vlaneseq
        %v2954 = vshrl.u32 %v2953, 7
        %v2955 = vsub.s32 %v2952, %v2954
        %v2956 = vrot.slane %v2928, %v2955
        %v2957 = vcombine.high %v2935, %v2935
        %v2958 = vcombine.high %v2942, %v2942
        %v2959 = vcombine.high %v2949, %v2949
        %v2960 = vcombine.high %v2956, %v2956
        %v2961 = vlaneseq
        %v2962 = vshrl.u32 %v2961, 7
        %v2963 = vsub.s32 0, %v2962
        %v2964 = vrot.slane %v2886, %v2963
        %v2965 = vlaneseq
        %v2966 = vshrl.u32 %v2965, 7
        %v2967 = vsub.s32 0, %v2966
        %v2968 = vrot.slane %v2900, %v2967
        %v2969 = vlaneseq
        %v2970 = vshrl.u32 %v2969, 7
        %v2971 = vsub.s32 0, %v2970
        %v2972 = vrot.slane %v2908, %v2971
        %v2973 = vlaneseq
        %v2974 = vshrl.u32 %v2973, 7
        %v2975 = vsub.s32 0, %v2974
        %v2976 = vrot.slane %v2910, %v2975
        %v2977 = vlaneseq
        %v2978 = vshrl.u32 %v2977, 7
        %v2979 = vsub.s32 0, %v2978
        %v2980 = vrot.slane %v2893, %v2979
        %v2981 = vlaneseq
        %v2982 = vshrl.u32 %v2981, 7
        %v2983 = vsub.s32 0, %v2982
        %v2984 = vrot.slane %v2907, %v2983
        %v2985 = vlaneseq
        %v2986 = vshrl.u32 %v2985, 7
        %v2987 = vsub.s32 0, %v2986
        %v2988 = vrot.slane %v2909, %v2987
        %v2989 = vlaneseq
        %v2990 = vshrl.u32 %v2989, 7
        %v2991 = vsub.s32 0, %v2990
        %v2992 = vrot.slane %v2911, %v2991
        %v2993 = vlaneseq
        %v2994 = vshrl.u32 %v2993, 7
        %v2995 = vsub.s32 0, %v2994
        %v2996 = vrot.slane %v2935, %v2995
        %v2997 = vlaneseq
        %v2998 = vshrl.u32 %v2997, 7
        %v2999 = vsub.s32 0, %v2998
        %v3000 = vrot.slane %v2949, %v2999
        %v3001 = vlaneseq
        %v3002 = vshrl.u32 %v3001, 7
        %v3003 = vsub.s32 0, %v3002
        %v3004 = vrot.slane %v2957, %v3003
        %v3005 = vlaneseq
        %v3006 = vshrl.u32 %v3005, 7
        %v3007 = vsub.s32 0, %v3006
        %v3008 = vrot.slane %v2959, %v3007
        %v3009 = vlaneseq
        %v3010 = vshrl.u32 %v3009, 7
        %v3011 = vsub.s32 0, %v3010
        %v3012 = vrot.slane %v2942, %v3011
        %v3013 = vlaneseq
        %v3014 = vshrl.u32 %v3013, 7
        %v3015 = vsub.s32 0, %v3014
        %v3016 = vrot.slane %v2956, %v3015
        %v3017 = vlaneseq
        %v3018 = vshrl.u32 %v3017, 7
        %v3019 = vsub.s32 0, %v3018
        %v3020 = vrot.slane %v2958, %v3019
        %v3021 = vlaneseq
        %v3022 = vshrl.u32 %v3021, 7
        %v3023 = vsub.s32 0, %v3022
        %v3024 = vrot.slane %v2960, %v3023
        %3025 = vrot.lane.b32.xlu0 %v2964, 64
        %v3026 = vpop.permute.xlu0 %3025
        %3027 = vrot.lane.b32.xlu0 %v2968, 64
        %v3028 = vpop.permute.xlu0 %3027
        %3029 = vrot.lane.b32.xlu0 %v2972, 64
        %v3030 = vpop.permute.xlu0 %3029
        %3031 = vrot.lane.b32.xlu0 %v2976, 64
        %v3032 = vpop.permute.xlu0 %3031
        %3033 = vrot.lane.b32.xlu0 %v2980, 64
        %v3034 = vpop.permute.xlu0 %3033
        %3035 = vrot.lane.b32.xlu0 %v2984, 64
        %v3036 = vpop.permute.xlu0 %3035
        %3037 = vrot.lane.b32.xlu0 %v2988, 64
        %v3038 = vpop.permute.xlu0 %3037
        %3039 = vrot.lane.b32.xlu0 %v2992, 64
        %v3040 = vpop.permute.xlu0 %3039
        %3041 = vrot.lane.b32.xlu0 %v2996, 64
        %v3042 = vpop.permute.xlu0 %3041
        %3043 = vrot.lane.b32.xlu0 %v3000, 64
        %v3044 = vpop.permute.xlu0 %3043
        %3045 = vrot.lane.b32.xlu0 %v3004, 64
        %v3046 = vpop.permute.xlu0 %3045
        %3047 = vrot.lane.b32.xlu0 %v3008, 64
        %v3048 = vpop.permute.xlu0 %3047
        %3049 = vrot.lane.b32.xlu0 %v3012, 64
        %v3050 = vpop.permute.xlu0 %3049
        %3051 = vrot.lane.b32.xlu0 %v3016, 64
        %v3052 = vpop.permute.xlu0 %3051
        %3053 = vrot.lane.b32.xlu0 %v3020, 64
        %v3054 = vpop.permute.xlu0 %3053
        %3055 = vrot.lane.b32.xlu0 %v3024, 64
        %v3056 = vpop.permute.xlu0 %3055
        %3073 = vst.msk [vmem:[#allocation2 + $0x9] sm:$0x1] %vm1094, %v3026
        %3074 = vst.msk [vmem:[#allocation2 + $0x19] sm:$0x1] %vm1094, %v3028
        %3075 = vst.msk [vmem:[#allocation2 + $0x29] sm:$0x1] %vm1094, %v3030
        %3076 = vst.msk [vmem:[#allocation2 + $0x39] sm:$0x1] %vm1094, %v3032
        %3077 = vst.msk [vmem:[#allocation2 + $0x49] sm:$0x1] %vm1094, %v3034
        %3078 = vst.msk [vmem:[#allocation2 + $0x59] sm:$0x1] %vm1094, %v3036
        %3079 = vst.msk [vmem:[#allocation2 + $0x69] sm:$0x1] %vm1094, %v3038
        %3080 = vst.msk [vmem:[#allocation2 + $0x79] sm:$0x1] %vm1094, %v3040
        %3081 = vst.msk [vmem:[#allocation2 + $0x89] sm:$0x1] %vm1094, %v3042
        %3082 = vst.msk [vmem:[#allocation2 + $0x99] sm:$0x1] %vm1094, %v3044
        %3083 = vst.msk [vmem:[#allocation2 + $0xa9] sm:$0x1] %vm1094, %v3046
        %3084 = vst.msk [vmem:[#allocation2 + $0xb9] sm:$0x1] %vm1094, %v3048
        %3085 = vst.msk [vmem:[#allocation2 + $0xc9] sm:$0x1] %vm1094, %v3050
        %3086 = vst.msk [vmem:[#allocation2 + $0xd9] sm:$0x1] %vm1094, %v3052
        %3087 = vst.msk [vmem:[#allocation2 + $0xe9] sm:$0x1] %vm1094, %v3054
        %3088 = vst.msk [vmem:[#allocation2 + $0xf9] sm:$0x1] %vm1094, %v3056
        %3091 = vrot.lane.b32.xlu0 %v1887, 112
        %v3092 = vpop.permute.xlu0 %3091
        %3093 = vrot.lane.b32.xlu0 %v1888, 112
        %v3094 = vpop.permute.xlu0 %3093
        %v3097 = vadd.f32 %v1889, %v3092
        %v3098 = vadd.f32 %v1890, %v3094
        %v3101 = vcombine.high %v3097, %v3097
        %v3103 = vunpack.c.l.s4 1966171168
        %v3104 = vunpack.c.0.s8 %v3103
        %v3105 = vlaneseq
        %v3106 = vshrl.u32 %v3105, 7
        %v3107 = vsub.s32 %v3104, %v3106
        %v3108 = vrot.slane %v3097, %v3107
        %v3110 = vunpack.c.l.s4 1966171168
        %v3111 = vunpack.c.0.s8 %v3110
        %v3112 = vlaneseq
        %v3113 = vshrl.u32 %v3112, 7
        %v3114 = vsub.s32 %v3111, %v3113
        %v3115 = vrot.slane %v3101, %v3114
        %v3116 = vcombine.high %v3108, %v3108
        %v3117 = vcombine.high %v3115, %v3115
        %v3119 = vunpack.c.l.s4 1966171168
        %v3120 = vunpack.c.0.s8 %v3119
        %v3121 = vlaneseq
        %v3122 = vshrl.u32 %v3121, 7
        %v3123 = vsub.s32 %v3120, %v3122
        %v3124 = vrot.slane %v3108, %v3123
        %v3126 = vunpack.c.l.s4 1966171168
        %v3127 = vunpack.c.0.s8 %v3126
        %v3128 = vlaneseq
        %v3129 = vshrl.u32 %v3128, 7
        %v3130 = vsub.s32 %v3127, %v3129
        %v3131 = vrot.slane %v3115, %v3130
        %v3133 = vunpack.c.l.s4 1966171168
        %v3134 = vunpack.c.0.s8 %v3133
        %v3135 = vlaneseq
        %v3136 = vshrl.u32 %v3135, 7
        %v3137 = vsub.s32 %v3134, %v3136
        %v3138 = vrot.slane %v3116, %v3137
        %v3140 = vunpack.c.l.s4 1966171168
        %v3141 = vunpack.c.0.s8 %v3140
        %v3142 = vlaneseq
        %v3143 = vshrl.u32 %v3142, 7
        %v3144 = vsub.s32 %v3141, %v3143
        %v3145 = vrot.slane %v3117, %v3144
        %v3146 = vcombine.high %v3124, %v3124
        %v3147 = vcombine.high %v3131, %v3131
        %v3148 = vcombine.high %v3138, %v3138
        %v3149 = vcombine.high %v3145, %v3145
        %v3150 = vcombine.high %v3098, %v3098
        %v3152 = vunpack.c.l.s4 1966171168
        %v3153 = vunpack.c.0.s8 %v3152
        %v3154 = vlaneseq
        %v3155 = vshrl.u32 %v3154, 7
        %v3156 = vsub.s32 %v3153, %v3155
        %v3157 = vrot.slane %v3098, %v3156
        %v3159 = vunpack.c.l.s4 1966171168
        %v3160 = vunpack.c.0.s8 %v3159
        %v3161 = vlaneseq
        %v3162 = vshrl.u32 %v3161, 7
        %v3163 = vsub.s32 %v3160, %v3162
        %v3164 = vrot.slane %v3150, %v3163
        %v3165 = vcombine.high %v3157, %v3157
        %v3166 = vcombine.high %v3164, %v3164
        %v3168 = vunpack.c.l.s4 1966171168
        %v3169 = vunpack.c.0.s8 %v3168
        %v3170 = vlaneseq
        %v3171 = vshrl.u32 %v3170, 7
        %v3172 = vsub.s32 %v3169, %v3171
        %v3173 = vrot.slane %v3157, %v3172
        %v3175 = vunpack.c.l.s4 1966171168
        %v3176 = vunpack.c.0.s8 %v3175
        %v3177 = vlaneseq
        %v3178 = vshrl.u32 %v3177, 7
        %v3179 = vsub.s32 %v3176, %v3178
        %v3180 = vrot.slane %v3164, %v3179
        %v3182 = vunpack.c.l.s4 1966171168
        %v3183 = vunpack.c.0.s8 %v3182
        %v3184 = vlaneseq
        %v3185 = vshrl.u32 %v3184, 7
        %v3186 = vsub.s32 %v3183, %v3185
        %v3187 = vrot.slane %v3165, %v3186
        %v3189 = vunpack.c.l.s4 1966171168
        %v3190 = vunpack.c.0.s8 %v3189
        %v3191 = vlaneseq
        %v3192 = vshrl.u32 %v3191, 7
        %v3193 = vsub.s32 %v3190, %v3192
        %v3194 = vrot.slane %v3166, %v3193
        %v3195 = vcombine.high %v3173, %v3173
        %v3196 = vcombine.high %v3180, %v3180
        %v3197 = vcombine.high %v3187, %v3187
        %v3198 = vcombine.high %v3194, %v3194
        %v3199 = vlaneseq
        %v3200 = vshrl.u32 %v3199, 7
        %v3201 = vsub.s32 0, %v3200
        %v3202 = vrot.slane %v3124, %v3201
        %v3203 = vlaneseq
        %v3204 = vshrl.u32 %v3203, 7
        %v3205 = vsub.s32 0, %v3204
        %v3206 = vrot.slane %v3138, %v3205
        %v3207 = vlaneseq
        %v3208 = vshrl.u32 %v3207, 7
        %v3209 = vsub.s32 0, %v3208
        %v3210 = vrot.slane %v3146, %v3209
        %v3211 = vlaneseq
        %v3212 = vshrl.u32 %v3211, 7
        %v3213 = vsub.s32 0, %v3212
        %v3214 = vrot.slane %v3148, %v3213
        %v3215 = vlaneseq
        %v3216 = vshrl.u32 %v3215, 7
        %v3217 = vsub.s32 0, %v3216
        %v3218 = vrot.slane %v3131, %v3217
        %v3219 = vlaneseq
        %v3220 = vshrl.u32 %v3219, 7
        %v3221 = vsub.s32 0, %v3220
        %v3222 = vrot.slane %v3145, %v3221
        %v3223 = vlaneseq
        %v3224 = vshrl.u32 %v3223, 7
        %v3225 = vsub.s32 0, %v3224
        %v3226 = vrot.slane %v3147, %v3225
        %v3227 = vlaneseq
        %v3228 = vshrl.u32 %v3227, 7
        %v3229 = vsub.s32 0, %v3228
        %v3230 = vrot.slane %v3149, %v3229
        %v3231 = vlaneseq
        %v3232 = vshrl.u32 %v3231, 7
        %v3233 = vsub.s32 0, %v3232
        %v3234 = vrot.slane %v3173, %v3233
        %v3235 = vlaneseq
        %v3236 = vshrl.u32 %v3235, 7
        %v3237 = vsub.s32 0, %v3236
        %v3238 = vrot.slane %v3187, %v3237
        %v3239 = vlaneseq
        %v3240 = vshrl.u32 %v3239, 7
        %v3241 = vsub.s32 0, %v3240
        %v3242 = vrot.slane %v3195, %v3241
        %v3243 = vlaneseq
        %v3244 = vshrl.u32 %v3243, 7
        %v3245 = vsub.s32 0, %v3244
        %v3246 = vrot.slane %v3197, %v3245
        %v3247 = vlaneseq
        %v3248 = vshrl.u32 %v3247, 7
        %v3249 = vsub.s32 0, %v3248
        %v3250 = vrot.slane %v3180, %v3249
        %v3251 = vlaneseq
        %v3252 = vshrl.u32 %v3251, 7
        %v3253 = vsub.s32 0, %v3252
        %v3254 = vrot.slane %v3194, %v3253
        %v3255 = vlaneseq
        %v3256 = vshrl.u32 %v3255, 7
        %v3257 = vsub.s32 0, %v3256
        %v3258 = vrot.slane %v3196, %v3257
        %v3259 = vlaneseq
        %v3260 = vshrl.u32 %v3259, 7
        %v3261 = vsub.s32 0, %v3260
        %v3262 = vrot.slane %v3198, %v3261
        %3263 = vrot.lane.b32.xlu0 %v3202, 64
        %v3264 = vpop.permute.xlu0 %3263
        %3265 = vrot.lane.b32.xlu0 %v3206, 64
        %v3266 = vpop.permute.xlu0 %3265
        %3267 = vrot.lane.b32.xlu0 %v3210, 64
        %v3268 = vpop.permute.xlu0 %3267
        %3269 = vrot.lane.b32.xlu0 %v3214, 64
        %v3270 = vpop.permute.xlu0 %3269
        %3271 = vrot.lane.b32.xlu0 %v3218, 64
        %v3272 = vpop.permute.xlu0 %3271
        %3273 = vrot.lane.b32.xlu0 %v3222, 64
        %v3274 = vpop.permute.xlu0 %3273
        %3275 = vrot.lane.b32.xlu0 %v3226, 64
        %v3276 = vpop.permute.xlu0 %3275
        %3277 = vrot.lane.b32.xlu0 %v3230, 64
        %v3278 = vpop.permute.xlu0 %3277
        %3279 = vrot.lane.b32.xlu0 %v3234, 64
        %v3280 = vpop.permute.xlu0 %3279
        %3281 = vrot.lane.b32.xlu0 %v3238, 64
        %v3282 = vpop.permute.xlu0 %3281
        %3283 = vrot.lane.b32.xlu0 %v3242, 64
        %v3284 = vpop.permute.xlu0 %3283
        %3285 = vrot.lane.b32.xlu0 %v3246, 64
        %v3286 = vpop.permute.xlu0 %3285
        %3287 = vrot.lane.b32.xlu0 %v3250, 64
        %v3288 = vpop.permute.xlu0 %3287
        %3289 = vrot.lane.b32.xlu0 %v3254, 64
        %v3290 = vpop.permute.xlu0 %3289
        %3291 = vrot.lane.b32.xlu0 %v3258, 64
        %v3292 = vpop.permute.xlu0 %3291
        %3293 = vrot.lane.b32.xlu0 %v3262, 64
        %v3294 = vpop.permute.xlu0 %3293
        %3311 = vst.msk [vmem:[#allocation2 + $0xa] sm:$0x1] %vm1094, %v3264
        %3312 = vst.msk [vmem:[#allocation2 + $0x1a] sm:$0x1] %vm1094, %v3266
        %3313 = vst.msk [vmem:[#allocation2 + $0x2a] sm:$0x1] %vm1094, %v3268
        %3314 = vst.msk [vmem:[#allocation2 + $0x3a] sm:$0x1] %vm1094, %v3270
        %3315 = vst.msk [vmem:[#allocation2 + $0x4a] sm:$0x1] %vm1094, %v3272
        %3316 = vst.msk [vmem:[#allocation2 + $0x5a] sm:$0x1] %vm1094, %v3274
        %3317 = vst.msk [vmem:[#allocation2 + $0x6a] sm:$0x1] %vm1094, %v3276
        %3318 = vst.msk [vmem:[#allocation2 + $0x7a] sm:$0x1] %vm1094, %v3278
        %3319 = vst.msk [vmem:[#allocation2 + $0x8a] sm:$0x1] %vm1094, %v3280
        %3320 = vst.msk [vmem:[#allocation2 + $0x9a] sm:$0x1] %vm1094, %v3282
        %3321 = vst.msk [vmem:[#allocation2 + $0xaa] sm:$0x1] %vm1094, %v3284
        %3322 = vst.msk [vmem:[#allocation2 + $0xba] sm:$0x1] %vm1094, %v3286
        %3323 = vst.msk [vmem:[#allocation2 + $0xca] sm:$0x1] %vm1094, %v3288
        %3324 = vst.msk [vmem:[#allocation2 + $0xda] sm:$0x1] %vm1094, %v3290
        %3325 = vst.msk [vmem:[#allocation2 + $0xea] sm:$0x1] %vm1094, %v3292
        %3326 = vst.msk [vmem:[#allocation2 + $0xfa] sm:$0x1] %vm1094, %v3294
        %3329 = vrot.lane.b32.xlu0 %v1645, 112
        %v3330 = vpop.permute.xlu0 %3329
        %3331 = vrot.lane.b32.xlu0 %v1646, 112
        %v3332 = vpop.permute.xlu0 %3331
        %v3335 = vadd.f32 %v1647, %v3330
        %v3336 = vadd.f32 %v1648, %v3332
        %v3339 = vcombine.high %v3335, %v3335
        %v3341 = vunpack.c.l.s4 1966171168
        %v3342 = vunpack.c.0.s8 %v3341
        %v3343 = vlaneseq
        %v3344 = vshrl.u32 %v3343, 7
        %v3345 = vsub.s32 %v3342, %v3344
        %v3346 = vrot.slane %v3335, %v3345
        %v3348 = vunpack.c.l.s4 1966171168
        %v3349 = vunpack.c.0.s8 %v3348
        %v3350 = vlaneseq
        %v3351 = vshrl.u32 %v3350, 7
        %v3352 = vsub.s32 %v3349, %v3351
        %v3353 = vrot.slane %v3339, %v3352
        %v3354 = vcombine.high %v3346, %v3346
        %v3355 = vcombine.high %v3353, %v3353
        %v3357 = vunpack.c.l.s4 1966171168
        %v3358 = vunpack.c.0.s8 %v3357
        %v3359 = vlaneseq
        %v3360 = vshrl.u32 %v3359, 7
        %v3361 = vsub.s32 %v3358, %v3360
        %v3362 = vrot.slane %v3346, %v3361
        %v3364 = vunpack.c.l.s4 1966171168
        %v3365 = vunpack.c.0.s8 %v3364
        %v3366 = vlaneseq
        %v3367 = vshrl.u32 %v3366, 7
        %v3368 = vsub.s32 %v3365, %v3367
        %v3369 = vrot.slane %v3353, %v3368
        %v3371 = vunpack.c.l.s4 1966171168
        %v3372 = vunpack.c.0.s8 %v3371
        %v3373 = vlaneseq
        %v3374 = vshrl.u32 %v3373, 7
        %v3375 = vsub.s32 %v3372, %v3374
        %v3376 = vrot.slane %v3354, %v3375
        %v3378 = vunpack.c.l.s4 1966171168
        %v3379 = vunpack.c.0.s8 %v3378
        %v3380 = vlaneseq
        %v3381 = vshrl.u32 %v3380, 7
        %v3382 = vsub.s32 %v3379, %v3381
        %v3383 = vrot.slane %v3355, %v3382
        %v3384 = vcombine.high %v3362, %v3362
        %v3385 = vcombine.high %v3369, %v3369
        %v3386 = vcombine.high %v3376, %v3376
        %v3387 = vcombine.high %v3383, %v3383
        %v3388 = vcombine.high %v3336, %v3336
        %v3390 = vunpack.c.l.s4 1966171168
        %v3391 = vunpack.c.0.s8 %v3390
        %v3392 = vlaneseq
        %v3393 = vshrl.u32 %v3392, 7
        %v3394 = vsub.s32 %v3391, %v3393
        %v3395 = vrot.slane %v3336, %v3394
        %v3397 = vunpack.c.l.s4 1966171168
        %v3398 = vunpack.c.0.s8 %v3397
        %v3399 = vlaneseq
        %v3400 = vshrl.u32 %v3399, 7
        %v3401 = vsub.s32 %v3398, %v3400
        %v3402 = vrot.slane %v3388, %v3401
        %v3403 = vcombine.high %v3395, %v3395
        %v3404 = vcombine.high %v3402, %v3402
        %v3406 = vunpack.c.l.s4 1966171168
        %v3407 = vunpack.c.0.s8 %v3406
        %v3408 = vlaneseq
        %v3409 = vshrl.u32 %v3408, 7
        %v3410 = vsub.s32 %v3407, %v3409
        %v3411 = vrot.slane %v3395, %v3410
        %v3413 = vunpack.c.l.s4 1966171168
        %v3414 = vunpack.c.0.s8 %v3413
        %v3415 = vlaneseq
        %v3416 = vshrl.u32 %v3415, 7
        %v3417 = vsub.s32 %v3414, %v3416
        %v3418 = vrot.slane %v3402, %v3417
        %v3420 = vunpack.c.l.s4 1966171168
        %v3421 = vunpack.c.0.s8 %v3420
        %v3422 = vlaneseq
        %v3423 = vshrl.u32 %v3422, 7
        %v3424 = vsub.s32 %v3421, %v3423
        %v3425 = vrot.slane %v3403, %v3424
        %v3427 = vunpack.c.l.s4 1966171168
        %v3428 = vunpack.c.0.s8 %v3427
        %v3429 = vlaneseq
        %v3430 = vshrl.u32 %v3429, 7
        %v3431 = vsub.s32 %v3428, %v3430
        %v3432 = vrot.slane %v3404, %v3431
        %v3433 = vcombine.high %v3411, %v3411
        %v3434 = vcombine.high %v3418, %v3418
        %v3435 = vcombine.high %v3425, %v3425
        %v3436 = vcombine.high %v3432, %v3432
        %v3437 = vlaneseq
        %v3438 = vshrl.u32 %v3437, 7
        %v3439 = vsub.s32 0, %v3438
        %v3440 = vrot.slane %v3362, %v3439
        %v3441 = vlaneseq
        %v3442 = vshrl.u32 %v3441, 7
        %v3443 = vsub.s32 0, %v3442
        %v3444 = vrot.slane %v3376, %v3443
        %v3445 = vlaneseq
        %v3446 = vshrl.u32 %v3445, 7
        %v3447 = vsub.s32 0, %v3446
        %v3448 = vrot.slane %v3384, %v3447
        %v3449 = vlaneseq
        %v3450 = vshrl.u32 %v3449, 7
        %v3451 = vsub.s32 0, %v3450
        %v3452 = vrot.slane %v3386, %v3451
        %v3453 = vlaneseq
        %v3454 = vshrl.u32 %v3453, 7
        %v3455 = vsub.s32 0, %v3454
        %v3456 = vrot.slane %v3369, %v3455
        %v3457 = vlaneseq
        %v3458 = vshrl.u32 %v3457, 7
        %v3459 = vsub.s32 0, %v3458
        %v3460 = vrot.slane %v3383, %v3459
        %v3461 = vlaneseq
        %v3462 = vshrl.u32 %v3461, 7
        %v3463 = vsub.s32 0, %v3462
        %v3464 = vrot.slane %v3385, %v3463
        %v3465 = vlaneseq
        %v3466 = vshrl.u32 %v3465, 7
        %v3467 = vsub.s32 0, %v3466
        %v3468 = vrot.slane %v3387, %v3467
        %v3469 = vlaneseq
        %v3470 = vshrl.u32 %v3469, 7
        %v3471 = vsub.s32 0, %v3470
        %v3472 = vrot.slane %v3411, %v3471
        %v3473 = vlaneseq
        %v3474 = vshrl.u32 %v3473, 7
        %v3475 = vsub.s32 0, %v3474
        %v3476 = vrot.slane %v3425, %v3475
        %v3477 = vlaneseq
        %v3478 = vshrl.u32 %v3477, 7
        %v3479 = vsub.s32 0, %v3478
        %v3480 = vrot.slane %v3433, %v3479
        %v3481 = vlaneseq
        %v3482 = vshrl.u32 %v3481, 7
        %v3483 = vsub.s32 0, %v3482
        %v3484 = vrot.slane %v3435, %v3483
        %v3485 = vlaneseq
        %v3486 = vshrl.u32 %v3485, 7
        %v3487 = vsub.s32 0, %v3486
        %v3488 = vrot.slane %v3418, %v3487
        %v3489 = vlaneseq
        %v3490 = vshrl.u32 %v3489, 7
        %v3491 = vsub.s32 0, %v3490
        %v3492 = vrot.slane %v3432, %v3491
        %v3493 = vlaneseq
        %v3494 = vshrl.u32 %v3493, 7
        %v3495 = vsub.s32 0, %v3494
        %v3496 = vrot.slane %v3434, %v3495
        %v3497 = vlaneseq
        %v3498 = vshrl.u32 %v3497, 7
        %v3499 = vsub.s32 0, %v3498
        %v3500 = vrot.slane %v3436, %v3499
        %3501 = vrot.lane.b32.xlu0 %v3440, 48
        %v3502 = vpop.permute.xlu0 %3501
        %3503 = vrot.lane.b32.xlu0 %v3444, 48
        %v3504 = vpop.permute.xlu0 %3503
        %3505 = vrot.lane.b32.xlu0 %v3448, 48
        %v3506 = vpop.permute.xlu0 %3505
        %3507 = vrot.lane.b32.xlu0 %v3452, 48
        %v3508 = vpop.permute.xlu0 %3507
        %3509 = vrot.lane.b32.xlu0 %v3456, 48
        %v3510 = vpop.permute.xlu0 %3509
        %3511 = vrot.lane.b32.xlu0 %v3460, 48
        %v3512 = vpop.permute.xlu0 %3511
        %3513 = vrot.lane.b32.xlu0 %v3464, 48
        %v3514 = vpop.permute.xlu0 %3513
        %3515 = vrot.lane.b32.xlu0 %v3468, 48
        %v3516 = vpop.permute.xlu0 %3515
        %3517 = vrot.lane.b32.xlu0 %v3472, 48
        %v3518 = vpop.permute.xlu0 %3517
        %3519 = vrot.lane.b32.xlu0 %v3476, 48
        %v3520 = vpop.permute.xlu0 %3519
        %3521 = vrot.lane.b32.xlu0 %v3480, 48
        %v3522 = vpop.permute.xlu0 %3521
        %3523 = vrot.lane.b32.xlu0 %v3484, 48
        %v3524 = vpop.permute.xlu0 %3523
        %3525 = vrot.lane.b32.xlu0 %v3488, 48
        %v3526 = vpop.permute.xlu0 %3525
        %3527 = vrot.lane.b32.xlu0 %v3492, 48
        %v3528 = vpop.permute.xlu0 %3527
        %3529 = vrot.lane.b32.xlu0 %v3496, 48
        %v3530 = vpop.permute.xlu0 %3529
        %3531 = vrot.lane.b32.xlu0 %v3500, 48
        %v3532 = vpop.permute.xlu0 %3531
        %3549 = vst.msk [vmem:[#allocation2 + $0xb] sm:$0x1] %vm1094, %v3502
        %3550 = vst.msk [vmem:[#allocation2 + $0x1b] sm:$0x1] %vm1094, %v3504
        %3551 = vst.msk [vmem:[#allocation2 + $0x2b] sm:$0x1] %vm1094, %v3506
        %3552 = vst.msk [vmem:[#allocation2 + $0x3b] sm:$0x1] %vm1094, %v3508
        %3553 = vst.msk [vmem:[#allocation2 + $0x4b] sm:$0x1] %vm1094, %v3510
        %3554 = vst.msk [vmem:[#allocation2 + $0x5b] sm:$0x1] %vm1094, %v3512
        %3555 = vst.msk [vmem:[#allocation2 + $0x6b] sm:$0x1] %vm1094, %v3514
        %3556 = vst.msk [vmem:[#allocation2 + $0x7b] sm:$0x1] %vm1094, %v3516
        %3557 = vst.msk [vmem:[#allocation2 + $0x8b] sm:$0x1] %vm1094, %v3518
        %3558 = vst.msk [vmem:[#allocation2 + $0x9b] sm:$0x1] %vm1094, %v3520
        %3559 = vst.msk [vmem:[#allocation2 + $0xab] sm:$0x1] %vm1094, %v3522
        %3560 = vst.msk [vmem:[#allocation2 + $0xbb] sm:$0x1] %vm1094, %v3524
        %3561 = vst.msk [vmem:[#allocation2 + $0xcb] sm:$0x1] %vm1094, %v3526
        %3562 = vst.msk [vmem:[#allocation2 + $0xdb] sm:$0x1] %vm1094, %v3528
        %3563 = vst.msk [vmem:[#allocation2 + $0xeb] sm:$0x1] %vm1094, %v3530
        %3564 = vst.msk [vmem:[#allocation2 + $0xfb] sm:$0x1] %vm1094, %v3532
        %3567 = vrot.lane.b32.xlu0 %v1403, 112
        %v3568 = vpop.permute.xlu0 %3567
        %3569 = vrot.lane.b32.xlu0 %v1404, 112
        %v3570 = vpop.permute.xlu0 %3569
        %v3573 = vadd.f32 %v1405, %v3568
        %v3574 = vadd.f32 %v1406, %v3570
        %v3577 = vcombine.high %v3573, %v3573
        %v3579 = vunpack.c.l.s4 1966171168
        %v3580 = vunpack.c.0.s8 %v3579
        %v3581 = vlaneseq
        %v3582 = vshrl.u32 %v3581, 7
        %v3583 = vsub.s32 %v3580, %v3582
        %v3584 = vrot.slane %v3573, %v3583
        %v3586 = vunpack.c.l.s4 1966171168
        %v3587 = vunpack.c.0.s8 %v3586
        %v3588 = vlaneseq
        %v3589 = vshrl.u32 %v3588, 7
        %v3590 = vsub.s32 %v3587, %v3589
        %v3591 = vrot.slane %v3577, %v3590
        %v3592 = vcombine.high %v3584, %v3584
        %v3593 = vcombine.high %v3591, %v3591
        %v3595 = vunpack.c.l.s4 1966171168
        %v3596 = vunpack.c.0.s8 %v3595
        %v3597 = vlaneseq
        %v3598 = vshrl.u32 %v3597, 7
        %v3599 = vsub.s32 %v3596, %v3598
        %v3600 = vrot.slane %v3584, %v3599
        %v3602 = vunpack.c.l.s4 1966171168
        %v3603 = vunpack.c.0.s8 %v3602
        %v3604 = vlaneseq
        %v3605 = vshrl.u32 %v3604, 7
        %v3606 = vsub.s32 %v3603, %v3605
        %v3607 = vrot.slane %v3591, %v3606
        %v3609 = vunpack.c.l.s4 1966171168
        %v3610 = vunpack.c.0.s8 %v3609
        %v3611 = vlaneseq
        %v3612 = vshrl.u32 %v3611, 7
        %v3613 = vsub.s32 %v3610, %v3612
        %v3614 = vrot.slane %v3592, %v3613
        %v3616 = vunpack.c.l.s4 1966171168
        %v3617 = vunpack.c.0.s8 %v3616
        %v3618 = vlaneseq
        %v3619 = vshrl.u32 %v3618, 7
        %v3620 = vsub.s32 %v3617, %v3619
        %v3621 = vrot.slane %v3593, %v3620
        %v3622 = vcombine.high %v3600, %v3600
        %v3623 = vcombine.high %v3607, %v3607
        %v3624 = vcombine.high %v3614, %v3614
        %v3625 = vcombine.high %v3621, %v3621
        %v3626 = vcombine.high %v3574, %v3574
        %v3628 = vunpack.c.l.s4 1966171168
        %v3629 = vunpack.c.0.s8 %v3628
        %v3630 = vlaneseq
        %v3631 = vshrl.u32 %v3630, 7
        %v3632 = vsub.s32 %v3629, %v3631
        %v3633 = vrot.slane %v3574, %v3632
        %v3635 = vunpack.c.l.s4 1966171168
        %v3636 = vunpack.c.0.s8 %v3635
        %v3637 = vlaneseq
        %v3638 = vshrl.u32 %v3637, 7
        %v3639 = vsub.s32 %v3636, %v3638
        %v3640 = vrot.slane %v3626, %v3639
        %v3641 = vcombine.high %v3633, %v3633
        %v3642 = vcombine.high %v3640, %v3640
        %v3644 = vunpack.c.l.s4 1966171168
        %v3645 = vunpack.c.0.s8 %v3644
        %v3646 = vlaneseq
        %v3647 = vshrl.u32 %v3646, 7
        %v3648 = vsub.s32 %v3645, %v3647
        %v3649 = vrot.slane %v3633, %v3648
        %v3651 = vunpack.c.l.s4 1966171168
        %v3652 = vunpack.c.0.s8 %v3651
        %v3653 = vlaneseq
        %v3654 = vshrl.u32 %v3653, 7
        %v3655 = vsub.s32 %v3652, %v3654
        %v3656 = vrot.slane %v3640, %v3655
        %v3658 = vunpack.c.l.s4 1966171168
        %v3659 = vunpack.c.0.s8 %v3658
        %v3660 = vlaneseq
        %v3661 = vshrl.u32 %v3660, 7
        %v3662 = vsub.s32 %v3659, %v3661
        %v3663 = vrot.slane %v3641, %v3662
        %v3665 = vunpack.c.l.s4 1966171168
        %v3666 = vunpack.c.0.s8 %v3665
        %v3667 = vlaneseq
        %v3668 = vshrl.u32 %v3667, 7
        %v3669 = vsub.s32 %v3666, %v3668
        %v3670 = vrot.slane %v3642, %v3669
        %v3671 = vcombine.high %v3649, %v3649
        %v3672 = vcombine.high %v3656, %v3656
        %v3673 = vcombine.high %v3663, %v3663
        %v3674 = vcombine.high %v3670, %v3670
        %v3675 = vlaneseq
        %v3676 = vshrl.u32 %v3675, 7
        %v3677 = vsub.s32 0, %v3676
        %v3678 = vrot.slane %v3600, %v3677
        %v3679 = vlaneseq
        %v3680 = vshrl.u32 %v3679, 7
        %v3681 = vsub.s32 0, %v3680
        %v3682 = vrot.slane %v3614, %v3681
        %v3683 = vlaneseq
        %v3684 = vshrl.u32 %v3683, 7
        %v3685 = vsub.s32 0, %v3684
        %v3686 = vrot.slane %v3622, %v3685
        %v3687 = vlaneseq
        %v3688 = vshrl.u32 %v3687, 7
        %v3689 = vsub.s32 0, %v3688
        %v3690 = vrot.slane %v3624, %v3689
        %v3691 = vlaneseq
        %v3692 = vshrl.u32 %v3691, 7
        %v3693 = vsub.s32 0, %v3692
        %v3694 = vrot.slane %v3607, %v3693
        %v3695 = vlaneseq
        %v3696 = vshrl.u32 %v3695, 7
        %v3697 = vsub.s32 0, %v3696
        %v3698 = vrot.slane %v3621, %v3697
        %v3699 = vlaneseq
        %v3700 = vshrl.u32 %v3699, 7
        %v3701 = vsub.s32 0, %v3700
        %v3702 = vrot.slane %v3623, %v3701
        %v3703 = vlaneseq
        %v3704 = vshrl.u32 %v3703, 7
        %v3705 = vsub.s32 0, %v3704
        %v3706 = vrot.slane %v3625, %v3705
        %v3707 = vlaneseq
        %v3708 = vshrl.u32 %v3707, 7
        %v3709 = vsub.s32 0, %v3708
        %v3710 = vrot.slane %v3649, %v3709
        %v3711 = vlaneseq
        %v3712 = vshrl.u32 %v3711, 7
        %v3713 = vsub.s32 0, %v3712
        %v3714 = vrot.slane %v3663, %v3713
        %v3715 = vlaneseq
        %v3716 = vshrl.u32 %v3715, 7
        %v3717 = vsub.s32 0, %v3716
        %v3718 = vrot.slane %v3671, %v3717
        %v3719 = vlaneseq
        %v3720 = vshrl.u32 %v3719, 7
        %v3721 = vsub.s32 0, %v3720
        %v3722 = vrot.slane %v3673, %v3721
        %v3723 = vlaneseq
        %v3724 = vshrl.u32 %v3723, 7
        %v3725 = vsub.s32 0, %v3724
        %v3726 = vrot.slane %v3656, %v3725
        %v3727 = vlaneseq
        %v3728 = vshrl.u32 %v3727, 7
        %v3729 = vsub.s32 0, %v3728
        %v3730 = vrot.slane %v3670, %v3729
        %v3731 = vlaneseq
        %v3732 = vshrl.u32 %v3731, 7
        %v3733 = vsub.s32 0, %v3732
        %v3734 = vrot.slane %v3672, %v3733
        %v3735 = vlaneseq
        %v3736 = vshrl.u32 %v3735, 7
        %v3737 = vsub.s32 0, %v3736
        %v3738 = vrot.slane %v3674, %v3737
        %3739 = vrot.lane.b32.xlu0 %v3678, 48
        %v3740 = vpop.permute.xlu0 %3739
        %3741 = vrot.lane.b32.xlu0 %v3682, 48
        %v3742 = vpop.permute.xlu0 %3741
        %3743 = vrot.lane.b32.xlu0 %v3686, 48
        %v3744 = vpop.permute.xlu0 %3743
        %3745 = vrot.lane.b32.xlu0 %v3690, 48
        %v3746 = vpop.permute.xlu0 %3745
        %3747 = vrot.lane.b32.xlu0 %v3694, 48
        %v3748 = vpop.permute.xlu0 %3747
        %3749 = vrot.lane.b32.xlu0 %v3698, 48
        %v3750 = vpop.permute.xlu0 %3749
        %3751 = vrot.lane.b32.xlu0 %v3702, 48
        %v3752 = vpop.permute.xlu0 %3751
        %3753 = vrot.lane.b32.xlu0 %v3706, 48
        %v3754 = vpop.permute.xlu0 %3753
        %3755 = vrot.lane.b32.xlu0 %v3710, 48
        %v3756 = vpop.permute.xlu0 %3755
        %3757 = vrot.lane.b32.xlu0 %v3714, 48
        %v3758 = vpop.permute.xlu0 %3757
        %3759 = vrot.lane.b32.xlu0 %v3718, 48
        %v3760 = vpop.permute.xlu0 %3759
        %3761 = vrot.lane.b32.xlu0 %v3722, 48
        %v3762 = vpop.permute.xlu0 %3761
        %3763 = vrot.lane.b32.xlu0 %v3726, 48
        %v3764 = vpop.permute.xlu0 %3763
        %3765 = vrot.lane.b32.xlu0 %v3730, 48
        %v3766 = vpop.permute.xlu0 %3765
        %3767 = vrot.lane.b32.xlu0 %v3734, 48
        %v3768 = vpop.permute.xlu0 %3767
        %3769 = vrot.lane.b32.xlu0 %v3738, 48
        %v3770 = vpop.permute.xlu0 %3769
        %3787 = vst.msk [vmem:[#allocation2 + $0xc] sm:$0x1] %vm1094, %v3740
        %3788 = vst.msk [vmem:[#allocation2 + $0x1c] sm:$0x1] %vm1094, %v3742
        %3789 = vst.msk [vmem:[#allocation2 + $0x2c] sm:$0x1] %vm1094, %v3744
        %3790 = vst.msk [vmem:[#allocation2 + $0x3c] sm:$0x1] %vm1094, %v3746
        %3791 = vst.msk [vmem:[#allocation2 + $0x4c] sm:$0x1] %vm1094, %v3748
        %3792 = vst.msk [vmem:[#allocation2 + $0x5c] sm:$0x1] %vm1094, %v3750
        %3793 = vst.msk [vmem:[#allocation2 + $0x6c] sm:$0x1] %vm1094, %v3752
        %3794 = vst.msk [vmem:[#allocation2 + $0x7c] sm:$0x1] %vm1094, %v3754
        %3795 = vst.msk [vmem:[#allocation2 + $0x8c] sm:$0x1] %vm1094, %v3756
        %3796 = vst.msk [vmem:[#allocation2 + $0x9c] sm:$0x1] %vm1094, %v3758
        %3797 = vst.msk [vmem:[#allocation2 + $0xac] sm:$0x1] %vm1094, %v3760
        %3798 = vst.msk [vmem:[#allocation2 + $0xbc] sm:$0x1] %vm1094, %v3762
        %3799 = vst.msk [vmem:[#allocation2 + $0xcc] sm:$0x1] %vm1094, %v3764
        %3800 = vst.msk [vmem:[#allocation2 + $0xdc] sm:$0x1] %vm1094, %v3766
        %3801 = vst.msk [vmem:[#allocation2 + $0xec] sm:$0x1] %vm1094, %v3768
        %3802 = vst.msk [vmem:[#allocation2 + $0xfc] sm:$0x1] %vm1094, %v3770
        %3805 = vrot.lane.b32.xlu0 %v1257, 112
        %v3806 = vpop.permute.xlu0 %3805
        %3807 = vrot.lane.b32.xlu0 %v1258, 112
        %v3808 = vpop.permute.xlu0 %3807
        %v3811 = vadd.f32 %v1259, %v3806
        %v3812 = vadd.f32 %v1260, %v3808
        %v3815 = vcombine.high %v3811, %v3811
        %v3817 = vunpack.c.l.s4 1966171168
        %v3818 = vunpack.c.0.s8 %v3817
        %v3819 = vlaneseq
        %v3820 = vshrl.u32 %v3819, 7
        %v3821 = vsub.s32 %v3818, %v3820
        %v3822 = vrot.slane %v3811, %v3821
        %v3824 = vunpack.c.l.s4 1966171168
        %v3825 = vunpack.c.0.s8 %v3824
        %v3826 = vlaneseq
        %v3827 = vshrl.u32 %v3826, 7
        %v3828 = vsub.s32 %v3825, %v3827
        %v3829 = vrot.slane %v3815, %v3828
        %v3830 = vcombine.high %v3822, %v3822
        %v3831 = vcombine.high %v3829, %v3829
        %v3833 = vunpack.c.l.s4 1966171168
        %v3834 = vunpack.c.0.s8 %v3833
        %v3835 = vlaneseq
        %v3836 = vshrl.u32 %v3835, 7
        %v3837 = vsub.s32 %v3834, %v3836
        %v3838 = vrot.slane %v3822, %v3837
        %v3840 = vunpack.c.l.s4 1966171168
        %v3841 = vunpack.c.0.s8 %v3840
        %v3842 = vlaneseq
        %v3843 = vshrl.u32 %v3842, 7
        %v3844 = vsub.s32 %v3841, %v3843
        %v3845 = vrot.slane %v3829, %v3844
        %v3847 = vunpack.c.l.s4 1966171168
        %v3848 = vunpack.c.0.s8 %v3847
        %v3849 = vlaneseq
        %v3850 = vshrl.u32 %v3849, 7
        %v3851 = vsub.s32 %v3848, %v3850
        %v3852 = vrot.slane %v3830, %v3851
        %v3854 = vunpack.c.l.s4 1966171168
        %v3855 = vunpack.c.0.s8 %v3854
        %v3856 = vlaneseq
        %v3857 = vshrl.u32 %v3856, 7
        %v3858 = vsub.s32 %v3855, %v3857
        %v3859 = vrot.slane %v3831, %v3858
        %v3860 = vcombine.high %v3838, %v3838
        %v3861 = vcombine.high %v3845, %v3845
        %v3862 = vcombine.high %v3852, %v3852
        %v3863 = vcombine.high %v3859, %v3859
        %v3864 = vcombine.high %v3812, %v3812
        %v3866 = vunpack.c.l.s4 1966171168
        %v3867 = vunpack.c.0.s8 %v3866
        %v3868 = vlaneseq
        %v3869 = vshrl.u32 %v3868, 7
        %v3870 = vsub.s32 %v3867, %v3869
        %v3871 = vrot.slane %v3812, %v3870
        %v3873 = vunpack.c.l.s4 1966171168
        %v3874 = vunpack.c.0.s8 %v3873
        %v3875 = vlaneseq
        %v3876 = vshrl.u32 %v3875, 7
        %v3877 = vsub.s32 %v3874, %v3876
        %v3878 = vrot.slane %v3864, %v3877
        %v3879 = vcombine.high %v3871, %v3871
        %v3880 = vcombine.high %v3878, %v3878
        %v3882 = vunpack.c.l.s4 1966171168
        %v3883 = vunpack.c.0.s8 %v3882
        %v3884 = vlaneseq
        %v3885 = vshrl.u32 %v3884, 7
        %v3886 = vsub.s32 %v3883, %v3885
        %v3887 = vrot.slane %v3871, %v3886
        %v3889 = vunpack.c.l.s4 1966171168
        %v3890 = vunpack.c.0.s8 %v3889
        %v3891 = vlaneseq
        %v3892 = vshrl.u32 %v3891, 7
        %v3893 = vsub.s32 %v3890, %v3892
        %v3894 = vrot.slane %v3878, %v3893
        %v3896 = vunpack.c.l.s4 1966171168
        %v3897 = vunpack.c.0.s8 %v3896
        %v3898 = vlaneseq
        %v3899 = vshrl.u32 %v3898, 7
        %v3900 = vsub.s32 %v3897, %v3899
        %v3901 = vrot.slane %v3879, %v3900
        %v3903 = vunpack.c.l.s4 1966171168
        %v3904 = vunpack.c.0.s8 %v3903
        %v3905 = vlaneseq
        %v3906 = vshrl.u32 %v3905, 7
        %v3907 = vsub.s32 %v3904, %v3906
        %v3908 = vrot.slane %v3880, %v3907
        %v3909 = vcombine.high %v3887, %v3887
        %v3910 = vcombine.high %v3894, %v3894
        %v3911 = vcombine.high %v3901, %v3901
        %v3912 = vcombine.high %v3908, %v3908
        %v3913 = vlaneseq
        %v3914 = vshrl.u32 %v3913, 7
        %v3915 = vsub.s32 0, %v3914
        %v3916 = vrot.slane %v3838, %v3915
        %v3917 = vlaneseq
        %v3918 = vshrl.u32 %v3917, 7
        %v3919 = vsub.s32 0, %v3918
        %v3920 = vrot.slane %v3852, %v3919
        %v3921 = vlaneseq
        %v3922 = vshrl.u32 %v3921, 7
        %v3923 = vsub.s32 0, %v3922
        %v3924 = vrot.slane %v3860, %v3923
        %v3925 = vlaneseq
        %v3926 = vshrl.u32 %v3925, 7
        %v3927 = vsub.s32 0, %v3926
        %v3928 = vrot.slane %v3862, %v3927
        %v3929 = vlaneseq
        %v3930 = vshrl.u32 %v3929, 7
        %v3931 = vsub.s32 0, %v3930
        %v3932 = vrot.slane %v3845, %v3931
        %v3933 = vlaneseq
        %v3934 = vshrl.u32 %v3933, 7
        %v3935 = vsub.s32 0, %v3934
        %v3936 = vrot.slane %v3859, %v3935
        %v3937 = vlaneseq
        %v3938 = vshrl.u32 %v3937, 7
        %v3939 = vsub.s32 0, %v3938
        %v3940 = vrot.slane %v3861, %v3939
        %v3941 = vlaneseq
        %v3942 = vshrl.u32 %v3941, 7
        %v3943 = vsub.s32 0, %v3942
        %v3944 = vrot.slane %v3863, %v3943
        %v3945 = vlaneseq
        %v3946 = vshrl.u32 %v3945, 7
        %v3947 = vsub.s32 0, %v3946
        %v3948 = vrot.slane %v3887, %v3947
        %v3949 = vlaneseq
        %v3950 = vshrl.u32 %v3949, 7
        %v3951 = vsub.s32 0, %v3950
        %v3952 = vrot.slane %v3901, %v3951
        %v3953 = vlaneseq
        %v3954 = vshrl.u32 %v3953, 7
        %v3955 = vsub.s32 0, %v3954
        %v3956 = vrot.slane %v3909, %v3955
        %v3957 = vlaneseq
        %v3958 = vshrl.u32 %v3957, 7
        %v3959 = vsub.s32 0, %v3958
        %v3960 = vrot.slane %v3911, %v3959
        %v3961 = vlaneseq
        %v3962 = vshrl.u32 %v3961, 7
        %v3963 = vsub.s32 0, %v3962
        %v3964 = vrot.slane %v3894, %v3963
        %v3965 = vlaneseq
        %v3966 = vshrl.u32 %v3965, 7
        %v3967 = vsub.s32 0, %v3966
        %v3968 = vrot.slane %v3908, %v3967
        %v3969 = vlaneseq
        %v3970 = vshrl.u32 %v3969, 7
        %v3971 = vsub.s32 0, %v3970
        %v3972 = vrot.slane %v3910, %v3971
        %v3973 = vlaneseq
        %v3974 = vshrl.u32 %v3973, 7
        %v3975 = vsub.s32 0, %v3974
        %v3976 = vrot.slane %v3912, %v3975
        %3977 = vrot.lane.b32.xlu0 %v3916, 32
        %v3978 = vpop.permute.xlu0 %3977
        %3979 = vrot.lane.b32.xlu0 %v3920, 32
        %v3980 = vpop.permute.xlu0 %3979
        %3981 = vrot.lane.b32.xlu0 %v3924, 32
        %v3982 = vpop.permute.xlu0 %3981
        %3983 = vrot.lane.b32.xlu0 %v3928, 32
        %v3984 = vpop.permute.xlu0 %3983
        %3985 = vrot.lane.b32.xlu0 %v3932, 32
        %v3986 = vpop.permute.xlu0 %3985
        %3987 = vrot.lane.b32.xlu0 %v3936, 32
        %v3988 = vpop.permute.xlu0 %3987
        %3989 = vrot.lane.b32.xlu0 %v3940, 32
        %v3990 = vpop.permute.xlu0 %3989
        %3991 = vrot.lane.b32.xlu0 %v3944, 32
        %v3992 = vpop.permute.xlu0 %3991
        %3993 = vrot.lane.b32.xlu0 %v3948, 32
        %v3994 = vpop.permute.xlu0 %3993
        %3995 = vrot.lane.b32.xlu0 %v3952, 32
        %v3996 = vpop.permute.xlu0 %3995
        %3997 = vrot.lane.b32.xlu0 %v3956, 32
        %v3998 = vpop.permute.xlu0 %3997
        %3999 = vrot.lane.b32.xlu0 %v3960, 32
        %v4000 = vpop.permute.xlu0 %3999
        %4001 = vrot.lane.b32.xlu0 %v3964, 32
        %v4002 = vpop.permute.xlu0 %4001
        %4003 = vrot.lane.b32.xlu0 %v3968, 32
        %v4004 = vpop.permute.xlu0 %4003
        %4005 = vrot.lane.b32.xlu0 %v3972, 32
        %v4006 = vpop.permute.xlu0 %4005
        %4007 = vrot.lane.b32.xlu0 %v3976, 32
        %v4008 = vpop.permute.xlu0 %4007
        %4025 = vst.msk [vmem:[#allocation2 + $0xd] sm:$0x1] %vm1094, %v3978
        %4026 = vst.msk [vmem:[#allocation2 + $0x1d] sm:$0x1] %vm1094, %v3980
        %4027 = vst.msk [vmem:[#allocation2 + $0x2d] sm:$0x1] %vm1094, %v3982
        %4028 = vst.msk [vmem:[#allocation2 + $0x3d] sm:$0x1] %vm1094, %v3984
        %4029 = vst.msk [vmem:[#allocation2 + $0x4d] sm:$0x1] %vm1094, %v3986
        %4030 = vst.msk [vmem:[#allocation2 + $0x5d] sm:$0x1] %vm1094, %v3988
        %4031 = vst.msk [vmem:[#allocation2 + $0x6d] sm:$0x1] %vm1094, %v3990
        %4032 = vst.msk [vmem:[#allocation2 + $0x7d] sm:$0x1] %vm1094, %v3992
        %4033 = vst.msk [vmem:[#allocation2 + $0x8d] sm:$0x1] %vm1094, %v3994
        %4034 = vst.msk [vmem:[#allocation2 + $0x9d] sm:$0x1] %vm1094, %v3996
        %4035 = vst.msk [vmem:[#allocation2 + $0xad] sm:$0x1] %vm1094, %v3998
        %4036 = vst.msk [vmem:[#allocation2 + $0xbd] sm:$0x1] %vm1094, %v4000
        %4037 = vst.msk [vmem:[#allocation2 + $0xcd] sm:$0x1] %vm1094, %v4002
        %4038 = vst.msk [vmem:[#allocation2 + $0xdd] sm:$0x1] %vm1094, %v4004
        %4039 = vst.msk [vmem:[#allocation2 + $0xed] sm:$0x1] %vm1094, %v4006
        %4040 = vst.msk [vmem:[#allocation2 + $0xfd] sm:$0x1] %vm1094, %v4008
        %4043 = vrot.lane.b32.xlu0 %v1111, 112
        %v4044 = vpop.permute.xlu0 %4043
        %4045 = vrot.lane.b32.xlu0 %v1112, 112
        %v4046 = vpop.permute.xlu0 %4045
        %v4049 = vadd.f32 %v1113, %v4044
        %v4050 = vadd.f32 %v1114, %v4046
        %v4053 = vcombine.high %v4049, %v4049
        %v4055 = vunpack.c.l.s4 1966171168
        %v4056 = vunpack.c.0.s8 %v4055
        %v4057 = vlaneseq
        %v4058 = vshrl.u32 %v4057, 7
        %v4059 = vsub.s32 %v4056, %v4058
        %v4060 = vrot.slane %v4049, %v4059
        %v4062 = vunpack.c.l.s4 1966171168
        %v4063 = vunpack.c.0.s8 %v4062
        %v4064 = vlaneseq
        %v4065 = vshrl.u32 %v4064, 7
        %v4066 = vsub.s32 %v4063, %v4065
        %v4067 = vrot.slane %v4053, %v4066
        %v4068 = vcombine.high %v4060, %v4060
        %v4069 = vcombine.high %v4067, %v4067
        %v4071 = vunpack.c.l.s4 1966171168
        %v4072 = vunpack.c.0.s8 %v4071
        %v4073 = vlaneseq
        %v4074 = vshrl.u32 %v4073, 7
        %v4075 = vsub.s32 %v4072, %v4074
        %v4076 = vrot.slane %v4060, %v4075
        %v4078 = vunpack.c.l.s4 1966171168
        %v4079 = vunpack.c.0.s8 %v4078
        %v4080 = vlaneseq
        %v4081 = vshrl.u32 %v4080, 7
        %v4082 = vsub.s32 %v4079, %v4081
        %v4083 = vrot.slane %v4067, %v4082
        %v4085 = vunpack.c.l.s4 1966171168
        %v4086 = vunpack.c.0.s8 %v4085
        %v4087 = vlaneseq
        %v4088 = vshrl.u32 %v4087, 7
        %v4089 = vsub.s32 %v4086, %v4088
        %v4090 = vrot.slane %v4068, %v4089
        %v4092 = vunpack.c.l.s4 1966171168
        %v4093 = vunpack.c.0.s8 %v4092
        %v4094 = vlaneseq
        %v4095 = vshrl.u32 %v4094, 7
        %v4096 = vsub.s32 %v4093, %v4095
        %v4097 = vrot.slane %v4069, %v4096
        %v4098 = vcombine.high %v4076, %v4076
        %v4099 = vcombine.high %v4083, %v4083
        %v4100 = vcombine.high %v4090, %v4090
        %v4101 = vcombine.high %v4097, %v4097
        %v4102 = vcombine.high %v4050, %v4050
        %v4104 = vunpack.c.l.s4 1966171168
        %v4105 = vunpack.c.0.s8 %v4104
        %v4106 = vlaneseq
        %v4107 = vshrl.u32 %v4106, 7
        %v4108 = vsub.s32 %v4105, %v4107
        %v4109 = vrot.slane %v4050, %v4108
        %v4111 = vunpack.c.l.s4 1966171168
        %v4112 = vunpack.c.0.s8 %v4111
        %v4113 = vlaneseq
        %v4114 = vshrl.u32 %v4113, 7
        %v4115 = vsub.s32 %v4112, %v4114
        %v4116 = vrot.slane %v4102, %v4115
        %v4117 = vcombine.high %v4109, %v4109
        %v4118 = vcombine.high %v4116, %v4116
        %v4120 = vunpack.c.l.s4 1966171168
        %v4121 = vunpack.c.0.s8 %v4120
        %v4122 = vlaneseq
        %v4123 = vshrl.u32 %v4122, 7
        %v4124 = vsub.s32 %v4121, %v4123
        %v4125 = vrot.slane %v4109, %v4124
        %v4127 = vunpack.c.l.s4 1966171168
        %v4128 = vunpack.c.0.s8 %v4127
        %v4129 = vlaneseq
        %v4130 = vshrl.u32 %v4129, 7
        %v4131 = vsub.s32 %v4128, %v4130
        %v4132 = vrot.slane %v4116, %v4131
        %v4134 = vunpack.c.l.s4 1966171168
        %v4135 = vunpack.c.0.s8 %v4134
        %v4136 = vlaneseq
        %v4137 = vshrl.u32 %v4136, 7
        %v4138 = vsub.s32 %v4135, %v4137
        %v4139 = vrot.slane %v4117, %v4138
        %v4141 = vunpack.c.l.s4 1966171168
        %v4142 = vunpack.c.0.s8 %v4141
        %v4143 = vlaneseq
        %v4144 = vshrl.u32 %v4143, 7
        %v4145 = vsub.s32 %v4142, %v4144
        %v4146 = vrot.slane %v4118, %v4145
        %v4147 = vcombine.high %v4125, %v4125
        %v4148 = vcombine.high %v4132, %v4132
        %v4149 = vcombine.high %v4139, %v4139
        %v4150 = vcombine.high %v4146, %v4146
        %v4151 = vlaneseq
        %v4152 = vshrl.u32 %v4151, 7
        %v4153 = vsub.s32 0, %v4152
        %v4154 = vrot.slane %v4076, %v4153
        %v4155 = vlaneseq
        %v4156 = vshrl.u32 %v4155, 7
        %v4157 = vsub.s32 0, %v4156
        %v4158 = vrot.slane %v4090, %v4157
        %v4159 = vlaneseq
        %v4160 = vshrl.u32 %v4159, 7
        %v4161 = vsub.s32 0, %v4160
        %v4162 = vrot.slane %v4098, %v4161
        %v4163 = vlaneseq
        %v4164 = vshrl.u32 %v4163, 7
        %v4165 = vsub.s32 0, %v4164
        %v4166 = vrot.slane %v4100, %v4165
        %v4167 = vlaneseq
        %v4168 = vshrl.u32 %v4167, 7
        %v4169 = vsub.s32 0, %v4168
        %v4170 = vrot.slane %v4083, %v4169
        %v4171 = vlaneseq
        %v4172 = vshrl.u32 %v4171, 7
        %v4173 = vsub.s32 0, %v4172
        %v4174 = vrot.slane %v4097, %v4173
        %v4175 = vlaneseq
        %v4176 = vshrl.u32 %v4175, 7
        %v4177 = vsub.s32 0, %v4176
        %v4178 = vrot.slane %v4099, %v4177
        %v4179 = vlaneseq
        %v4180 = vshrl.u32 %v4179, 7
        %v4181 = vsub.s32 0, %v4180
        %v4182 = vrot.slane %v4101, %v4181
        %v4183 = vlaneseq
        %v4184 = vshrl.u32 %v4183, 7
        %v4185 = vsub.s32 0, %v4184
        %v4186 = vrot.slane %v4125, %v4185
        %v4187 = vlaneseq
        %v4188 = vshrl.u32 %v4187, 7
        %v4189 = vsub.s32 0, %v4188
        %v4190 = vrot.slane %v4139, %v4189
        %v4191 = vlaneseq
        %v4192 = vshrl.u32 %v4191, 7
        %v4193 = vsub.s32 0, %v4192
        %v4194 = vrot.slane %v4147, %v4193
        %v4195 = vlaneseq
        %v4196 = vshrl.u32 %v4195, 7
        %v4197 = vsub.s32 0, %v4196
        %v4198 = vrot.slane %v4149, %v4197
        %v4199 = vlaneseq
        %v4200 = vshrl.u32 %v4199, 7
        %v4201 = vsub.s32 0, %v4200
        %v4202 = vrot.slane %v4132, %v4201
        %v4203 = vlaneseq
        %v4204 = vshrl.u32 %v4203, 7
        %v4205 = vsub.s32 0, %v4204
        %v4206 = vrot.slane %v4146, %v4205
        %v4207 = vlaneseq
        %v4208 = vshrl.u32 %v4207, 7
        %v4209 = vsub.s32 0, %v4208
        %v4210 = vrot.slane %v4148, %v4209
        %v4211 = vlaneseq
        %v4212 = vshrl.u32 %v4211, 7
        %v4213 = vsub.s32 0, %v4212
        %v4214 = vrot.slane %v4150, %v4213
        %4215 = vrot.lane.b32.xlu0 %v4154, 32
        %v4216 = vpop.permute.xlu0 %4215
        %4217 = vrot.lane.b32.xlu0 %v4158, 32
        %v4218 = vpop.permute.xlu0 %4217
        %4219 = vrot.lane.b32.xlu0 %v4162, 32
        %v4220 = vpop.permute.xlu0 %4219
        %4221 = vrot.lane.b32.xlu0 %v4166, 32
        %v4222 = vpop.permute.xlu0 %4221
        %4223 = vrot.lane.b32.xlu0 %v4170, 32
        %v4224 = vpop.permute.xlu0 %4223
        %4225 = vrot.lane.b32.xlu0 %v4174, 32
        %v4226 = vpop.permute.xlu0 %4225
        %4227 = vrot.lane.b32.xlu0 %v4178, 32
        %v4228 = vpop.permute.xlu0 %4227
        %4229 = vrot.lane.b32.xlu0 %v4182, 32
        %v4230 = vpop.permute.xlu0 %4229
        %4231 = vrot.lane.b32.xlu0 %v4186, 32
        %v4232 = vpop.permute.xlu0 %4231
        %4233 = vrot.lane.b32.xlu0 %v4190, 32
        %v4234 = vpop.permute.xlu0 %4233
        %4235 = vrot.lane.b32.xlu0 %v4194, 32
        %v4236 = vpop.permute.xlu0 %4235
        %4237 = vrot.lane.b32.xlu0 %v4198, 32
        %v4238 = vpop.permute.xlu0 %4237
        %4239 = vrot.lane.b32.xlu0 %v4202, 32
        %v4240 = vpop.permute.xlu0 %4239
        %4241 = vrot.lane.b32.xlu0 %v4206, 32
        %v4242 = vpop.permute.xlu0 %4241
        %4243 = vrot.lane.b32.xlu0 %v4210, 32
        %v4244 = vpop.permute.xlu0 %4243
        %4245 = vrot.lane.b32.xlu0 %v4214, 32
        %v4246 = vpop.permute.xlu0 %4245
        %4263 = vst.msk [vmem:[#allocation2 + $0xe] sm:$0x1] %vm1094, %v4216
        %4264 = vst.msk [vmem:[#allocation2 + $0x1e] sm:$0x1] %vm1094, %v4218
        %4265 = vst.msk [vmem:[#allocation2 + $0x2e] sm:$0x1] %vm1094, %v4220
        %4266 = vst.msk [vmem:[#allocation2 + $0x3e] sm:$0x1] %vm1094, %v4222
        %4267 = vst.msk [vmem:[#allocation2 + $0x4e] sm:$0x1] %vm1094, %v4224
        %4268 = vst.msk [vmem:[#allocation2 + $0x5e] sm:$0x1] %vm1094, %v4226
        %4269 = vst.msk [vmem:[#allocation2 + $0x6e] sm:$0x1] %vm1094, %v4228
        %4270 = vst.msk [vmem:[#allocation2 + $0x7e] sm:$0x1] %vm1094, %v4230
        %4271 = vst.msk [vmem:[#allocation2 + $0x8e] sm:$0x1] %vm1094, %v4232
        %4272 = vst.msk [vmem:[#allocation2 + $0x9e] sm:$0x1] %vm1094, %v4234
        %4273 = vst.msk [vmem:[#allocation2 + $0xae] sm:$0x1] %vm1094, %v4236
        %4274 = vst.msk [vmem:[#allocation2 + $0xbe] sm:$0x1] %vm1094, %v4238
        %4275 = vst.msk [vmem:[#allocation2 + $0xce] sm:$0x1] %vm1094, %v4240
        %4276 = vst.msk [vmem:[#allocation2 + $0xde] sm:$0x1] %vm1094, %v4242
        %4277 = vst.msk [vmem:[#allocation2 + $0xee] sm:$0x1] %vm1094, %v4244
        %4278 = vst.msk [vmem:[#allocation2 + $0xfe] sm:$0x1] %vm1094, %v4246
        %v4279 = vlaneseq
        %v4280 = vshrl.u32 %v4279, 7
        %v4281 = vsub.s32 0, %v4280
        %v4282 = vrot.slane %v1003, %v4281
        %v4283 = vlaneseq
        %v4284 = vshrl.u32 %v4283, 7
        %v4285 = vsub.s32 0, %v4284
        %v4286 = vrot.slane %v1017, %v4285
        %v4287 = vlaneseq
        %v4288 = vshrl.u32 %v4287, 7
        %v4289 = vsub.s32 0, %v4288
        %v4290 = vrot.slane %v1025, %v4289
        %v4291 = vlaneseq
        %v4292 = vshrl.u32 %v4291, 7
        %v4293 = vsub.s32 0, %v4292
        %v4294 = vrot.slane %v1027, %v4293
        %v4295 = vlaneseq
        %v4296 = vshrl.u32 %v4295, 7
        %v4297 = vsub.s32 0, %v4296
        %v4298 = vrot.slane %v1010, %v4297
        %v4299 = vlaneseq
        %v4300 = vshrl.u32 %v4299, 7
        %v4301 = vsub.s32 0, %v4300
        %v4302 = vrot.slane %v1024, %v4301
        %v4303 = vlaneseq
        %v4304 = vshrl.u32 %v4303, 7
        %v4305 = vsub.s32 0, %v4304
        %v4306 = vrot.slane %v1026, %v4305
        %v4307 = vlaneseq
        %v4308 = vshrl.u32 %v4307, 7
        %v4309 = vsub.s32 0, %v4308
        %v4310 = vrot.slane %v1028, %v4309
        %v4311 = vlaneseq
        %v4312 = vshrl.u32 %v4311, 7
        %v4313 = vsub.s32 0, %v4312
        %v4314 = vrot.slane %v1052, %v4313
        %v4315 = vlaneseq
        %v4316 = vshrl.u32 %v4315, 7
        %v4317 = vsub.s32 0, %v4316
        %v4318 = vrot.slane %v1066, %v4317
        %v4319 = vlaneseq
        %v4320 = vshrl.u32 %v4319, 7
        %v4321 = vsub.s32 0, %v4320
        %v4322 = vrot.slane %v1074, %v4321
        %v4323 = vlaneseq
        %v4324 = vshrl.u32 %v4323, 7
        %v4325 = vsub.s32 0, %v4324
        %v4326 = vrot.slane %v1076, %v4325
        %v4327 = vlaneseq
        %v4328 = vshrl.u32 %v4327, 7
        %v4329 = vsub.s32 0, %v4328
        %v4330 = vrot.slane %v1059, %v4329
        %v4331 = vlaneseq
        %v4332 = vshrl.u32 %v4331, 7
        %v4333 = vsub.s32 0, %v4332
        %v4334 = vrot.slane %v1073, %v4333
        %v4335 = vlaneseq
        %v4336 = vshrl.u32 %v4335, 7
        %v4337 = vsub.s32 0, %v4336
        %v4338 = vrot.slane %v1075, %v4337
        %v4339 = vlaneseq
        %v4340 = vshrl.u32 %v4339, 7
        %v4341 = vsub.s32 0, %v4340
        %v4342 = vrot.slane %v1077, %v4341
        %4343 = vrot.lane.b32.xlu0 %v4282, 16
        %v4344 = vpop.permute.xlu0 %4343
        %4345 = vrot.lane.b32.xlu0 %v4286, 16
        %v4346 = vpop.permute.xlu0 %4345
        %4347 = vrot.lane.b32.xlu0 %v4290, 16
        %v4348 = vpop.permute.xlu0 %4347
        %4349 = vrot.lane.b32.xlu0 %v4294, 16
        %v4350 = vpop.permute.xlu0 %4349
        %4351 = vrot.lane.b32.xlu0 %v4298, 16
        %v4352 = vpop.permute.xlu0 %4351
        %4353 = vrot.lane.b32.xlu0 %v4302, 16
        %v4354 = vpop.permute.xlu0 %4353
        %4355 = vrot.lane.b32.xlu0 %v4306, 16
        %v4356 = vpop.permute.xlu0 %4355
        %4357 = vrot.lane.b32.xlu0 %v4310, 16
        %v4358 = vpop.permute.xlu0 %4357
        %4359 = vrot.lane.b32.xlu0 %v4314, 16
        %v4360 = vpop.permute.xlu0 %4359
        %4361 = vrot.lane.b32.xlu0 %v4318, 16
        %v4362 = vpop.permute.xlu0 %4361
        %4363 = vrot.lane.b32.xlu0 %v4322, 16
        %v4364 = vpop.permute.xlu0 %4363
        %4365 = vrot.lane.b32.xlu0 %v4326, 16
        %v4366 = vpop.permute.xlu0 %4365
        %4367 = vrot.lane.b32.xlu0 %v4330, 16
        %v4368 = vpop.permute.xlu0 %4367
        %4369 = vrot.lane.b32.xlu0 %v4334, 16
        %v4370 = vpop.permute.xlu0 %4369
        %4371 = vrot.lane.b32.xlu0 %v4338, 16
        %v4372 = vpop.permute.xlu0 %4371
        %4373 = vrot.lane.b32.xlu0 %v4342, 16
        %v4374 = vpop.permute.xlu0 %4373
        %4391 = vst.msk [vmem:[#allocation2 + $0xf] sm:$0x1] %vm1094, %v4344
        %4392 = vst.msk [vmem:[#allocation2 + $0x1f] sm:$0x1] %vm1094, %v4346
        %4393 = vst.msk [vmem:[#allocation2 + $0x2f] sm:$0x1] %vm1094, %v4348
        %4394 = vst.msk [vmem:[#allocation2 + $0x3f] sm:$0x1] %vm1094, %v4350
        %4395 = vst.msk [vmem:[#allocation2 + $0x4f] sm:$0x1] %vm1094, %v4352
        %4396 = vst.msk [vmem:[#allocation2 + $0x5f] sm:$0x1] %vm1094, %v4354
        %4397 = vst.msk [vmem:[#allocation2 + $0x6f] sm:$0x1] %vm1094, %v4356
        %4398 = vst.msk [vmem:[#allocation2 + $0x7f] sm:$0x1] %vm1094, %v4358
        %4399 = vst.msk [vmem:[#allocation2 + $0x8f] sm:$0x1] %vm1094, %v4360
        %4400 = vst.msk [vmem:[#allocation2 + $0x9f] sm:$0x1] %vm1094, %v4362
        %4401 = vst.msk [vmem:[#allocation2 + $0xaf] sm:$0x1] %vm1094, %v4364
        %4402 = vst.msk [vmem:[#allocation2 + $0xbf] sm:$0x1] %vm1094, %v4366
        %4403 = vst.msk [vmem:[#allocation2 + $0xcf] sm:$0x1] %vm1094, %v4368
        %4404 = vst.msk [vmem:[#allocation2 + $0xdf] sm:$0x1] %vm1094, %v4370
        %4405 = vst.msk [vmem:[#allocation2 + $0xef] sm:$0x1] %vm1094, %v4372
        %4406 = vst.msk [vmem:[#allocation2 + $0xff] sm:$0x1] %vm1094, %v4374
        %v4407 = vld [vmem:[#allocation2] sm:$0xff]
        %v4408 = vld [vmem:[#allocation2 + $0x8] sm:$0xff]
        %v4409 = vld [vmem:[#allocation2 + $0x10] sm:$0xff]
        %v4410 = vld [vmem:[#allocation2 + $0x18] sm:$0xff]
        %v4411 = vld [vmem:[#allocation2 + $0x20] sm:$0xff]
        %v4412 = vld [vmem:[#allocation2 + $0x28] sm:$0xff]
        %v4413 = vld [vmem:[#allocation2 + $0x30] sm:$0xff]
        %v4414 = vld [vmem:[#allocation2 + $0x38] sm:$0xff]
        %v4415 = vld [vmem:[#allocation2 + $0x40] sm:$0xff]
        %v4416 = vld [vmem:[#allocation2 + $0x48] sm:$0xff]
        %v4417 = vld [vmem:[#allocation2 + $0x50] sm:$0xff]
        %v4418 = vld [vmem:[#allocation2 + $0x58] sm:$0xff]
        %v4419 = vld [vmem:[#allocation2 + $0x60] sm:$0xff]
        %v4420 = vld [vmem:[#allocation2 + $0x68] sm:$0xff]
        %v4421 = vld [vmem:[#allocation2 + $0x70] sm:$0xff]
        %v4422 = vld [vmem:[#allocation2 + $0x78] sm:$0xff]
        %v4423 = vld [vmem:[#allocation2 + $0x80] sm:$0xff]
        %v4424 = vld [vmem:[#allocation2 + $0x88] sm:$0xff]
        %v4425 = vld [vmem:[#allocation2 + $0x90] sm:$0xff]
        %v4426 = vld [vmem:[#allocation2 + $0x98] sm:$0xff]
        %v4427 = vld [vmem:[#allocation2 + $0xa0] sm:$0xff]
        %v4428 = vld [vmem:[#allocation2 + $0xa8] sm:$0xff]
        %v4429 = vld [vmem:[#allocation2 + $0xb0] sm:$0xff]
        %v4430 = vld [vmem:[#allocation2 + $0xb8] sm:$0xff]
        %v4431 = vld [vmem:[#allocation2 + $0xc0] sm:$0xff]
        %v4432 = vld [vmem:[#allocation2 + $0xc8] sm:$0xff]
        %v4433 = vld [vmem:[#allocation2 + $0xd0] sm:$0xff]
        %v4434 = vld [vmem:[#allocation2 + $0xd8] sm:$0xff]
        %v4435 = vld [vmem:[#allocation2 + $0xe0] sm:$0xff]
        %v4436 = vld [vmem:[#allocation2 + $0xe8] sm:$0xff]
        %v4437 = vld [vmem:[#allocation2 + $0xf0] sm:$0xff]
        %v4438 = vld [vmem:[#allocation2 + $0xf8] sm:$0xff]
        %v4439 = vadd.f32 %v4407, %v736
        %v4440 = vadd.f32 %v4408, %v741
        %v4441 = vadd.f32 %v4409, %v746
        %v4442 = vadd.f32 %v4410, %v751
        %v4443 = vadd.f32 %v4411, %v756
        %v4444 = vadd.f32 %v4412, %v761
        %v4445 = vadd.f32 %v4413, %v766
        %v4446 = vadd.f32 %v4414, %v771
        %v4447 = vadd.f32 %v4415, %v776
        %v4448 = vadd.f32 %v4416, %v781
        %v4449 = vadd.f32 %v4417, %v786
        %v4450 = vadd.f32 %v4418, %v791
        %v4451 = vadd.f32 %v4419, %v796
        %v4452 = vadd.f32 %v4420, %v801
        %v4453 = vadd.f32 %v4421, %v806
        %v4454 = vadd.f32 %v4422, %v811
        %v4455 = vadd.f32 %v4423, %v816
        %v4456 = vadd.f32 %v4424, %v821
        %v4457 = vadd.f32 %v4425, %v826
        %v4458 = vadd.f32 %v4426, %v831
        %v4459 = vadd.f32 %v4427, %v836
        %v4460 = vadd.f32 %v4428, %v841
        %v4461 = vadd.f32 %v4429, %v846
        %v4462 = vadd.f32 %v4430, %v851
        %v4463 = vadd.f32 %v4431, %v856
        %v4464 = vadd.f32 %v4432, %v861
        %v4465 = vadd.f32 %v4433, %v866
        %v4466 = vadd.f32 %v4434, %v871
        %v4467 = vadd.f32 %v4435, %v876
        %v4468 = vadd.f32 %v4436, %v881
        %v4469 = vadd.f32 %v4437, %v886
        %v4470 = vadd.f32 %v4438, %v891
        %vm4471 = vcmask 130048
        %4472 = vst.msk [vmem:[%s416] sm:$0xff] %vm4471, %v4439
        %4473 = vst.msk [vmem:[%s416 + $0x8] sm:$0xff] %vm4471, %v4440
        %4474 = vst.msk [vmem:[%s416 + $0x10] sm:$0xff] %vm4471, %v4441
        %4475 = vst.msk [vmem:[%s416 + $0x18] sm:$0xff] %vm4471, %v4442
        %4476 = vst.msk [vmem:[%s416 + $0x20] sm:$0xff] %vm4471, %v4443
        %4477 = vst.msk [vmem:[%s416 + $0x28] sm:$0xff] %vm4471, %v4444
        %4478 = vst.msk [vmem:[%s416 + $0x30] sm:$0xff] %vm4471, %v4445
        %4479 = vst.msk [vmem:[%s416 + $0x38] sm:$0xff] %vm4471, %v4446
        %4480 = vst.msk [vmem:[%s416 + $0x40] sm:$0xff] %vm4471, %v4447
        %4481 = vst.msk [vmem:[%s416 + $0x48] sm:$0xff] %vm4471, %v4448
        %4482 = vst.msk [vmem:[%s416 + $0x50] sm:$0xff] %vm4471, %v4449
        %4483 = vst.msk [vmem:[%s416 + $0x58] sm:$0xff] %vm4471, %v4450
        %4484 = vst.msk [vmem:[%s416 + $0x60] sm:$0xff] %vm4471, %v4451
        %4485 = vst.msk [vmem:[%s416 + $0x68] sm:$0xff] %vm4471, %v4452
        %4486 = vst.msk [vmem:[%s416 + $0x70] sm:$0xff] %vm4471, %v4453
        %4487 = vst.msk [vmem:[%s416 + $0x78] sm:$0xff] %vm4471, %v4454
        %4488 = vst.msk [vmem:[%s416 + $0x80] sm:$0xff] %vm4471, %v4455
        %4489 = vst.msk [vmem:[%s416 + $0x88] sm:$0xff] %vm4471, %v4456
        %4490 = vst.msk [vmem:[%s416 + $0x90] sm:$0xff] %vm4471, %v4457
        %4491 = vst.msk [vmem:[%s416 + $0x98] sm:$0xff] %vm4471, %v4458
        %4492 = vst.msk [vmem:[%s416 + $0xa0] sm:$0xff] %vm4471, %v4459
        %4493 = vst.msk [vmem:[%s416 + $0xa8] sm:$0xff] %vm4471, %v4460
        %4494 = vst.msk [vmem:[%s416 + $0xb0] sm:$0xff] %vm4471, %v4461
        %4495 = vst.msk [vmem:[%s416 + $0xb8] sm:$0xff] %vm4471, %v4462
        %4496 = vst.msk [vmem:[%s416 + $0xc0] sm:$0xff] %vm4471, %v4463
        %4497 = vst.msk [vmem:[%s416 + $0xc8] sm:$0xff] %vm4471, %v4464
        %4498 = vst.msk [vmem:[%s416 + $0xd0] sm:$0xff] %vm4471, %v4465
        %4499 = vst.msk [vmem:[%s416 + $0xd8] sm:$0xff] %vm4471, %v4466
        %4500 = vst.msk [vmem:[%s416 + $0xe0] sm:$0xff] %vm4471, %v4467
        %4501 = vst.msk [vmem:[%s416 + $0xe8] sm:$0xff] %vm4471, %v4468
        %4502 = vst.msk [vmem:[%s416 + $0xf0] sm:$0xff] %vm4471, %v4469
        %4503 = vst.msk [vmem:[%s416 + $0xf8] sm:$0xff] %vm4471, %v4470
        %v4504 = vsel %vm4471, %v4439, 0.0
        %v4505 = vsel %vm4471, %v4440, 0.0
        %v4506 = vadd.f32 %v4504, %v4505
        %v4507 = vsel %vm4471, %v4441, 0.0
        %v4508 = vadd.f32 %v4506, %v4507
        %v4509 = vsel %vm4471, %v4442, 0.0
        %v4510 = vadd.f32 %v4508, %v4509
        %v4511 = vsel %vm4471, %v4443, 0.0
        %v4512 = vadd.f32 %v4510, %v4511
        %v4513 = vsel %vm4471, %v4444, 0.0
        %v4514 = vadd.f32 %v4512, %v4513
        %v4515 = vsel %vm4471, %v4445, 0.0
        %v4516 = vadd.f32 %v4514, %v4515
        %v4517 = vsel %vm4471, %v4446, 0.0
        %v4518 = vadd.f32 %v4516, %v4517
        %v4519 = vsel %vm4471, %v4447, 0.0
        %v4520 = vadd.f32 %v4518, %v4519
        %v4521 = vsel %vm4471, %v4448, 0.0
        %v4522 = vadd.f32 %v4520, %v4521
        %v4523 = vsel %vm4471, %v4449, 0.0
        %v4524 = vadd.f32 %v4522, %v4523
        %v4525 = vsel %vm4471, %v4450, 0.0
        %v4526 = vadd.f32 %v4524, %v4525
        %v4527 = vsel %vm4471, %v4451, 0.0
        %v4528 = vadd.f32 %v4526, %v4527
        %v4529 = vsel %vm4471, %v4452, 0.0
        %v4530 = vadd.f32 %v4528, %v4529
        %v4531 = vsel %vm4471, %v4453, 0.0
        %v4532 = vadd.f32 %v4530, %v4531
        %v4533 = vsel %vm4471, %v4454, 0.0
        %v4534 = vadd.f32 %v4532, %v4533
        %v4535 = vsel %vm4471, %v4455, 0.0
        %v4536 = vadd.f32 %v4534, %v4535
        %v4537 = vsel %vm4471, %v4456, 0.0
        %v4538 = vadd.f32 %v4536, %v4537
        %v4539 = vsel %vm4471, %v4457, 0.0
        %v4540 = vadd.f32 %v4538, %v4539
        %v4541 = vsel %vm4471, %v4458, 0.0
        %v4542 = vadd.f32 %v4540, %v4541
        %v4543 = vsel %vm4471, %v4459, 0.0
        %v4544 = vadd.f32 %v4542, %v4543
        %v4545 = vsel %vm4471, %v4460, 0.0
        %v4546 = vadd.f32 %v4544, %v4545
        %v4547 = vsel %vm4471, %v4461, 0.0
        %v4548 = vadd.f32 %v4546, %v4547
        %v4549 = vsel %vm4471, %v4462, 0.0
        %v4550 = vadd.f32 %v4548, %v4549
        %v4551 = vsel %vm4471, %v4463, 0.0
        %v4552 = vadd.f32 %v4550, %v4551
        %v4553 = vsel %vm4471, %v4464, 0.0
        %v4554 = vadd.f32 %v4552, %v4553
        %v4555 = vsel %vm4471, %v4465, 0.0
        %v4556 = vadd.f32 %v4554, %v4555
        %v4557 = vsel %vm4471, %v4466, 0.0
        %v4558 = vadd.f32 %v4556, %v4557
        %v4559 = vsel %vm4471, %v4467, 0.0
        %v4560 = vadd.f32 %v4558, %v4559
        %v4561 = vsel %vm4471, %v4468, 0.0
        %v4562 = vadd.f32 %v4560, %v4561
        %v4563 = vsel %vm4471, %v4469, 0.0
        %v4564 = vadd.f32 %v4562, %v4563
        %v4565 = vsel %vm4471, %v4470, 0.0
        %v4566 = vadd.f32 %v4564, %v4565
        %v4567 = vrot.slane %v4566, 4
        %v4568 = vadd.f32 %v4566, %v4567
        %v4569 = vrot.slane %v4568, 2
        %v4570 = vadd.f32 %v4568, %v4569
        %v4571 = vrot.slane %v4570, 1
        %v4572 = vadd.f32 %v4570, %v4571
        %4573 = vst.msk [vmem:[%s422] sm:$0x1] %vm1094, %v4572
        %v4574 = vmul.f32 %v4439, %v4439
        %v4575 = vmul.f32 %v4440, %v4440
        %v4576 = vmul.f32 %v4441, %v4441
        %v4577 = vmul.f32 %v4442, %v4442
        %v4578 = vmul.f32 %v4443, %v4443
        %v4579 = vmul.f32 %v4444, %v4444
        %v4580 = vmul.f32 %v4445, %v4445
        %v4581 = vmul.f32 %v4446, %v4446
        %v4582 = vmul.f32 %v4447, %v4447
        %v4583 = vmul.f32 %v4448, %v4448
        %v4584 = vmul.f32 %v4449, %v4449
        %v4585 = vmul.f32 %v4450, %v4450
        %v4586 = vmul.f32 %v4451, %v4451
        %v4587 = vmul.f32 %v4452, %v4452
        %v4588 = vmul.f32 %v4453, %v4453
        %v4589 = vmul.f32 %v4454, %v4454
        %v4590 = vmul.f32 %v4455, %v4455
        %v4591 = vmul.f32 %v4456, %v4456
        %v4592 = vmul.f32 %v4457, %v4457
        %v4593 = vmul.f32 %v4458, %v4458
        %v4594 = vmul.f32 %v4459, %v4459
        %v4595 = vmul.f32 %v4460, %v4460
        %v4596 = vmul.f32 %v4461, %v4461
        %v4597 = vmul.f32 %v4462, %v4462
        %v4598 = vmul.f32 %v4463, %v4463
        %v4599 = vmul.f32 %v4464, %v4464
        %v4600 = vmul.f32 %v4465, %v4465
        %v4601 = vmul.f32 %v4466, %v4466
        %v4602 = vmul.f32 %v4467, %v4467
        %v4603 = vmul.f32 %v4468, %v4468
        %v4604 = vmul.f32 %v4469, %v4469
        %v4605 = vmul.f32 %v4470, %v4470
        %v4606 = vsel %vm4471, %v4574, 0.0
        %v4607 = vsel %vm4471, %v4575, 0.0
        %v4608 = vadd.f32 %v4606, %v4607
        %v4609 = vsel %vm4471, %v4576, 0.0
        %v4610 = vadd.f32 %v4608, %v4609
        %v4611 = vsel %vm4471, %v4577, 0.0
        %v4612 = vadd.f32 %v4610, %v4611
        %v4613 = vsel %vm4471, %v4578, 0.0
        %v4614 = vadd.f32 %v4612, %v4613
        %v4615 = vsel %vm4471, %v4579, 0.0
        %v4616 = vadd.f32 %v4614, %v4615
        %v4617 = vsel %vm4471, %v4580, 0.0
        %v4618 = vadd.f32 %v4616, %v4617
        %v4619 = vsel %vm4471, %v4581, 0.0
        %v4620 = vadd.f32 %v4618, %v4619
        %v4621 = vsel %vm4471, %v4582, 0.0
        %v4622 = vadd.f32 %v4620, %v4621
        %v4623 = vsel %vm4471, %v4583, 0.0
        %v4624 = vadd.f32 %v4622, %v4623
        %v4625 = vsel %vm4471, %v4584, 0.0
        %v4626 = vadd.f32 %v4624, %v4625
        %v4627 = vsel %vm4471, %v4585, 0.0
        %v4628 = vadd.f32 %v4626, %v4627
        %v4629 = vsel %vm4471, %v4586, 0.0
        %v4630 = vadd.f32 %v4628, %v4629
        %v4631 = vsel %vm4471, %v4587, 0.0
        %v4632 = vadd.f32 %v4630, %v4631
        %v4633 = vsel %vm4471, %v4588, 0.0
        %v4634 = vadd.f32 %v4632, %v4633
        %v4635 = vsel %vm4471, %v4589, 0.0
        %v4636 = vadd.f32 %v4634, %v4635
        %v4637 = vsel %vm4471, %v4590, 0.0
        %v4638 = vadd.f32 %v4636, %v4637
        %v4639 = vsel %vm4471, %v4591, 0.0
        %v4640 = vadd.f32 %v4638, %v4639
        %v4641 = vsel %vm4471, %v4592, 0.0
        %v4642 = vadd.f32 %v4640, %v4641
        %v4643 = vsel %vm4471, %v4593, 0.0
        %v4644 = vadd.f32 %v4642, %v4643
        %v4645 = vsel %vm4471, %v4594, 0.0
        %v4646 = vadd.f32 %v4644, %v4645
        %v4647 = vsel %vm4471, %v4595, 0.0
        %v4648 = vadd.f32 %v4646, %v4647
        %v4649 = vsel %vm4471, %v4596, 0.0
        %v4650 = vadd.f32 %v4648, %v4649
        %v4651 = vsel %vm4471, %v4597, 0.0
        %v4652 = vadd.f32 %v4650, %v4651
        %v4653 = vsel %vm4471, %v4598, 0.0
        %v4654 = vadd.f32 %v4652, %v4653
        %v4655 = vsel %vm4471, %v4599, 0.0
        %v4656 = vadd.f32 %v4654, %v4655
        %v4657 = vsel %vm4471, %v4600, 0.0
        %v4658 = vadd.f32 %v4656, %v4657
        %v4659 = vsel %vm4471, %v4601, 0.0
        %v4660 = vadd.f32 %v4658, %v4659
        %v4661 = vsel %vm4471, %v4602, 0.0
        %v4662 = vadd.f32 %v4660, %v4661
        %v4663 = vsel %vm4471, %v4603, 0.0
        %v4664 = vadd.f32 %v4662, %v4663
        %v4665 = vsel %vm4471, %v4604, 0.0
        %v4666 = vadd.f32 %v4664, %v4665
        %v4667 = vsel %vm4471, %v4605, 0.0
        %v4668 = vadd.f32 %v4666, %v4667
        %v4669 = vrot.slane %v4668, 4
        %v4670 = vadd.f32 %v4668, %v4669
        %v4671 = vrot.slane %v4670, 2
        %v4672 = vadd.f32 %v4670, %v4671
        %v4673 = vrot.slane %v4672, 1
        %v4674 = vadd.f32 %v4672, %v4673
        %4675 = vst.msk [vmem:[%s428] sm:$0x1] %vm1094, %v4674
        %s4676 = sand.u32 %s178, 1
        %s4677 = scalar_lea.sflag [#allocation5], %s4676
        %s4678 = sand.u32 %s178, 1
        %s4679 = smul.addr %s4678, 256
        %s4680 = scalar_lea.vmem [#allocation14], %s4679
        %s4681 = sand.u32 %s34, 1
        %s4682 = scalar_lea.sflag [#allocation16], %s4681
        %s4683 = sand.u32 %s204, 1
        %s4684 = scalar_lea.vmem [#allocation15], %s4683
        %s4685 = sand.u32 %s34, 1
        %s4686 = scalar_lea.sflag [#allocation16], %s4685
        %s4687 = sand.u32 %s230, 1
        %s4688 = scalar_lea.vmem [#allocation17], %s4687
        // Predicated region
        $region69: #{tpu_custom_call.1} parent=43 // pred_check
          %p4689 = pneg %p188
        $region70: #{tpu_custom_call.1} parent=43 // pred_check_branch
          %4691 = sbr.rel (%p4689) target = $region72
        $region71: #{tpu_custom_call.1} parent=43 // pred_region
          %s4693 = ssub.s32 4096, 4096
          %4694 = vsyncadd %s4677, %s4693
          %s4695 = smul.addr %s34, 32
          %s4696 = smul.addr %s4695, 128
          %s4697 = scalar_lea.hbm %s6, %s4696
          %s4698 = sshll.u32 %s4680, 4
          %s4699 = int_to_ptr.vmem [resolvable:$true] %s4698
          %4704 = dma.vmem_to_hbm [thread:$0]  %s4699, 4096, %s4697, %s4677, 128, 128, 8
        $region72: #{tpu_custom_call.1} parent=43 // pred_fallthru
          _
        // Predicated region
        $region73: #{tpu_custom_call.1} parent=43 // pred_check
          %p4705 = pneg %p214
        $region74: #{tpu_custom_call.1} parent=43 // pred_check_branch
          %4707 = sbr.rel (%p4705) target = $region76
        $region75: #{tpu_custom_call.1} parent=43 // pred_region
          %s4709 = ssub.s32 16, 16
          %4710 = vsyncadd %s4682, %s4709
          %s4711 = smul.addr %s34, 16
          %s4712 = scalar_lea.hbm %s7, %s4711
          %s4714 = sshll.u32 %s4684, 4
          %s4715 = int_to_ptr.vmem [resolvable:$true] %s4714
          %4717 = dma.vmem_to_hbm [thread:$0]  %s4715, 16, %s4712, %s4682
        $region76: #{tpu_custom_call.1} parent=43 // pred_fallthru
          _
        // Predicated region
        $region77: #{tpu_custom_call.1} parent=43 // pred_check
          %p4718 = pneg %p240
        $region78: #{tpu_custom_call.1} parent=43 // pred_check_branch
          %4720 = sbr.rel (%p4718) target = $region80
        $region79: #{tpu_custom_call.1} parent=43 // pred_region
          %s4722 = ssub.s32 16, 16
          %4723 = vsyncadd %s4686, %s4722
          %s4724 = smul.addr %s34, 16
          %s4725 = scalar_lea.hbm %s8, %s4724
          %s4727 = sshll.u32 %s4688, 4
          %s4728 = int_to_ptr.vmem [resolvable:$true] %s4727
          %4730 = dma.vmem_to_hbm [thread:$0]  %s4728, 16, %s4725, %s4686
        $region80: #{tpu_custom_call.1} parent=43 // pred_fallthru
          _
      $region44: #{tpu_custom_call.1} parent=5 // pred_fallthru
        _
      %p4731 = scmp.le.s32.totalorder 2, %s29
      // Predicated region
      $region81: #{tpu_custom_call.1} parent=5 // pred_check
        %p4732 = pneg %p4731
      $region82: #{tpu_custom_call.1} parent=5 // pred_check_branch
        %4734 = sbr.rel (%p4732) target = $region84
      $region83: #{tpu_custom_call.1} parent=5 // pred_region
        %s4735 = ssub.s32 %s29, 2
        // Predicated region
        $region85: #{tpu_custom_call.1} parent=83 // pred_check
          %p4736 = pneg %p194
        $region86: #{tpu_custom_call.1} parent=83 // pred_check_branch
          %4738 = sbr.rel (%p4736) target = $region88
        $region87: #{tpu_custom_call.1} parent=83 // pred_region
          %s4739 = sand.u32 %s179, 1
          %s4740 = scalar_lea.sflag [#allocation5], %s4739
          %s4741 = sand.u32 %s179, 1
          %s4742 = smul.addr %s4741, 256
          %s4743 = scalar_lea.vmem [#allocation14], %s4742
          %4744 = dma.done %s4740, 4096
        $region88: #{tpu_custom_call.1} parent=83 // pred_fallthru
          _
        // Predicated region
        $region89: #{tpu_custom_call.1} parent=83 // pred_check
          %p4745 = pneg %p220
        $region90: #{tpu_custom_call.1} parent=83 // pred_check_branch
          %4747 = sbr.rel (%p4745) target = $region92
        $region91: #{tpu_custom_call.1} parent=83 // pred_region
          %s4748 = sand.u32 %s35, 1
          %s4749 = scalar_lea.sflag [#allocation16], %s4748
          %s4750 = sand.u32 %s205, 1
          %s4751 = scalar_lea.vmem [#allocation15], %s4750
          %4752 = dma.done %s4749, 16
        $region92: #{tpu_custom_call.1} parent=83 // pred_fallthru
          _
        // Predicated region
        $region93: #{tpu_custom_call.1} parent=83 // pred_check
          %p4753 = pneg %p246
        $region94: #{tpu_custom_call.1} parent=83 // pred_check_branch
          %4755 = sbr.rel (%p4753) target = $region96
        $region95: #{tpu_custom_call.1} parent=83 // pred_region
          %s4756 = sand.u32 %s35, 1
          %s4757 = scalar_lea.sflag [#allocation16], %s4756
          %s4758 = sand.u32 %s231, 1
          %s4759 = scalar_lea.vmem [#allocation17], %s4758
          %4760 = dma.done %s4757, 16
        $region96: #{tpu_custom_call.1} parent=83 // pred_fallthru
          _
      $region84: #{tpu_custom_call.1} parent=5 // pred_fallthru
        _
    $region6: #{tpu_custom_call.1} parent=1 // loop_footer
      %s33 = sadd.s32 1, %s29
    $region7: #{tpu_custom_call.1} parent=1 // loop_footer_branch
      %28 = sbr.rel target = $region3
    $region8: #{tpu_custom_call.1} parent=1 // loop_exit
      _
    %4761 = vsyncpa [#allocation4], 1
    %s4762 = scalar_lea.sflag [#allocation4], 1
    %4763 = vsyncpa %s4762, 1
    %4764 = vsyncpa [#allocation7], 1
    %s4765 = scalar_lea.sflag [#allocation7], 1
    %4766 = vsyncpa %s4765, 1
    %4767 = vsyncpa [#allocation10], 1
    %4768 = vsyncpa [#allocation13], 1
    %4769 = vsyncpa [#allocation5], 1
    %s4770 = scalar_lea.sflag [#allocation5], 1
    %4771 = vsyncpa %s4770, 1
    %4772 = vsyncpa [#allocation16], 1
    %s4773 = scalar_lea.sflag [#allocation16], 1
    %4774 = vsyncpa %s4773, 1

</llo_original>
